<compile_context>
chip_gen: v5e
topology: v5e:2x2
jax: 0.10.0
libtpu: 0.0.40
codegen_flags: <defaults>
</compile_context>

<pallas_src>
import functools
import math

import jax
import jax.numpy as jnp
from jax.experimental import pallas as pl
from jax.experimental.pallas import tpu as pltpu


def _round_up(v, m):
    return ((v + m - 1) // m) * m


def _conv_bn_relu_kernel(x_ref, w_ref, scale_ref, shift_ref, o_ref, *scratch,
                         TH, kh, kw, s, Wo, Cin, flat_m, im2col):
    # x_ref     : (s*s, Hq, Wq, Cin)   bf16   phase-split, padded image(s)
    # w_ref     : (kh*kw*Cin, Coutp)   bf16   if im2col
    #             (kh*kw, Cin, Coutp)  bf16   otherwise
    # scale_ref : (1, Coutp) f32   BN scale  gamma / sqrt(var + eps)
    # shift_ref : (1, Coutp) f32   BN shift  beta - mean * scale
    # o_ref     : (1, TH*Wo, Coutp) f32  flattened output row tile
    # scratch   : (TH*Wo, kh*kw*Cin) bf16 patch buffer (im2col only)
    t = pl.program_id(1)
    r0 = t * TH                                  # first output row of the tile
    coutp = o_ref.shape[-1]

    def window(dh, dw, row_start, nrows):
        # unit-stride window for tap (dh, dw), output rows [row_start, +nrows)
        phase = (dh % s) * s + (dw % s)
        col0 = dw // s
        return x_ref[phase, pl.ds(row_start + dh // s, nrows),
                     col0:col0 + Wo, :]

    scale = scale_ref[...]                       # (1, Coutp) f32
    shift = shift_ref[...]

    if flat_m:
        m = TH * Wo
        if im2col:
            # Build the (M, kh*kw*Cin) patch in VMEM, then ONE deep-K matmul.
            patch_ref = scratch[0]
            for dh in range(kh):
                for dw in range(kw):
                    c0 = (dh * kw + dw) * Cin
                    patch_ref[:, c0:c0 + Cin] = (
                        window(dh, dw, r0, TH).reshape(m, Cin))
            acc = jnp.dot(patch_ref[...], w_ref[...],
                          preferred_element_type=jnp.float32)
        else:
            # kh*kw tap matmuls, each with M = TH*Wo and K = Cin.
            acc = jnp.zeros((m, coutp), jnp.float32)
            for dh in range(kh):
                for dw in range(kw):
                    acc = acc + jnp.dot(
                        window(dh, dw, r0, TH).reshape(m, Cin),
                        w_ref[dh * kw + dw],
                        preferred_element_type=jnp.float32)
        o_ref[0] = jnp.maximum(acc * scale + shift, 0.0).astype(o_ref.dtype)
    else:
        # Wo not sublane-aligned: one output row per matmul (M = Wo).
        for r in range(TH):
            acc = jnp.zeros((Wo, coutp), jnp.float32)
            for dh in range(kh):
                for dw in range(kw):
                    acc = acc + jnp.dot(
                        window(dh, dw, r0 + r, 1)[0],
                        w_ref[dh * kw + dw],
                        preferred_element_type=jnp.float32)
            o_ref[0, r * Wo:(r + 1) * Wo, :] = jnp.maximum(
                acc * scale + shift, 0.0).astype(o_ref.dtype)


def basic_conv2d(x_nchw, weight, gamma, beta, running_mean, running_var,
                 *, stride=1, padding=1, eps=1e-3):
    """Forward of BasicConv2d: Conv2d(bias=False) -> BN (inference) -> ReLU.

    x_nchw : [N, Cin, H, W] float32
    weight : [Cout, Cin, kh, kw]  (PyTorch conv weight layout)
    """
    s = int(stride)
    p = int(padding)
    N, Cin, H, W = x_nchw.shape
    Cout, cin_w, kh, kw = weight.shape
    assert cin_w == Cin, "grouped conv not supported"

    Hp, Wp = H + 2 * p, W + 2 * p
    Ho = (Hp - kh) // s + 1
    Wo = (Wp - kw) // s + 1
    assert Ho > 0 and Wo > 0

    # ---- output-channel lane padding only when it is cheap (<= 25% extra) ---
    cout_128 = _round_up(Cout, 128)
    Coutp = cout_128 if cout_128 * 4 <= Cout * 5 else Cout

    # ---- row-tile: target ~256-row matmul and a ~<=1 MiB f32 output slab ----
    max_m = max(64, min(512, (1 << 20) // (4 * max(Coutp, 128))))
    target_m = min(256, max_m)
    flat_m = (Wo % 8 == 0)
    TH = max(1, -(-target_m // Wo))
    if not flat_m:
        TH = min(TH, 8)                          # bound static unrolling
    if TH >= Ho:
        TH = Ho
    elif not flat_m:
        step = 8 // math.gcd(Wo, 8)              # keep TH*Wo sublane aligned
        TH = min(Ho, max(step, (TH // step) * step))
    nT = -(-Ho // TH)
    Ho_pad = nT * TH

    im2col = flat_m and (Cin < 64) and (kh * kw > 1)
    KK = kh * kw * Cin

    # ---- input: NHWC, pad, stride-phase split (unit-stride loads), bf16 -----
    Wq = -(-Wp // s)
    Hq = max(-(-Hp // s), Ho_pad + (kh - 1) // s)      # covers ragged last tile
    x = jnp.transpose(x_nchw.astype(jnp.bfloat16), (0, 2, 3, 1))   # N,H,W,C
    x = jnp.pad(x, ((0, 0), (p, Hq * s - H - p), (p, Wq * s - W - p), (0, 0)))
    x = x.reshape(N, Hq, s, Wq, s, Cin).transpose(0, 2, 4, 1, 3, 5)
    x = x.reshape(N * s * s, Hq, Wq, Cin)              # phase-major layout

    # ---- weights: HWIO, pad Cout, bf16 (BN scale stays in the f32 epilogue) -
    w = jnp.transpose(weight, (2, 3, 1, 0)).astype(jnp.bfloat16)   # kh,kw,Ci,Co
    w = jnp.pad(w, ((0, 0), (0, 0), (0, 0), (0, Coutp - Cout)))
    if im2col:
        w = w.reshape(KK, Coutp)
        w_spec = pl.BlockSpec((KK, Coutp), lambda n, t: (0, 0))
    else:
        w = w.reshape(kh * kw, Cin, Coutp)
        w_spec = pl.BlockSpec((kh * kw, Cin, Coutp), lambda n, t: (0, 0, 0))

    scale = (gamma.astype(jnp.float32)
             / jnp.sqrt(running_var.astype(jnp.float32) + eps))
    shift = beta.astype(jnp.float32) - running_mean.astype(jnp.float32) * scale
    scale = jnp.pad(scale, (0, Coutp - Cout)).reshape(1, Coutp)
    shift = jnp.pad(shift, (0, Coutp - Cout)).reshape(1, Coutp)

    kernel = functools.partial(
        _conv_bn_relu_kernel, TH=TH, kh=kh, kw=kw, s=s, Wo=Wo, Cin=Cin,
        flat_m=flat_m, im2col=im2col)

    scratch_shapes = ([pltpu.VMEM((TH * Wo, KK), jnp.bfloat16)]
                      if im2col else [])

    # ---- VMEM budget: derived from the device, not a fixed 32 MiB clamp -----
    def _tile_bytes(shape, itemsize):
        lead = 1
        for d in shape[:-2]:
            lead *= d
        sub = _round_up(shape[-2], 8 if itemsize == 4 else 16)
        return lead * sub * _round_up(shape[-1], 128) * itemsize

    x_blk = _tile_bytes((s * s, Hq, Wq, Cin), 2)
    w_blk = _tile_bytes(w.shape, 2)
    o_blk = _tile_bytes((TH * Wo, Coutp), 4)
    patch_blk = _tile_bytes((TH * Wo, KK), 2) if im2col else 0
    need = (2 * (x_blk + w_blk + o_blk) + patch_blk
            + 4 * _tile_bytes((1, Coutp), 4) + (2 << 20))
    try:
        vmem_cap = int(pltpu.get_tpu_info().vmem_capacity_bytes)
    except Exception:
        vmem_cap = 64 << 20                     # v7x-safe fallback
    vmem_limit = int(min(max(need, 16 << 20), (vmem_cap * 9) // 10))

    flops = 2 * N * Ho * Wo * kh * kw * Cin * Cout           # true Cout
    bytes_accessed = (N * s * s * Hq * Wq * Cin * 2          # bf16 activations
                      + int(w.size) * 2                      # bf16 weights
                      + N * Ho_pad * Wo * Coutp * 4)         # f32 output

    out = pl.pallas_call(
        kernel,
        out_shape=jax.ShapeDtypeStruct((N, Ho_pad * Wo, Coutp), jnp.float32),
        grid_spec=pltpu.PrefetchScalarGridSpec(
            num_scalar_prefetch=0,
            grid=(N, nT),
            in_specs=[
                # phase-split padded image: resident across the row-tile axis
                pl.BlockSpec((s * s, Hq, Wq, Cin), lambda n, t: (n, 0, 0, 0)),
                # weights / BN scale / BN shift: resident across the whole grid
                w_spec,
                pl.BlockSpec((1, Coutp), lambda n, t: (0, 0)),
                pl.BlockSpec((1, Coutp), lambda n, t: (0, 0)),
            ],
            out_specs=pl.BlockSpec((1, TH * Wo, Coutp), lambda n, t: (n, t, 0)),
            scratch_shapes=scratch_shapes,
        ),
        compiler_params=pltpu.CompilerParams(
            dimension_semantics=("parallel", "parallel"),
            vmem_limit_bytes=vmem_limit),
        cost_estimate=pl.CostEstimate(flops=flops, transcendentals=0,
                                      bytes_accessed=bytes_accessed),
    )(x, w, scale, shift)

    # slice fuses with the (required, NCHW-facing) transpose in XLA
    out = out.reshape(N, Ho_pad, Wo, Coutp)[:, :Ho, :, :Cout]
    return jnp.transpose(out, (0, 3, 1, 2))                  # N, Cout, Ho, Wo


def _reference(x, weight, gamma, beta, mean, var, stride, padding, eps):
    y = jax.lax.conv_general_dilated(
        x, weight, window_strides=(stride, stride),
        padding=((padding, padding), (padding, padding)),
        dimension_numbers=("NCHW", "OIHW", "NCHW"),
        precision=jax.lax.Precision.HIGHEST)
    scale = gamma / jnp.sqrt(var + eps)
    shift = beta - mean * scale
    return jnp.maximum(y * scale[None, :, None, None]
                       + shift[None, :, None, None], 0.0)


if __name__ == "__main__":
    configs = [
        # primary spec shape, plus small extras covering stride, per-tap path,
        # ragged Ho tiling, and the unaligned-Wo fallback.
        dict(N=2, Cin=4,  H=16, W=16, Cout=8,  k=3, stride=1, padding=1, tol=5e-2),
        dict(N=1, Cin=4,  H=16, W=16, Cout=8,  k=3, stride=2, padding=1, tol=5e-2),
        dict(N=1, Cin=64, H=8,  W=8,  Cout=32, k=3, stride=1, padding=1, tol=1e-1),
        dict(N=1, Cin=4,  H=40, W=40, Cout=8,  k=3, stride=1, padding=1, tol=5e-2),
        dict(N=1, Cin=4,  H=12, W=12, Cout=8,  k=3, stride=1, padding=0, tol=5e-2),
    ]
    key = jax.random.PRNGKey(0)
    for i, cfg in enumerate(configs):
        key, kx, kwt, kg, kb, km, kv = jax.random.split(key, 7)
        n, cin, h, w = cfg["N"], cfg["Cin"], cfg["H"], cfg["W"]
        cout, k = cfg["Cout"], cfg["k"]
        x = jax.random.normal(kx, (n, cin, h, w), dtype=jnp.float32)
        weight = jax.random.normal(kwt, (cout, cin, k, k), dtype=jnp.float32) * 0.1
        gamma = jax.random.uniform(kg, (cout,), minval=0.5, maxval=1.5)
        beta = jax.random.normal(kb, (cout,)) * 0.1
        mean = jax.random.normal(km, (cout,)) * 0.1
        var = jax.random.uniform(kv, (cout,), minval=0.5, maxval=1.5)

        out = basic_conv2d(x, weight, gamma, beta, mean, var,
                           stride=cfg["stride"], padding=cfg["padding"],
                           eps=1e-3)
        jax.block_until_ready(out)

        ref = _reference(x, weight, gamma, beta, mean, var,
                         cfg["stride"], cfg["padding"], 1e-3)
        assert out.shape == ref.shape, (i, out.shape, ref.shape)
        max_err = float(jnp.max(jnp.abs(out - ref)))
        ok = bool(jnp.allclose(out, ref, atol=cfg["tol"], rtol=cfg["tol"]))
        assert ok, f"config {i} mismatch: max abs err {max_err:.4f}"

    print("KERNEL_OK")
</pallas_src>

<mosaic_0001>
module attributes {stable_mosaic.version = 11 : i64} {
  func.func @_conv_bn_relu_kernel(%arg0: i32, %arg1: i32, %arg2: memref<1x18x18x4xbf16, #tpu.memory_space<vmem>>, %arg3: memref<36x8xbf16, #tpu.memory_space<vmem>>, %arg4: memref<1x8xf32, #tpu.memory_space<vmem>>, %arg5: memref<1x8xf32, #tpu.memory_space<vmem>>, %arg6: memref<1x256x8xf32, #tpu.memory_space<vmem>>, %arg7: memref<256x36xbf16, #tpu.memory_space<vmem>>) attributes {dimension_semantics = [#tpu.dimension_semantics<parallel>, #tpu.dimension_semantics<parallel>], iteration_bounds = array<i64: 2, 1>, scalar_prefetch = 0 : i64, scratch_operands = 1 : i64, tpu.core_type = #tpu.core_type<tc>, window_params = [{transform_indices = @transform_0, window_bounds = array<i64: 1, 18, 18, 4>}, {pipeline_mode = #tpu.pipeline_mode<synchronous>, transform_indices = @transform_1, window_bounds = array<i64: 36, 8>}, {pipeline_mode = #tpu.pipeline_mode<synchronous>, transform_indices = @transform_2, window_bounds = array<i64: 1, 8>}, {pipeline_mode = #tpu.pipeline_mode<synchronous>, transform_indices = @transform_3, window_bounds = array<i64: 1, 8>}, {transform_indices = @transform_4, window_bounds = array<i64: 1, 256, 8>}]} {
    %c16_i32 = arith.constant 16 : i32
    %0 = arith.muli %arg1, %c16_i32 : i32
    %c0 = arith.constant 0 : index
    %c0_0 = arith.constant 0 : index
    %1 = vector.load %arg4[%c0, %c0_0] : memref<1x8xf32, #tpu.memory_space<vmem>>, vector<1x8xf32>
    %c0_1 = arith.constant 0 : index
    %c0_2 = arith.constant 0 : index
    %2 = vector.load %arg5[%c0_1, %c0_2] : memref<1x8xf32, #tpu.memory_space<vmem>>, vector<1x8xf32>
    %c0_i32 = arith.constant 0 : i32
    %3 = arith.addi %0, %c0_i32 : i32
    %c0_3 = arith.constant 0 : index
    %4 = arith.index_cast %3 : i32 to index
    %c0_4 = arith.constant 0 : index
    %c0_5 = arith.constant 0 : index
    %5 = vector.load %arg2[%c0_3, %4, %c0_4, %c0_5] : memref<1x18x18x4xbf16, #tpu.memory_space<vmem>>, vector<1x16x16x4xbf16>
    %6 = vector.shape_cast %5 : vector<1x16x16x4xbf16> to vector<16x16x4xbf16>
    %7 = vector.shape_cast %6 : vector<16x16x4xbf16> to vector<256x4xbf16>
    %c0_6 = arith.constant 0 : index
    %c0_7 = arith.constant 0 : index
    %8 = vector.load %arg7[%c0_6, %c0_7] : memref<256x36xbf16, #tpu.memory_space<vmem>>, vector<256x4xbf16>
    tpu.vector_store %arg7[%c0_6, %c0_7], %7 {strides = array<i32>} : memref<256x36xbf16, #tpu.memory_space<vmem>>, vector<256x4xbf16>,
    %c0_i32_8 = arith.constant 0 : i32
    %9 = arith.addi %0, %c0_i32_8 : i32
    %c0_9 = arith.constant 0 : index
    %10 = arith.index_cast %9 : i32 to index
    %c1 = arith.constant 1 : index
    %c0_10 = arith.constant 0 : index
    %11 = vector.load %arg2[%c0_9, %10, %c1, %c0_10] : memref<1x18x18x4xbf16, #tpu.memory_space<vmem>>, vector<1x16x16x4xbf16>
    %12 = vector.shape_cast %11 : vector<1x16x16x4xbf16> to vector<16x16x4xbf16>
    %13 = vector.shape_cast %12 : vector<16x16x4xbf16> to vector<256x4xbf16>
    %c0_11 = arith.constant 0 : index
    %c4 = arith.constant 4 : index
    %14 = vector.load %arg7[%c0_11, %c4] : memref<256x36xbf16, #tpu.memory_space<vmem>>, vector<256x4xbf16>
    tpu.vector_store %arg7[%c0_11, %c4], %13 {strides = array<i32>} : memref<256x36xbf16, #tpu.memory_space<vmem>>, vector<256x4xbf16>,
    %c0_i32_12 = arith.constant 0 : i32
    %15 = arith.addi %0, %c0_i32_12 : i32
    %c0_13 = arith.constant 0 : index
    %16 = arith.index_cast %15 : i32 to index
    %c2 = arith.constant 2 : index
    %c0_14 = arith.constant 0 : index
    %17 = vector.load %arg2[%c0_13, %16, %c2, %c0_14] : memref<1x18x18x4xbf16, #tpu.memory_space<vmem>>, vector<1x16x16x4xbf16>
    %18 = vector.shape_cast %17 : vector<1x16x16x4xbf16> to vector<16x16x4xbf16>
    %19 = vector.shape_cast %18 : vector<16x16x4xbf16> to vector<256x4xbf16>
    %c0_15 = arith.constant 0 : index
    %c8 = arith.constant 8 : index
    %20 = vector.load %arg7[%c0_15, %c8] : memref<256x36xbf16, #tpu.memory_space<vmem>>, vector<256x4xbf16>
    tpu.vector_store %arg7[%c0_15, %c8], %19 {strides = array<i32>} : memref<256x36xbf16, #tpu.memory_space<vmem>>, vector<256x4xbf16>,
    %c1_i32 = arith.constant 1 : i32
    %21 = arith.addi %0, %c1_i32 : i32
    %c0_16 = arith.constant 0 : index
    %22 = arith.index_cast %21 : i32 to index
    %c0_17 = arith.constant 0 : index
    %c0_18 = arith.constant 0 : index
    %23 = vector.load %arg2[%c0_16, %22, %c0_17, %c0_18] : memref<1x18x18x4xbf16, #tpu.memory_space<vmem>>, vector<1x16x16x4xbf16>
    %24 = vector.shape_cast %23 : vector<1x16x16x4xbf16> to vector<16x16x4xbf16>
    %25 = vector.shape_cast %24 : vector<16x16x4xbf16> to vector<256x4xbf16>
    %c0_19 = arith.constant 0 : index
    %c12 = arith.constant 12 : index
    %26 = vector.load %arg7[%c0_19, %c12] : memref<256x36xbf16, #tpu.memory_space<vmem>>, vector<256x4xbf16>
    tpu.vector_store %arg7[%c0_19, %c12], %25 {strides = array<i32>} : memref<256x36xbf16, #tpu.memory_space<vmem>>, vector<256x4xbf16>,
    %c1_i32_20 = arith.constant 1 : i32
    %27 = arith.addi %0, %c1_i32_20 : i32
    %c0_21 = arith.constant 0 : index
    %28 = arith.index_cast %27 : i32 to index
    %c1_22 = arith.constant 1 : index
    %c0_23 = arith.constant 0 : index
    %29 = vector.load %arg2[%c0_21, %28, %c1_22, %c0_23] : memref<1x18x18x4xbf16, #tpu.memory_space<vmem>>, vector<1x16x16x4xbf16>
    %30 = vector.shape_cast %29 : vector<1x16x16x4xbf16> to vector<16x16x4xbf16>
    %31 = vector.shape_cast %30 : vector<16x16x4xbf16> to vector<256x4xbf16>
    %c0_24 = arith.constant 0 : index
    %c16 = arith.constant 16 : index
    %32 = vector.load %arg7[%c0_24, %c16] : memref<256x36xbf16, #tpu.memory_space<vmem>>, vector<256x4xbf16>
    tpu.vector_store %arg7[%c0_24, %c16], %31 {strides = array<i32>} : memref<256x36xbf16, #tpu.memory_space<vmem>>, vector<256x4xbf16>,
    %c1_i32_25 = arith.constant 1 : i32
    %33 = arith.addi %0, %c1_i32_25 : i32
    %c0_26 = arith.constant 0 : index
    %34 = arith.index_cast %33 : i32 to index
    %c2_27 = arith.constant 2 : index
    %c0_28 = arith.constant 0 : index
    %35 = vector.load %arg2[%c0_26, %34, %c2_27, %c0_28] : memref<1x18x18x4xbf16, #tpu.memory_space<vmem>>, vector<1x16x16x4xbf16>
    %36 = vector.shape_cast %35 : vector<1x16x16x4xbf16> to vector<16x16x4xbf16>
    %37 = vector.shape_cast %36 : vector<16x16x4xbf16> to vector<256x4xbf16>
    %c0_29 = arith.constant 0 : index
    %c20 = arith.constant 20 : index
    %38 = vector.load %arg7[%c0_29, %c20] : memref<256x36xbf16, #tpu.memory_space<vmem>>, vector<256x4xbf16>
    tpu.vector_store %arg7[%c0_29, %c20], %37 {strides = array<i32>} : memref<256x36xbf16, #tpu.memory_space<vmem>>, vector<256x4xbf16>,
    %c2_i32 = arith.constant 2 : i32
    %39 = arith.addi %0, %c2_i32 : i32
    %c0_30 = arith.constant 0 : index
    %40 = arith.index_cast %39 : i32 to index
    %c0_31 = arith.constant 0 : index
    %c0_32 = arith.constant 0 : index
    %41 = vector.load %arg2[%c0_30, %40, %c0_31, %c0_32] : memref<1x18x18x4xbf16, #tpu.memory_space<vmem>>, vector<1x16x16x4xbf16>
    %42 = vector.shape_cast %41 : vector<1x16x16x4xbf16> to vector<16x16x4xbf16>
    %43 = vector.shape_cast %42 : vector<16x16x4xbf16> to vector<256x4xbf16>
    %c0_33 = arith.constant 0 : index
    %c24 = arith.constant 24 : index
    %44 = vector.load %arg7[%c0_33, %c24] : memref<256x36xbf16, #tpu.memory_space<vmem>>, vector<256x4xbf16>
    tpu.vector_store %arg7[%c0_33, %c24], %43 {strides = array<i32>} : memref<256x36xbf16, #tpu.memory_space<vmem>>, vector<256x4xbf16>,
    %c2_i32_34 = arith.constant 2 : i32
    %45 = arith.addi %0, %c2_i32_34 : i32
    %c0_35 = arith.constant 0 : index
    %46 = arith.index_cast %45 : i32 to index
    %c1_36 = arith.constant 1 : index
    %c0_37 = arith.constant 0 : index
    %47 = vector.load %arg2[%c0_35, %46, %c1_36, %c0_37] : memref<1x18x18x4xbf16, #tpu.memory_space<vmem>>, vector<1x16x16x4xbf16>
    %48 = vector.shape_cast %47 : vector<1x16x16x4xbf16> to vector<16x16x4xbf16>
    %49 = vector.shape_cast %48 : vector<16x16x4xbf16> to vector<256x4xbf16>
    %c0_38 = arith.constant 0 : index
    %c28 = arith.constant 28 : index
    %50 = vector.load %arg7[%c0_38, %c28] : memref<256x36xbf16, #tpu.memory_space<vmem>>, vector<256x4xbf16>
    tpu.vector_store %arg7[%c0_38, %c28], %49 {strides = array<i32>} : memref<256x36xbf16, #tpu.memory_space<vmem>>, vector<256x4xbf16>,
    %c2_i32_39 = arith.constant 2 : i32
    %51 = arith.addi %0, %c2_i32_39 : i32
    %c0_40 = arith.constant 0 : index
    %52 = arith.index_cast %51 : i32 to index
    %c2_41 = arith.constant 2 : index
    %c0_42 = arith.constant 0 : index
    %53 = vector.load %arg2[%c0_40, %52, %c2_41, %c0_42] : memref<1x18x18x4xbf16, #tpu.memory_space<vmem>>, vector<1x16x16x4xbf16>
    %54 = vector.shape_cast %53 : vector<1x16x16x4xbf16> to vector<16x16x4xbf16>
    %55 = vector.shape_cast %54 : vector<16x16x4xbf16> to vector<256x4xbf16>
    %c0_43 = arith.constant 0 : index
    %c32 = arith.constant 32 : index
    %56 = vector.load %arg7[%c0_43, %c32] : memref<256x36xbf16, #tpu.memory_space<vmem>>, vector<256x4xbf16>
    tpu.vector_store %arg7[%c0_43, %c32], %55 {strides = array<i32>} : memref<256x36xbf16, #tpu.memory_space<vmem>>, vector<256x4xbf16>,
    %c0_44 = arith.constant 0 : index
    %c0_45 = arith.constant 0 : index
    %57 = vector.load %arg7[%c0_44, %c0_45] : memref<256x36xbf16, #tpu.memory_space<vmem>>, vector<256x36xbf16>
    %c0_46 = arith.constant 0 : index
    %c0_47 = arith.constant 0 : index
    %58 = vector.load %arg3[%c0_46, %c0_47] : memref<36x8xbf16, #tpu.memory_space<vmem>>, vector<36x8xbf16>
    %cst = arith.constant dense<0.000000e+00> : vector<256x8xf32>
    %59 = tpu.matmul %57, %58, %cst {dimension_numbers = #tpu.dot_dimension_numbers<[1], [0], [0], [1], [0, 0, 1, 1], [], []>} : vector<256x36xbf16>, vector<36x8xbf16>, vector<256x8xf32> -> vector<256x8xf32>
    %60 = vector.broadcast %1 : vector<1x8xf32> to vector<256x8xf32>
    %61 = arith.mulf %59, %60 : vector<256x8xf32>
    %62 = vector.broadcast %2 : vector<1x8xf32> to vector<256x8xf32>
    %63 = arith.addf %61, %62 : vector<256x8xf32>
    %cst_48 = arith.constant 0.000000e+00 : f32
    %64 = vector.broadcast %cst_48 : f32 to vector<256x8xf32>
    %65 = arith.maximumf %63, %64 : vector<256x8xf32>
    %c0_49 = arith.constant 0 : index
    %c0_50 = arith.constant 0 : index
    %c0_51 = arith.constant 0 : index
    %66 = vector.load %arg6[%c0_49, %c0_50, %c0_51] : memref<1x256x8xf32, #tpu.memory_space<vmem>>, vector<1x256x8xf32>
    %67 = vector.shape_cast %66 : vector<1x256x8xf32> to vector<256x8xf32>
    %68 = vector.shape_cast %65 : vector<256x8xf32> to vector<1x256x8xf32>
    tpu.vector_store %arg6[%c0_49, %c0_50, %c0_51], %68 {strides = array<i32>} : memref<1x256x8xf32, #tpu.memory_space<vmem>>, vector<1x256x8xf32>,
    return
  }
  func.func @transform_0(%arg0: i32, %arg1: i32) -> (i32, i32, i32, i32) {
    %c0_i32 = arith.constant 0 : i32
    %c0_i32_0 = arith.constant 0 : i32
    %c0_i32_1 = arith.constant 0 : i32
    %c0_i32_2 = arith.constant 0 : i32
    return %arg0, %c0_i32, %c0_i32_0, %c0_i32_1 : i32, i32, i32, i32
  }
  func.func @transform_1(%arg0: i32, %arg1: i32) -> (i32, i32) {
    %c0_i32 = arith.constant 0 : i32
    %c0_i32_0 = arith.constant 0 : i32
    %c0_i32_1 = arith.constant 0 : i32
    return %c0_i32, %c0_i32_0 : i32, i32
  }
  func.func @transform_2(%arg0: i32, %arg1: i32) -> (i32, i32) {
    %c0_i32 = arith.constant 0 : i32
    %c0_i32_0 = arith.constant 0 : i32
    %c0_i32_1 = arith.constant 0 : i32
    return %c0_i32, %c0_i32_0 : i32, i32
  }
  func.func @transform_3(%arg0: i32, %arg1: i32) -> (i32, i32) {
    %c0_i32 = arith.constant 0 : i32
    %c0_i32_0 = arith.constant 0 : i32
    %c0_i32_1 = arith.constant 0 : i32
    return %c0_i32, %c0_i32_0 : i32, i32
  }
  func.func @transform_4(%arg0: i32, %arg1: i32) -> (i32, i32, i32) {
    %c0_i32 = arith.constant 0 : i32
    %c0_i32_0 = arith.constant 0 : i32
    return %arg0, %arg1, %c0_i32 : i32, i32, i32
  }
}

</mosaic_0001>

<llo_original>
// kernel: tpu_custom_call.1
$region0: #{tpu_custom_call.1}
  #allocation0 [shape = 'u32[]', space=smem, size = 0x4, offset = 0x4, fixed_abs, tag = 'smem constant byte address 0x4 - core index']
  #allocation1 [shape = 'u32[72,128]{1,0:T(1,128)}', space=vmem, size = 0x9000, scoped, tag = 'internal scratch']
  #allocation2 [shape = 'bf16[256,36]{1,0:T(8,128)(2,1)}', space=vmem, size = 0x10000, scoped, tag = 'scratch operand']
  %s0 = inlined_call_operand.vmem [shape: bf16[2,18,18,4], index: 0, kind: input, shape index: {}]
  %s1 = inlined_call_operand.vmem [shape: bf16[36,8], index: 1, kind: input, shape index: {}]
  %s2 = inlined_call_operand.vmem [shape: f32[1,8], index: 2, kind: input, shape index: {}]
  %s3 = inlined_call_operand.vmem [shape: f32[1,8], index: 3, kind: input, shape index: {}]
  %s4 = inlined_call_operand.vmem [shape: f32[2,256,8], index: 4, kind: output, shape index: {}]
  %s5 = sld [smem:[#allocation0]]
  $region49: #{tpu_custom_call.1} parent=0
    _
  %s7 = ssub.s32 1, %s5
  %s8 = scalar_select 0, %s7, %s5
  loop: start=0, step=1, limit=4
  $region2: #{tpu_custom_call.1} parent=0 // loop_pre_header
    _
  $region3: #{tpu_custom_call.1} parent=0 // loop_header
    %s10 = sphi 0, %s14
    %p11 = scmp.ge.s32.totalorder %s10, 4
    %s17 = sphi 0, %s29
    %s18 = sphi 0, %s25
    %s19 = sphi 0, %s17
    %s20 = sphi 0, %s18
    %s21 = sphi 0, %s19
    %s22 = sphi 0, %s20
    %s32 = sphi 0, %s34
    %s35 = sphi 0, %s32
    %s36 = sphi 0, %s35
    %s52 = sphi 0, %s36
    %s56 = sphi 0, %s56
    %s58 = sphi 0, %s56
    %s59 = sphi 0, %s58
    %s73 = sphi 0, %s59
    %s77 = sphi 0, %s77
    %s79 = sphi 0, %s77
    %s80 = sphi 0, %s79
    %s94 = sphi 0, %s80
    %s98 = sphi 0, %s98
    %s100 = sphi 0, %s98
    %s101 = sphi 0, %s100
    %s115 = sphi 0, %s101
    %s123 = sphi 0, %s125
    %s126 = sphi 0, %s123
    %s127 = sphi 0, %s126
    %s143 = sphi 0, %s127
  $region4: #{tpu_custom_call.1} parent=0 // loop_header_branch
    %13 = sbr.rel (%p11) target = $region8
  $region5: #{tpu_custom_call.1} parent=0 // loop_body
    %s15 = ssub.s32 %s10, 1
    %s16 = ssub.s32 %s10, 2
    %s23 = sadd.s32 1, %s18
    %p24 = scmp.ge.s32.totalorder %s23, 1
    %s25 = scalar_select %p24, 0, %s23
    %s26 = sadd.s32 1, %s17
    %s27 = scalar_select %p24, %s26, %s17
    %p28 = scmp.ge.s32.totalorder %s27, 2
    %s29 = scalar_select %p28, 0, %s27
    %s30 = ssub.s32 %s17, %s29
    %p31 = scmp.eq.s32.totalorder %s30, 0
    %s33 = sadd.s32 %s32, 1
    %s34 = scalar_select %p31, %s32, %s33
    %p37 = pneg %p31
    %p38 = scmp.eq.s32.totalorder %s10, 1
    %p39 = por %p37, %p38
    %p40 = scmp.ne.s32.totalorder %s32, %s35
    %p41 = scmp.eq.s32.totalorder %s10, 0
    %p42 = por %p40, %p41
    %p43 = scmp.ne.s32.totalorder %s32, %s35
    %p44 = scmp.eq.s32.totalorder %s15, 1
    %p45 = por %p43, %p44
    %p46 = scmp.ne.s32.totalorder %s35, %s36
    %p47 = scmp.eq.s32.totalorder %s15, 0
    %p48 = por %p46, %p47
    %p49 = scmp.ne.s32.totalorder %s35, %s36
    %p50 = scmp.eq.s32.totalorder %s16, 1
    %p51 = por %p49, %p50
    %p53 = scmp.ne.s32.totalorder %s36, %s52
    %p54 = scmp.eq.s32.totalorder %s16, 0
    %p55 = por %p53, %p54
    %s57 = sadd.s32 %s56, 1
    %p60 = scmp.eq.s32.totalorder %s10, 1
    %p61 = scmp.ne.s32.totalorder %s56, %s58
    %p62 = scmp.eq.s32.totalorder %s10, 0
    %p63 = por %p61, %p62
    %p64 = scmp.ne.s32.totalorder %s56, %s58
    %p65 = scmp.eq.s32.totalorder %s15, 1
    %p66 = por %p64, %p65
    %p67 = scmp.ne.s32.totalorder %s58, %s59
    %p68 = scmp.eq.s32.totalorder %s15, 0
    %p69 = por %p67, %p68
    %p70 = scmp.ne.s32.totalorder %s58, %s59
    %p71 = scmp.eq.s32.totalorder %s16, 1
    %p72 = por %p70, %p71
    %p74 = scmp.ne.s32.totalorder %s59, %s73
    %p75 = scmp.eq.s32.totalorder %s16, 0
    %p76 = por %p74, %p75
    %s78 = sadd.s32 %s77, 1
    %p81 = scmp.eq.s32.totalorder %s10, 1
    %p82 = scmp.ne.s32.totalorder %s77, %s79
    %p83 = scmp.eq.s32.totalorder %s10, 0
    %p84 = por %p82, %p83
    %p85 = scmp.ne.s32.totalorder %s77, %s79
    %p86 = scmp.eq.s32.totalorder %s15, 1
    %p87 = por %p85, %p86
    %p88 = scmp.ne.s32.totalorder %s79, %s80
    %p89 = scmp.eq.s32.totalorder %s15, 0
    %p90 = por %p88, %p89
    %p91 = scmp.ne.s32.totalorder %s79, %s80
    %p92 = scmp.eq.s32.totalorder %s16, 1
    %p93 = por %p91, %p92
    %p95 = scmp.ne.s32.totalorder %s80, %s94
    %p96 = scmp.eq.s32.totalorder %s16, 0
    %p97 = por %p95, %p96
    %s99 = sadd.s32 %s98, 1
    %p102 = scmp.eq.s32.totalorder %s10, 1
    %p103 = scmp.ne.s32.totalorder %s98, %s100
    %p104 = scmp.eq.s32.totalorder %s10, 0
    %p105 = por %p103, %p104
    %p106 = scmp.ne.s32.totalorder %s98, %s100
    %p107 = scmp.eq.s32.totalorder %s15, 1
    %p108 = por %p106, %p107
    %p109 = scmp.ne.s32.totalorder %s100, %s101
    %p110 = scmp.eq.s32.totalorder %s15, 0
    %p111 = por %p109, %p110
    %p112 = scmp.ne.s32.totalorder %s100, %s101
    %p113 = scmp.eq.s32.totalorder %s16, 1
    %p114 = por %p112, %p113
    %p116 = scmp.ne.s32.totalorder %s101, %s115
    %p117 = scmp.eq.s32.totalorder %s16, 0
    %p118 = por %p116, %p117
    %s119 = ssub.s32 %s17, %s29
    %s120 = ssub.s32 %s18, %s25
    %s121 = sor.u32 %s119, %s120
    %p122 = scmp.eq.s32.totalorder %s121, 0
    %s124 = sadd.s32 %s123, 1
    %s125 = scalar_select %p122, %s123, %s124
    %p128 = pneg %p122
    %p129 = scmp.eq.s32.totalorder %s10, 1
    %p130 = por %p128, %p129
    %p131 = scmp.ne.s32.totalorder %s123, %s126
    %p132 = scmp.eq.s32.totalorder %s10, 0
    %p133 = por %p131, %p132
    %p134 = scmp.ne.s32.totalorder %s123, %s126
    %p135 = scmp.eq.s32.totalorder %s15, 1
    %p136 = por %p134, %p135
    %p137 = scmp.ne.s32.totalorder %s126, %s127
    %p138 = scmp.eq.s32.totalorder %s15, 0
    %p139 = por %p137, %p138
    %p140 = scmp.ne.s32.totalorder %s126, %s127
    %p141 = scmp.eq.s32.totalorder %s16, 1
    %p142 = por %p140, %p141
    %p144 = scmp.ne.s32.totalorder %s127, %s143
    %p145 = scmp.eq.s32.totalorder %s16, 0
    %p146 = por %p144, %p145
    %p147 = scmp.le.s32.totalorder 1, %s10
    %p148 = scmp.lt.s32.totalorder %s10, 3
    %p149 = pnand %p147, %p148
    %p150 = pneg %p149
    // Predicated region
    $region9: #{tpu_custom_call.1} parent=5 // pred_check
      _
    $region10: #{tpu_custom_call.1} parent=5 // pred_check_branch
      %152 = sbr.rel (%p149) target = $region12
    $region11: #{tpu_custom_call.1} parent=5 // pred_region
      %s153 = ssub.s32 %s10, 1
      // Predicated region
      $region13: #{tpu_custom_call.1} parent=11 // pred_check
        %p154 = pneg %p69
      $region14: #{tpu_custom_call.1} parent=11 // pred_check_branch
        %156 = sbr.rel (%p154) target = $region16
      $region15: #{tpu_custom_call.1} parent=11 // pred_region
        _
      $region16: #{tpu_custom_call.1} parent=11 // pred_fallthru
        _
      // Predicated region
      $region17: #{tpu_custom_call.1} parent=11 // pred_check
        %p157 = pneg %p90
      $region18: #{tpu_custom_call.1} parent=11 // pred_check_branch
        %159 = sbr.rel (%p157) target = $region20
      $region19: #{tpu_custom_call.1} parent=11 // pred_region
        _
      $region20: #{tpu_custom_call.1} parent=11 // pred_fallthru
        _
      // Predicated region
      $region21: #{tpu_custom_call.1} parent=11 // pred_check
        %p160 = pneg %p111
      $region22: #{tpu_custom_call.1} parent=11 // pred_check_branch
        %162 = sbr.rel (%p160) target = $region24
      $region23: #{tpu_custom_call.1} parent=11 // pred_region
        _
      $region24: #{tpu_custom_call.1} parent=11 // pred_fallthru
        _
    $region12: #{tpu_custom_call.1} parent=5 // pred_fallthru
      _
    %p163 = scmp.lt.s32.totalorder %s10, 2
    // Predicated region
    $region25: #{tpu_custom_call.1} parent=5 // pred_check
      %p164 = pneg %p163
    $region26: #{tpu_custom_call.1} parent=5 // pred_check_branch
      %166 = sbr.rel (%p164) target = $region28
    $region27: #{tpu_custom_call.1} parent=5 // pred_region
      // Predicated region
      $region29: #{tpu_custom_call.1} parent=27 // pred_check
        %p167 = pneg %p42
      $region30: #{tpu_custom_call.1} parent=27 // pred_check_branch
        %169 = sbr.rel (%p167) target = $region32
      $region31: #{tpu_custom_call.1} parent=27 // pred_region
        %p170 = scmp.lt.s32.totalorder %s17, 1
        %s171 = scalar_select %p170, %s17, 1
        %s172 = smul.addr %s171, 54
        %s173 = smul.addr %s172, 4
        %s174 = scalar_lea.vmem %s0, %s173
      $region32: #{tpu_custom_call.1} parent=27 // pred_fallthru
        _
    $region28: #{tpu_custom_call.1} parent=5 // pred_fallthru
      _
    %p175 = scmp.le.s32.totalorder 1, %s10
    %p176 = scmp.lt.s32.totalorder %s10, 3
    %p177 = pnand %p175, %p176
    %p178 = pneg %p177
    // Predicated region
    $region33: #{tpu_custom_call.1} parent=5 // pred_check
      _
    $region34: #{tpu_custom_call.1} parent=5 // pred_check_branch
      %180 = sbr.rel (%p177) target = $region36
    $region35: #{tpu_custom_call.1} parent=5 // pred_region
      %s181 = ssub.s32 %s10, 1
      %p182 = scmp.lt.s32.totalorder %s19, 1
      %s183 = scalar_select %p182, %s19, 1
      %s184 = smul.addr %s183, 54
      %s185 = smul.addr %s184, 4
      %s186 = scalar_lea.vmem %s0, %s185
      %p187 = pneg %p48
      %p188 = pneg %p45
      %p189 = pneg %p69
      %p190 = pneg %p66
      %p191 = pneg %p90
      %p192 = pneg %p87
      %p193 = pneg %p111
      %p194 = pneg %p108
      %p195 = pneg %p139
      %p196 = pneg %p136
      %s197 = smul.u32 32, %s20
      %p198 = scmp.lt.s32.totalorder %s19, 1
      %s199 = scalar_select %p198, %s19, 1
      %p200 = scmp.lt.s32.totalorder %s197, 31
      %s201 = scalar_select %p200, %s197, 31
      %s202 = smul.addr %s199, 32
      %s203 = sadd.s32 %s201, %s202
      %s204 = smul.addr %s203, 8
      %s205 = scalar_lea.vmem %s4, %s204
      %p206 = scmp.lt.s32.totalorder %s19, 1
      %s207 = scalar_select %p206, %s19, 1
      %s208 = smul.addr %s207, 54
      %s209 = smul.addr %s208, 4
      %s210 = scalar_lea.vmem %s0, %s209
      %s211 = smul.u32 32, %s20
      %p212 = scmp.lt.s32.totalorder %s19, 1
      %s213 = scalar_select %p212, %s19, 1
      %p214 = scmp.lt.s32.totalorder %s211, 31
      %s215 = scalar_select %p214, %s211, 31
      %s216 = smul.addr %s213, 32
      %s217 = sadd.s32 %s215, %s216
      %s218 = smul.addr %s217, 8
      %s219 = scalar_lea.vmem %s4, %s218
      %s220 = smul.u32 32, %s20
      %s222 = smul.u32 %s20, 16
      %v223 = vld [vmem:[%s2] sm:$0x1]
      %v224 = vld [vmem:[%s3] sm:$0x1]
      %s225 = smul.u32 %s222, 3
      %s226 = smul.addr %s225, 4
      %s227 = scalar_lea.vmem %s210, %s226
      %v228 = vld [vmem:[%s227] sm:$0xf]
      %v229 = vld [vmem:[%s227 + $0x4] sm:$0xf]
      %v230 = vld [vmem:[%s227 + $0xc] sm:$0xf]
      %v231 = vld [vmem:[%s227 + $0x10] sm:$0xf]
      %v232 = vld [vmem:[%s227 + $0x18] sm:$0xf]
      %v233 = vld [vmem:[%s227 + $0x1c] sm:$0xf]
      %v234 = vld [vmem:[%s227 + $0x24] sm:$0xf]
      %v235 = vld [vmem:[%s227 + $0x28] sm:$0xf]
      %v236 = vld [vmem:[%s227 + $0x30] sm:$0xf]
      %v237 = vld [vmem:[%s227 + $0x34] sm:$0xf]
      %v238 = vld [vmem:[%s227 + $0x3c] sm:$0xf]
      %v239 = vld [vmem:[%s227 + $0x40] sm:$0xf]
      %v240 = vld [vmem:[%s227 + $0x48] sm:$0xf]
      %v241 = vld [vmem:[%s227 + $0x4c] sm:$0xf]
      %v242 = vld [vmem:[%s227 + $0x54] sm:$0xf]
      %v243 = vld [vmem:[%s227 + $0x58] sm:$0xf]
      %v244 = vld [vmem:[%s227 + $0x60] sm:$0xf]
      %v245 = vld [vmem:[%s227 + $0x64] sm:$0xf]
      %v246 = vld [vmem:[%s227 + $0x6c] sm:$0xf]
      %v247 = vld [vmem:[%s227 + $0x70] sm:$0xf]
      %v248 = vld [vmem:[%s227 + $0x78] sm:$0xf]
      %v249 = vld [vmem:[%s227 + $0x7c] sm:$0xf]
      %v250 = vld [vmem:[%s227 + $0x84] sm:$0xf]
      %v251 = vld [vmem:[%s227 + $0x88] sm:$0xf]
      %v252 = vld [vmem:[%s227 + $0x90] sm:$0xf]
      %v253 = vld [vmem:[%s227 + $0x94] sm:$0xf]
      %v254 = vld [vmem:[%s227 + $0x9c] sm:$0xf]
      %v255 = vld [vmem:[%s227 + $0xa0] sm:$0xf]
      %v256 = vld [vmem:[%s227 + $0xa8] sm:$0xf]
      %v257 = vld [vmem:[%s227 + $0xac] sm:$0xf]
      %v258 = vld [vmem:[%s227 + $0xb4] sm:$0xf]
      %v259 = vld [vmem:[%s227 + $0xb8] sm:$0xf]
      %vm260 = vcmask 27648
      %261 = vst.msk [vmem:[#allocation2] sm:$0xf] %vm260, %v228
      %262 = vst.msk [vmem:[#allocation2 + $0x4] sm:$0xf] %vm260, %v229
      %263 = vst.msk [vmem:[#allocation2 + $0x8] sm:$0xf] %vm260, %v230
      %264 = vst.msk [vmem:[#allocation2 + $0xc] sm:$0xf] %vm260, %v231
      %265 = vst.msk [vmem:[#allocation2 + $0x10] sm:$0xf] %vm260, %v232
      %266 = vst.msk [vmem:[#allocation2 + $0x14] sm:$0xf] %vm260, %v233
      %267 = vst.msk [vmem:[#allocation2 + $0x18] sm:$0xf] %vm260, %v234
      %268 = vst.msk [vmem:[#allocation2 + $0x1c] sm:$0xf] %vm260, %v235
      %269 = vst.msk [vmem:[#allocation2 + $0x20] sm:$0xf] %vm260, %v236
      %270 = vst.msk [vmem:[#allocation2 + $0x24] sm:$0xf] %vm260, %v237
      %271 = vst.msk [vmem:[#allocation2 + $0x28] sm:$0xf] %vm260, %v238
      %272 = vst.msk [vmem:[#allocation2 + $0x2c] sm:$0xf] %vm260, %v239
      %273 = vst.msk [vmem:[#allocation2 + $0x30] sm:$0xf] %vm260, %v240
      %274 = vst.msk [vmem:[#allocation2 + $0x34] sm:$0xf] %vm260, %v241
      %275 = vst.msk [vmem:[#allocation2 + $0x38] sm:$0xf] %vm260, %v242
      %276 = vst.msk [vmem:[#allocation2 + $0x3c] sm:$0xf] %vm260, %v243
      %277 = vst.msk [vmem:[#allocation2 + $0x40] sm:$0xf] %vm260, %v244
      %278 = vst.msk [vmem:[#allocation2 + $0x44] sm:$0xf] %vm260, %v245
      %279 = vst.msk [vmem:[#allocation2 + $0x48] sm:$0xf] %vm260, %v246
      %280 = vst.msk [vmem:[#allocation2 + $0x4c] sm:$0xf] %vm260, %v247
      %281 = vst.msk [vmem:[#allocation2 + $0x50] sm:$0xf] %vm260, %v248
      %282 = vst.msk [vmem:[#allocation2 + $0x54] sm:$0xf] %vm260, %v249
      %283 = vst.msk [vmem:[#allocation2 + $0x58] sm:$0xf] %vm260, %v250
      %284 = vst.msk [vmem:[#allocation2 + $0x5c] sm:$0xf] %vm260, %v251
      %285 = vst.msk [vmem:[#allocation2 + $0x60] sm:$0xf] %vm260, %v252
      %286 = vst.msk [vmem:[#allocation2 + $0x64] sm:$0xf] %vm260, %v253
      %287 = vst.msk [vmem:[#allocation2 + $0x68] sm:$0xf] %vm260, %v254
      %288 = vst.msk [vmem:[#allocation2 + $0x6c] sm:$0xf] %vm260, %v255
      %289 = vst.msk [vmem:[#allocation2 + $0x70] sm:$0xf] %vm260, %v256
      %290 = vst.msk [vmem:[#allocation2 + $0x74] sm:$0xf] %vm260, %v257
      %291 = vst.msk [vmem:[#allocation2 + $0x78] sm:$0xf] %vm260, %v258
      %292 = vst.msk [vmem:[#allocation2 + $0x7c] sm:$0xf] %vm260, %v259
      %v293 = vld [vmem:[%s227] sm:$0xf]
      %v294 = vld [vmem:[%s227 + $0x4] sm:$0xf]
      %v295 = vld [vmem:[%s227 + $0x8] sm:$0x1]
      %v296 = vld [vmem:[%s227 + $0xc] sm:$0xf]
      %v297 = vld [vmem:[%s227 + $0x10] sm:$0xf]
      %v298 = vld [vmem:[%s227 + $0x14] sm:$0x1]
      %v299 = vld [vmem:[%s227 + $0x18] sm:$0xf]
      %v300 = vld [vmem:[%s227 + $0x1c] sm:$0xf]
      %v301 = vld [vmem:[%s227 + $0x20] sm:$0x1]
      %v302 = vld [vmem:[%s227 + $0x24] sm:$0xf]
      %v303 = vld [vmem:[%s227 + $0x28] sm:$0xf]
      %v304 = vld [vmem:[%s227 + $0x2c] sm:$0x1]
      %v305 = vld [vmem:[%s227 + $0x30] sm:$0xf]
      %v306 = vld [vmem:[%s227 + $0x34] sm:$0xf]
      %v307 = vld [vmem:[%s227 + $0x38] sm:$0x1]
      %v308 = vld [vmem:[%s227 + $0x3c] sm:$0xf]
      %v309 = vld [vmem:[%s227 + $0x40] sm:$0xf]
      %v310 = vld [vmem:[%s227 + $0x44] sm:$0x1]
      %v311 = vld [vmem:[%s227 + $0x48] sm:$0xf]
      %v312 = vld [vmem:[%s227 + $0x4c] sm:$0xf]
      %v313 = vld [vmem:[%s227 + $0x50] sm:$0x1]
      %v314 = vld [vmem:[%s227 + $0x54] sm:$0xf]
      %v315 = vld [vmem:[%s227 + $0x58] sm:$0xf]
      %v316 = vld [vmem:[%s227 + $0x5c] sm:$0x1]
      %v317 = vld [vmem:[%s227 + $0x60] sm:$0xf]
      %v318 = vld [vmem:[%s227 + $0x64] sm:$0xf]
      %v319 = vld [vmem:[%s227 + $0x68] sm:$0x1]
      %v320 = vld [vmem:[%s227 + $0x6c] sm:$0xf]
      %v321 = vld [vmem:[%s227 + $0x70] sm:$0xf]
      %v322 = vld [vmem:[%s227 + $0x74] sm:$0x1]
      %v323 = vld [vmem:[%s227 + $0x78] sm:$0xf]
      %v324 = vld [vmem:[%s227 + $0x7c] sm:$0xf]
      %v325 = vld [vmem:[%s227 + $0x80] sm:$0x1]
      %v326 = vld [vmem:[%s227 + $0x84] sm:$0xf]
      %v327 = vld [vmem:[%s227 + $0x88] sm:$0xf]
      %v328 = vld [vmem:[%s227 + $0x8c] sm:$0x1]
      %v329 = vld [vmem:[%s227 + $0x90] sm:$0xf]
      %v330 = vld [vmem:[%s227 + $0x94] sm:$0xf]
      %v331 = vld [vmem:[%s227 + $0x98] sm:$0x1]
      %v332 = vld [vmem:[%s227 + $0x9c] sm:$0xf]
      %v333 = vld [vmem:[%s227 + $0xa0] sm:$0xf]
      %v334 = vld [vmem:[%s227 + $0xa4] sm:$0x1]
      %v335 = vld [vmem:[%s227 + $0xa8] sm:$0xf]
      %v336 = vld [vmem:[%s227 + $0xac] sm:$0xf]
      %v337 = vld [vmem:[%s227 + $0xb0] sm:$0x1]
      %v338 = vld [vmem:[%s227 + $0xb4] sm:$0xf]
      %v339 = vld [vmem:[%s227 + $0xb8] sm:$0xf]
      %v340 = vld [vmem:[%s227 + $0xbc] sm:$0x1]
      %vm341 = vsmask.f32 3328
      %vm342 = vsmask.f32 7440
      %vm343 = vmor %vm341, %vm342
      %v345 = vshrl.u32 %v293, 16
      %v347 = vrot.slane %v345, 4
      %v348 = vshll.u32 %v293, 16
      %v350 = vrot.slane %v348, 5
      %v351 = vor.u32 %v347, %v350
      %v352 = vrot.slane %v351, 4
      %v354 = vshll.u32 %v294, 16
      %v356 = vrot.slane %v354, 5
      %v357 = vsel %vm343, %v352, %v356
      %v358 = vshrl.u32 %v294, 16
      %v360 = vrot.slane %v358, 4
      %v361 = vor.u32 %v360, %v356
      %v362 = vrot.slane %v361, 4
      %v364 = vshll.u32 %v295, 16
      %v366 = vrot.slane %v364, 5
      %v367 = vsel %vm343, %v362, %v366
      %v369 = vshrl.u32 %v296, 16
      %v371 = vrot.slane %v369, 4
      %v372 = vshll.u32 %v296, 16
      %v374 = vrot.slane %v372, 5
      %v375 = vor.u32 %v371, %v374
      %v376 = vrot.slane %v375, 4
      %v378 = vshll.u32 %v297, 16
      %v380 = vrot.slane %v378, 5
      %v381 = vsel %vm343, %v376, %v380
      %v382 = vshrl.u32 %v297, 16
      %v384 = vrot.slane %v382, 4
      %v385 = vor.u32 %v384, %v380
      %v386 = vrot.slane %v385, 4
      %v388 = vshll.u32 %v298, 16
      %v390 = vrot.slane %v388, 5
      %v391 = vsel %vm343, %v386, %v390
      %v393 = vshrl.u32 %v299, 16
      %v395 = vrot.slane %v393, 4
      %v396 = vshll.u32 %v299, 16
      %v398 = vrot.slane %v396, 5
      %v399 = vor.u32 %v395, %v398
      %v400 = vrot.slane %v399, 4
      %v402 = vshll.u32 %v300, 16
      %v404 = vrot.slane %v402, 5
      %v405 = vsel %vm343, %v400, %v404
      %v406 = vshrl.u32 %v300, 16
      %v408 = vrot.slane %v406, 4
      %v409 = vor.u32 %v408, %v404
      %v410 = vrot.slane %v409, 4
      %v412 = vshll.u32 %v301, 16
      %v414 = vrot.slane %v412, 5
      %v415 = vsel %vm343, %v410, %v414
      %v417 = vshrl.u32 %v302, 16
      %v419 = vrot.slane %v417, 4
      %v420 = vshll.u32 %v302, 16
      %v422 = vrot.slane %v420, 5
      %v423 = vor.u32 %v419, %v422
      %v424 = vrot.slane %v423, 4
      %v426 = vshll.u32 %v303, 16
      %v428 = vrot.slane %v426, 5
      %v429 = vsel %vm343, %v424, %v428
      %v430 = vshrl.u32 %v303, 16
      %v432 = vrot.slane %v430, 4
      %v433 = vor.u32 %v432, %v428
      %v434 = vrot.slane %v433, 4
      %v436 = vshll.u32 %v304, 16
      %v438 = vrot.slane %v436, 5
      %v439 = vsel %vm343, %v434, %v438
      %v441 = vshrl.u32 %v305, 16
      %v443 = vrot.slane %v441, 4
      %v444 = vshll.u32 %v305, 16
      %v446 = vrot.slane %v444, 5
      %v447 = vor.u32 %v443, %v446
      %v448 = vrot.slane %v447, 4
      %v450 = vshll.u32 %v306, 16
      %v452 = vrot.slane %v450, 5
      %v453 = vsel %vm343, %v448, %v452
      %v454 = vshrl.u32 %v306, 16
      %v456 = vrot.slane %v454, 4
      %v457 = vor.u32 %v456, %v452
      %v458 = vrot.slane %v457, 4
      %v460 = vshll.u32 %v307, 16
      %v462 = vrot.slane %v460, 5
      %v463 = vsel %vm343, %v458, %v462
      %v465 = vshrl.u32 %v308, 16
      %v467 = vrot.slane %v465, 4
      %v468 = vshll.u32 %v308, 16
      %v470 = vrot.slane %v468, 5
      %v471 = vor.u32 %v467, %v470
      %v472 = vrot.slane %v471, 4
      %v474 = vshll.u32 %v309, 16
      %v476 = vrot.slane %v474, 5
      %v477 = vsel %vm343, %v472, %v476
      %v478 = vshrl.u32 %v309, 16
      %v480 = vrot.slane %v478, 4
      %v481 = vor.u32 %v480, %v476
      %v482 = vrot.slane %v481, 4
      %v484 = vshll.u32 %v310, 16
      %v486 = vrot.slane %v484, 5
      %v487 = vsel %vm343, %v482, %v486
      %v489 = vshrl.u32 %v311, 16
      %v491 = vrot.slane %v489, 4
      %v492 = vshll.u32 %v311, 16
      %v494 = vrot.slane %v492, 5
      %v495 = vor.u32 %v491, %v494
      %v496 = vrot.slane %v495, 4
      %v498 = vshll.u32 %v312, 16
      %v500 = vrot.slane %v498, 5
      %v501 = vsel %vm343, %v496, %v500
      %v502 = vshrl.u32 %v312, 16
      %v504 = vrot.slane %v502, 4
      %v505 = vor.u32 %v504, %v500
      %v506 = vrot.slane %v505, 4
      %v508 = vshll.u32 %v313, 16
      %v510 = vrot.slane %v508, 5
      %v511 = vsel %vm343, %v506, %v510
      %v513 = vshrl.u32 %v314, 16
      %v515 = vrot.slane %v513, 4
      %v516 = vshll.u32 %v314, 16
      %v518 = vrot.slane %v516, 5
      %v519 = vor.u32 %v515, %v518
      %v520 = vrot.slane %v519, 4
      %v522 = vshll.u32 %v315, 16
      %v524 = vrot.slane %v522, 5
      %v525 = vsel %vm343, %v520, %v524
      %v526 = vshrl.u32 %v315, 16
      %v528 = vrot.slane %v526, 4
      %v529 = vor.u32 %v528, %v524
      %v530 = vrot.slane %v529, 4
      %v532 = vshll.u32 %v316, 16
      %v534 = vrot.slane %v532, 5
      %v535 = vsel %vm343, %v530, %v534
      %v537 = vshrl.u32 %v317, 16
      %v539 = vrot.slane %v537, 4
      %v540 = vshll.u32 %v317, 16
      %v542 = vrot.slane %v540, 5
      %v543 = vor.u32 %v539, %v542
      %v544 = vrot.slane %v543, 4
      %v546 = vshll.u32 %v318, 16
      %v548 = vrot.slane %v546, 5
      %v549 = vsel %vm343, %v544, %v548
      %v550 = vshrl.u32 %v318, 16
      %v552 = vrot.slane %v550, 4
      %v553 = vor.u32 %v552, %v548
      %v554 = vrot.slane %v553, 4
      %v556 = vshll.u32 %v319, 16
      %v558 = vrot.slane %v556, 5
      %v559 = vsel %vm343, %v554, %v558
      %v561 = vshrl.u32 %v320, 16
      %v563 = vrot.slane %v561, 4
      %v564 = vshll.u32 %v320, 16
      %v566 = vrot.slane %v564, 5
      %v567 = vor.u32 %v563, %v566
      %v568 = vrot.slane %v567, 4
      %v570 = vshll.u32 %v321, 16
      %v572 = vrot.slane %v570, 5
      %v573 = vsel %vm343, %v568, %v572
      %v574 = vshrl.u32 %v321, 16
      %v576 = vrot.slane %v574, 4
      %v577 = vor.u32 %v576, %v572
      %v578 = vrot.slane %v577, 4
      %v580 = vshll.u32 %v322, 16
      %v582 = vrot.slane %v580, 5
      %v583 = vsel %vm343, %v578, %v582
      %v585 = vshrl.u32 %v323, 16
      %v587 = vrot.slane %v585, 4
      %v588 = vshll.u32 %v323, 16
      %v590 = vrot.slane %v588, 5
      %v591 = vor.u32 %v587, %v590
      %v592 = vrot.slane %v591, 4
      %v594 = vshll.u32 %v324, 16
      %v596 = vrot.slane %v594, 5
      %v597 = vsel %vm343, %v592, %v596
      %v598 = vshrl.u32 %v324, 16
      %v600 = vrot.slane %v598, 4
      %v601 = vor.u32 %v600, %v596
      %v602 = vrot.slane %v601, 4
      %v604 = vshll.u32 %v325, 16
      %v606 = vrot.slane %v604, 5
      %v607 = vsel %vm343, %v602, %v606
      %v609 = vshrl.u32 %v326, 16
      %v611 = vrot.slane %v609, 4
      %v612 = vshll.u32 %v326, 16
      %v614 = vrot.slane %v612, 5
      %v615 = vor.u32 %v611, %v614
      %v616 = vrot.slane %v615, 4
      %v618 = vshll.u32 %v327, 16
      %v620 = vrot.slane %v618, 5
      %v621 = vsel %vm343, %v616, %v620
      %v622 = vshrl.u32 %v327, 16
      %v624 = vrot.slane %v622, 4
      %v625 = vor.u32 %v624, %v620
      %v626 = vrot.slane %v625, 4
      %v628 = vshll.u32 %v328, 16
      %v630 = vrot.slane %v628, 5
      %v631 = vsel %vm343, %v626, %v630
      %v633 = vshrl.u32 %v329, 16
      %v635 = vrot.slane %v633, 4
      %v636 = vshll.u32 %v329, 16
      %v638 = vrot.slane %v636, 5
      %v639 = vor.u32 %v635, %v638
      %v640 = vrot.slane %v639, 4
      %v642 = vshll.u32 %v330, 16
      %v644 = vrot.slane %v642, 5
      %v645 = vsel %vm343, %v640, %v644
      %v646 = vshrl.u32 %v330, 16
      %v648 = vrot.slane %v646, 4
      %v649 = vor.u32 %v648, %v644
      %v650 = vrot.slane %v649, 4
      %v652 = vshll.u32 %v331, 16
      %v654 = vrot.slane %v652, 5
      %v655 = vsel %vm343, %v650, %v654
      %v657 = vshrl.u32 %v332, 16
      %v659 = vrot.slane %v657, 4
      %v660 = vshll.u32 %v332, 16
      %v662 = vrot.slane %v660, 5
      %v663 = vor.u32 %v659, %v662
      %v664 = vrot.slane %v663, 4
      %v666 = vshll.u32 %v333, 16
      %v668 = vrot.slane %v666, 5
      %v669 = vsel %vm343, %v664, %v668
      %v670 = vshrl.u32 %v333, 16
      %v672 = vrot.slane %v670, 4
      %v673 = vor.u32 %v672, %v668
      %v674 = vrot.slane %v673, 4
      %v676 = vshll.u32 %v334, 16
      %v678 = vrot.slane %v676, 5
      %v679 = vsel %vm343, %v674, %v678
      %v681 = vshrl.u32 %v335, 16
      %v683 = vrot.slane %v681, 4
      %v684 = vshll.u32 %v335, 16
      %v686 = vrot.slane %v684, 5
      %v687 = vor.u32 %v683, %v686
      %v688 = vrot.slane %v687, 4
      %v690 = vshll.u32 %v336, 16
      %v692 = vrot.slane %v690, 5
      %v693 = vsel %vm343, %v688, %v692
      %v694 = vshrl.u32 %v336, 16
      %v696 = vrot.slane %v694, 4
      %v697 = vor.u32 %v696, %v692
      %v698 = vrot.slane %v697, 4
      %v700 = vshll.u32 %v337, 16
      %v702 = vrot.slane %v700, 5
      %v703 = vsel %vm343, %v698, %v702
      %v705 = vshrl.u32 %v338, 16
      %v707 = vrot.slane %v705, 4
      %v708 = vshll.u32 %v338, 16
      %v710 = vrot.slane %v708, 5
      %v711 = vor.u32 %v707, %v710
      %v712 = vrot.slane %v711, 4
      %v714 = vshll.u32 %v339, 16
      %v716 = vrot.slane %v714, 5
      %v717 = vsel %vm343, %v712, %v716
      %v718 = vshrl.u32 %v339, 16
      %v720 = vrot.slane %v718, 4
      %v721 = vor.u32 %v720, %v716
      %v722 = vrot.slane %v721, 4
      %v724 = vshll.u32 %v340, 16
      %v726 = vrot.slane %v724, 5
      %v727 = vsel %vm343, %v722, %v726
      %728 = vrot.lane.b32.xlu0 %v357, 4
      %v729 = vpop.permute.xlu0 %728
      %730 = vrot.lane.b32.xlu0 %v367, 4
      %v731 = vpop.permute.xlu0 %730
      %732 = vrot.lane.b32.xlu0 %v381, 4
      %v733 = vpop.permute.xlu0 %732
      %734 = vrot.lane.b32.xlu0 %v391, 4
      %v735 = vpop.permute.xlu0 %734
      %736 = vrot.lane.b32.xlu0 %v405, 4
      %v737 = vpop.permute.xlu0 %736
      %738 = vrot.lane.b32.xlu0 %v415, 4
      %v739 = vpop.permute.xlu0 %738
      %740 = vrot.lane.b32.xlu0 %v429, 4
      %v741 = vpop.permute.xlu0 %740
      %742 = vrot.lane.b32.xlu0 %v439, 4
      %v743 = vpop.permute.xlu0 %742
      %744 = vrot.lane.b32.xlu0 %v453, 4
      %v745 = vpop.permute.xlu0 %744
      %746 = vrot.lane.b32.xlu0 %v463, 4
      %v747 = vpop.permute.xlu0 %746
      %748 = vrot.lane.b32.xlu0 %v477, 4
      %v749 = vpop.permute.xlu0 %748
      %750 = vrot.lane.b32.xlu0 %v487, 4
      %v751 = vpop.permute.xlu0 %750
      %752 = vrot.lane.b32.xlu0 %v501, 4
      %v753 = vpop.permute.xlu0 %752
      %754 = vrot.lane.b32.xlu0 %v511, 4
      %v755 = vpop.permute.xlu0 %754
      %756 = vrot.lane.b32.xlu0 %v525, 4
      %v757 = vpop.permute.xlu0 %756
      %758 = vrot.lane.b32.xlu0 %v535, 4
      %v759 = vpop.permute.xlu0 %758
      %760 = vrot.lane.b32.xlu0 %v549, 4
      %v761 = vpop.permute.xlu0 %760
      %762 = vrot.lane.b32.xlu0 %v559, 4
      %v763 = vpop.permute.xlu0 %762
      %764 = vrot.lane.b32.xlu0 %v573, 4
      %v765 = vpop.permute.xlu0 %764
      %766 = vrot.lane.b32.xlu0 %v583, 4
      %v767 = vpop.permute.xlu0 %766
      %768 = vrot.lane.b32.xlu0 %v597, 4
      %v769 = vpop.permute.xlu0 %768
      %770 = vrot.lane.b32.xlu0 %v607, 4
      %v771 = vpop.permute.xlu0 %770
      %772 = vrot.lane.b32.xlu0 %v621, 4
      %v773 = vpop.permute.xlu0 %772
      %774 = vrot.lane.b32.xlu0 %v631, 4
      %v775 = vpop.permute.xlu0 %774
      %776 = vrot.lane.b32.xlu0 %v645, 4
      %v777 = vpop.permute.xlu0 %776
      %778 = vrot.lane.b32.xlu0 %v655, 4
      %v779 = vpop.permute.xlu0 %778
      %780 = vrot.lane.b32.xlu0 %v669, 4
      %v781 = vpop.permute.xlu0 %780
      %782 = vrot.lane.b32.xlu0 %v679, 4
      %v783 = vpop.permute.xlu0 %782
      %784 = vrot.lane.b32.xlu0 %v693, 4
      %v785 = vpop.permute.xlu0 %784
      %786 = vrot.lane.b32.xlu0 %v703, 4
      %v787 = vpop.permute.xlu0 %786
      %788 = vrot.lane.b32.xlu0 %v717, 4
      %v789 = vpop.permute.xlu0 %788
      %790 = vrot.lane.b32.xlu0 %v727, 4
      %v791 = vpop.permute.xlu0 %790
      %vm824 = vcmask 60448
      %825 = vst.msk [vmem:[#allocation2] sm:$0xf] %vm824, %v729
      %826 = vst.msk [vmem:[#allocation2 + $0x4] sm:$0xf] %vm824, %v731
      %827 = vst.msk [vmem:[#allocation2 + $0x8] sm:$0xf] %vm824, %v733
      %828 = vst.msk [vmem:[#allocation2 + $0xc] sm:$0xf] %vm824, %v735
      %829 = vst.msk [vmem:[#allocation2 + $0x10] sm:$0xf] %vm824, %v737
      %830 = vst.msk [vmem:[#allocation2 + $0x14] sm:$0xf] %vm824, %v739
      %831 = vst.msk [vmem:[#allocation2 + $0x18] sm:$0xf] %vm824, %v741
      %832 = vst.msk [vmem:[#allocation2 + $0x1c] sm:$0xf] %vm824, %v743
      %833 = vst.msk [vmem:[#allocation2 + $0x20] sm:$0xf] %vm824, %v745
      %834 = vst.msk [vmem:[#allocation2 + $0x24] sm:$0xf] %vm824, %v747
      %835 = vst.msk [vmem:[#allocation2 + $0x28] sm:$0xf] %vm824, %v749
      %836 = vst.msk [vmem:[#allocation2 + $0x2c] sm:$0xf] %vm824, %v751
      %837 = vst.msk [vmem:[#allocation2 + $0x30] sm:$0xf] %vm824, %v753
      %838 = vst.msk [vmem:[#allocation2 + $0x34] sm:$0xf] %vm824, %v755
      %839 = vst.msk [vmem:[#allocation2 + $0x38] sm:$0xf] %vm824, %v757
      %840 = vst.msk [vmem:[#allocation2 + $0x3c] sm:$0xf] %vm824, %v759
      %841 = vst.msk [vmem:[#allocation2 + $0x40] sm:$0xf] %vm824, %v761
      %842 = vst.msk [vmem:[#allocation2 + $0x44] sm:$0xf] %vm824, %v763
      %843 = vst.msk [vmem:[#allocation2 + $0x48] sm:$0xf] %vm824, %v765
      %844 = vst.msk [vmem:[#allocation2 + $0x4c] sm:$0xf] %vm824, %v767
      %845 = vst.msk [vmem:[#allocation2 + $0x50] sm:$0xf] %vm824, %v769
      %846 = vst.msk [vmem:[#allocation2 + $0x54] sm:$0xf] %vm824, %v771
      %847 = vst.msk [vmem:[#allocation2 + $0x58] sm:$0xf] %vm824, %v773
      %848 = vst.msk [vmem:[#allocation2 + $0x5c] sm:$0xf] %vm824, %v775
      %849 = vst.msk [vmem:[#allocation2 + $0x60] sm:$0xf] %vm824, %v777
      %850 = vst.msk [vmem:[#allocation2 + $0x64] sm:$0xf] %vm824, %v779
      %851 = vst.msk [vmem:[#allocation2 + $0x68] sm:$0xf] %vm824, %v781
      %852 = vst.msk [vmem:[#allocation2 + $0x6c] sm:$0xf] %vm824, %v783
      %853 = vst.msk [vmem:[#allocation2 + $0x70] sm:$0xf] %vm824, %v785
      %854 = vst.msk [vmem:[#allocation2 + $0x74] sm:$0xf] %vm824, %v787
      %855 = vst.msk [vmem:[#allocation2 + $0x78] sm:$0xf] %vm824, %v789
      %856 = vst.msk [vmem:[#allocation2 + $0x7c] sm:$0xf] %vm824, %v791
      %v857 = vld [vmem:[%s227] sm:$0xe]
      %v858 = vld [vmem:[%s227 + $0x4] sm:$0xf]
      %v859 = vld [vmem:[%s227 + $0x8] sm:$0x1]
      %v860 = vld [vmem:[%s227 + $0xc] sm:$0xe]
      %v861 = vld [vmem:[%s227 + $0x10] sm:$0xf]
      %v862 = vld [vmem:[%s227 + $0x14] sm:$0x1]
      %v863 = vld [vmem:[%s227 + $0x18] sm:$0xe]
      %v864 = vld [vmem:[%s227 + $0x1c] sm:$0xf]
      %v865 = vld [vmem:[%s227 + $0x20] sm:$0x1]
      %v866 = vld [vmem:[%s227 + $0x24] sm:$0xe]
      %v867 = vld [vmem:[%s227 + $0x28] sm:$0xf]
      %v868 = vld [vmem:[%s227 + $0x2c] sm:$0x1]
      %v869 = vld [vmem:[%s227 + $0x30] sm:$0xe]
      %v870 = vld [vmem:[%s227 + $0x34] sm:$0xf]
      %v871 = vld [vmem:[%s227 + $0x38] sm:$0x1]
      %v872 = vld [vmem:[%s227 + $0x3c] sm:$0xe]
      %v873 = vld [vmem:[%s227 + $0x40] sm:$0xf]
      %v874 = vld [vmem:[%s227 + $0x44] sm:$0x1]
      %v875 = vld [vmem:[%s227 + $0x48] sm:$0xe]
      %v876 = vld [vmem:[%s227 + $0x4c] sm:$0xf]
      %v877 = vld [vmem:[%s227 + $0x50] sm:$0x1]
      %v878 = vld [vmem:[%s227 + $0x54] sm:$0xe]
      %v879 = vld [vmem:[%s227 + $0x58] sm:$0xf]
      %v880 = vld [vmem:[%s227 + $0x5c] sm:$0x1]
      %v881 = vld [vmem:[%s227 + $0x60] sm:$0xe]
      %v882 = vld [vmem:[%s227 + $0x64] sm:$0xf]
      %v883 = vld [vmem:[%s227 + $0x68] sm:$0x1]
      %v884 = vld [vmem:[%s227 + $0x6c] sm:$0xe]
      %v885 = vld [vmem:[%s227 + $0x70] sm:$0xf]
      %v886 = vld [vmem:[%s227 + $0x74] sm:$0x1]
      %v887 = vld [vmem:[%s227 + $0x78] sm:$0xe]
      %v888 = vld [vmem:[%s227 + $0x7c] sm:$0xf]
      %v889 = vld [vmem:[%s227 + $0x80] sm:$0x1]
      %v890 = vld [vmem:[%s227 + $0x84] sm:$0xe]
      %v891 = vld [vmem:[%s227 + $0x88] sm:$0xf]
      %v892 = vld [vmem:[%s227 + $0x8c] sm:$0x1]
      %v893 = vld [vmem:[%s227 + $0x90] sm:$0xe]
      %v894 = vld [vmem:[%s227 + $0x94] sm:$0xf]
      %v895 = vld [vmem:[%s227 + $0x98] sm:$0x1]
      %v896 = vld [vmem:[%s227 + $0x9c] sm:$0xe]
      %v897 = vld [vmem:[%s227 + $0xa0] sm:$0xf]
      %v898 = vld [vmem:[%s227 + $0xa4] sm:$0x1]
      %v899 = vld [vmem:[%s227 + $0xa8] sm:$0xe]
      %v900 = vld [vmem:[%s227 + $0xac] sm:$0xf]
      %v901 = vld [vmem:[%s227 + $0xb0] sm:$0x1]
      %v902 = vld [vmem:[%s227 + $0xb4] sm:$0xe]
      %v903 = vld [vmem:[%s227 + $0xb8] sm:$0xf]
      %v904 = vld [vmem:[%s227 + $0xbc] sm:$0x1]
      %vm953 = vcmask 1042432
      %vm954 = vcmask 1046532
      %vm955 = vmor %vm953, %vm954
      %v956 = vrot.slane %v857, 5
      %v957 = vrot.slane %v956, 4
      %v958 = vrot.slane %v858, 5
      %v959 = vsel %vm955, %v957, %v958
      %v960 = vrot.slane %v958, 4
      %v961 = vrot.slane %v859, 5
      %v962 = vsel %vm955, %v960, %v961
      %v963 = vrot.slane %v860, 5
      %v964 = vrot.slane %v963, 4
      %v965 = vrot.slane %v861, 5
      %v966 = vsel %vm955, %v964, %v965
      %v967 = vrot.slane %v965, 4
      %v968 = vrot.slane %v862, 5
      %v969 = vsel %vm955, %v967, %v968
      %v970 = vrot.slane %v863, 5
      %v971 = vrot.slane %v970, 4
      %v972 = vrot.slane %v864, 5
      %v973 = vsel %vm955, %v971, %v972
      %v974 = vrot.slane %v972, 4
      %v975 = vrot.slane %v865, 5
      %v976 = vsel %vm955, %v974, %v975
      %v977 = vrot.slane %v866, 5
      %v978 = vrot.slane %v977, 4
      %v979 = vrot.slane %v867, 5
      %v980 = vsel %vm955, %v978, %v979
      %v981 = vrot.slane %v979, 4
      %v982 = vrot.slane %v868, 5
      %v983 = vsel %vm955, %v981, %v982
      %v984 = vrot.slane %v869, 5
      %v985 = vrot.slane %v984, 4
      %v986 = vrot.slane %v870, 5
      %v987 = vsel %vm955, %v985, %v986
      %v988 = vrot.slane %v986, 4
      %v989 = vrot.slane %v871, 5
      %v990 = vsel %vm955, %v988, %v989
      %v991 = vrot.slane %v872, 5
      %v992 = vrot.slane %v991, 4
      %v993 = vrot.slane %v873, 5
      %v994 = vsel %vm955, %v992, %v993
      %v995 = vrot.slane %v993, 4
      %v996 = vrot.slane %v874, 5
      %v997 = vsel %vm955, %v995, %v996
      %v998 = vrot.slane %v875, 5
      %v999 = vrot.slane %v998, 4
      %v1000 = vrot.slane %v876, 5
      %v1001 = vsel %vm955, %v999, %v1000
      %v1002 = vrot.slane %v1000, 4
      %v1003 = vrot.slane %v877, 5
      %v1004 = vsel %vm955, %v1002, %v1003
      %v1005 = vrot.slane %v878, 5
      %v1006 = vrot.slane %v1005, 4
      %v1007 = vrot.slane %v879, 5
      %v1008 = vsel %vm955, %v1006, %v1007
      %v1009 = vrot.slane %v1007, 4
      %v1010 = vrot.slane %v880, 5
      %v1011 = vsel %vm955, %v1009, %v1010
      %v1012 = vrot.slane %v881, 5
      %v1013 = vrot.slane %v1012, 4
      %v1014 = vrot.slane %v882, 5
      %v1015 = vsel %vm955, %v1013, %v1014
      %v1016 = vrot.slane %v1014, 4
      %v1017 = vrot.slane %v883, 5
      %v1018 = vsel %vm955, %v1016, %v1017
      %v1019 = vrot.slane %v884, 5
      %v1020 = vrot.slane %v1019, 4
      %v1021 = vrot.slane %v885, 5
      %v1022 = vsel %vm955, %v1020, %v1021
      %v1023 = vrot.slane %v1021, 4
      %v1024 = vrot.slane %v886, 5
      %v1025 = vsel %vm955, %v1023, %v1024
      %v1026 = vrot.slane %v887, 5
      %v1027 = vrot.slane %v1026, 4
      %v1028 = vrot.slane %v888, 5
      %v1029 = vsel %vm955, %v1027, %v1028
      %v1030 = vrot.slane %v1028, 4
      %v1031 = vrot.slane %v889, 5
      %v1032 = vsel %vm955, %v1030, %v1031
      %v1033 = vrot.slane %v890, 5
      %v1034 = vrot.slane %v1033, 4
      %v1035 = vrot.slane %v891, 5
      %v1036 = vsel %vm955, %v1034, %v1035
      %v1037 = vrot.slane %v1035, 4
      %v1038 = vrot.slane %v892, 5
      %v1039 = vsel %vm955, %v1037, %v1038
      %v1040 = vrot.slane %v893, 5
      %v1041 = vrot.slane %v1040, 4
      %v1042 = vrot.slane %v894, 5
      %v1043 = vsel %vm955, %v1041, %v1042
      %v1044 = vrot.slane %v1042, 4
      %v1045 = vrot.slane %v895, 5
      %v1046 = vsel %vm955, %v1044, %v1045
      %v1047 = vrot.slane %v896, 5
      %v1048 = vrot.slane %v1047, 4
      %v1049 = vrot.slane %v897, 5
      %v1050 = vsel %vm955, %v1048, %v1049
      %v1051 = vrot.slane %v1049, 4
      %v1052 = vrot.slane %v898, 5
      %v1053 = vsel %vm955, %v1051, %v1052
      %v1054 = vrot.slane %v899, 5
      %v1055 = vrot.slane %v1054, 4
      %v1056 = vrot.slane %v900, 5
      %v1057 = vsel %vm955, %v1055, %v1056
      %v1058 = vrot.slane %v1056, 4
      %v1059 = vrot.slane %v901, 5
      %v1060 = vsel %vm955, %v1058, %v1059
      %v1061 = vrot.slane %v902, 5
      %v1062 = vrot.slane %v1061, 4
      %v1063 = vrot.slane %v903, 5
      %v1064 = vsel %vm955, %v1062, %v1063
      %v1065 = vrot.slane %v1063, 4
      %v1066 = vrot.slane %v904, 5
      %v1067 = vsel %vm955, %v1065, %v1066
      %1068 = vrot.lane.b32.xlu0 %v959, 8
      %v1069 = vpop.permute.xlu0 %1068
      %1070 = vrot.lane.b32.xlu0 %v962, 8
      %v1071 = vpop.permute.xlu0 %1070
      %1072 = vrot.lane.b32.xlu0 %v966, 8
      %v1073 = vpop.permute.xlu0 %1072
      %1074 = vrot.lane.b32.xlu0 %v969, 8
      %v1075 = vpop.permute.xlu0 %1074
      %1076 = vrot.lane.b32.xlu0 %v973, 8
      %v1077 = vpop.permute.xlu0 %1076
      %1078 = vrot.lane.b32.xlu0 %v976, 8
      %v1079 = vpop.permute.xlu0 %1078
      %1080 = vrot.lane.b32.xlu0 %v980, 8
      %v1081 = vpop.permute.xlu0 %1080
      %1082 = vrot.lane.b32.xlu0 %v983, 8
      %v1083 = vpop.permute.xlu0 %1082
      %1084 = vrot.lane.b32.xlu0 %v987, 8
      %v1085 = vpop.permute.xlu0 %1084
      %1086 = vrot.lane.b32.xlu0 %v990, 8
      %v1087 = vpop.permute.xlu0 %1086
      %1088 = vrot.lane.b32.xlu0 %v994, 8
      %v1089 = vpop.permute.xlu0 %1088
      %1090 = vrot.lane.b32.xlu0 %v997, 8
      %v1091 = vpop.permute.xlu0 %1090
      %1092 = vrot.lane.b32.xlu0 %v1001, 8
      %v1093 = vpop.permute.xlu0 %1092
      %1094 = vrot.lane.b32.xlu0 %v1004, 8
      %v1095 = vpop.permute.xlu0 %1094
      %1096 = vrot.lane.b32.xlu0 %v1008, 8
      %v1097 = vpop.permute.xlu0 %1096
      %1098 = vrot.lane.b32.xlu0 %v1011, 8
      %v1099 = vpop.permute.xlu0 %1098
      %1100 = vrot.lane.b32.xlu0 %v1015, 8
      %v1101 = vpop.permute.xlu0 %1100
      %1102 = vrot.lane.b32.xlu0 %v1018, 8
      %v1103 = vpop.permute.xlu0 %1102
      %1104 = vrot.lane.b32.xlu0 %v1022, 8
      %v1105 = vpop.permute.xlu0 %1104
      %1106 = vrot.lane.b32.xlu0 %v1025, 8
      %v1107 = vpop.permute.xlu0 %1106
      %1108 = vrot.lane.b32.xlu0 %v1029, 8
      %v1109 = vpop.permute.xlu0 %1108
      %1110 = vrot.lane.b32.xlu0 %v1032, 8
      %v1111 = vpop.permute.xlu0 %1110
      %1112 = vrot.lane.b32.xlu0 %v1036, 8
      %v1113 = vpop.permute.xlu0 %1112
      %1114 = vrot.lane.b32.xlu0 %v1039, 8
      %v1115 = vpop.permute.xlu0 %1114
      %1116 = vrot.lane.b32.xlu0 %v1043, 8
      %v1117 = vpop.permute.xlu0 %1116
      %1118 = vrot.lane.b32.xlu0 %v1046, 8
      %v1119 = vpop.permute.xlu0 %1118
      %1120 = vrot.lane.b32.xlu0 %v1050, 8
      %v1121 = vpop.permute.xlu0 %1120
      %1122 = vrot.lane.b32.xlu0 %v1053, 8
      %v1123 = vpop.permute.xlu0 %1122
      %1124 = vrot.lane.b32.xlu0 %v1057, 8
      %v1125 = vpop.permute.xlu0 %1124
      %1126 = vrot.lane.b32.xlu0 %v1060, 8
      %v1127 = vpop.permute.xlu0 %1126
      %1128 = vrot.lane.b32.xlu0 %v1064, 8
      %v1129 = vpop.permute.xlu0 %1128
      %1130 = vrot.lane.b32.xlu0 %v1067, 8
      %v1131 = vpop.permute.xlu0 %1130
      %vm1164 = vcmask 93248
      %1165 = vst.msk [vmem:[#allocation2] sm:$0xf] %vm1164, %v1069
      %1166 = vst.msk [vmem:[#allocation2 + $0x4] sm:$0xf] %vm1164, %v1071
      %1167 = vst.msk [vmem:[#allocation2 + $0x8] sm:$0xf] %vm1164, %v1073
      %1168 = vst.msk [vmem:[#allocation2 + $0xc] sm:$0xf] %vm1164, %v1075
      %1169 = vst.msk [vmem:[#allocation2 + $0x10] sm:$0xf] %vm1164, %v1077
      %1170 = vst.msk [vmem:[#allocation2 + $0x14] sm:$0xf] %vm1164, %v1079
      %1171 = vst.msk [vmem:[#allocation2 + $0x18] sm:$0xf] %vm1164, %v1081
      %1172 = vst.msk [vmem:[#allocation2 + $0x1c] sm:$0xf] %vm1164, %v1083
      %1173 = vst.msk [vmem:[#allocation2 + $0x20] sm:$0xf] %vm1164, %v1085
      %1174 = vst.msk [vmem:[#allocation2 + $0x24] sm:$0xf] %vm1164, %v1087
      %1175 = vst.msk [vmem:[#allocation2 + $0x28] sm:$0xf] %vm1164, %v1089
      %1176 = vst.msk [vmem:[#allocation2 + $0x2c] sm:$0xf] %vm1164, %v1091
      %1177 = vst.msk [vmem:[#allocation2 + $0x30] sm:$0xf] %vm1164, %v1093
      %1178 = vst.msk [vmem:[#allocation2 + $0x34] sm:$0xf] %vm1164, %v1095
      %1179 = vst.msk [vmem:[#allocation2 + $0x38] sm:$0xf] %vm1164, %v1097
      %1180 = vst.msk [vmem:[#allocation2 + $0x3c] sm:$0xf] %vm1164, %v1099
      %1181 = vst.msk [vmem:[#allocation2 + $0x40] sm:$0xf] %vm1164, %v1101
      %1182 = vst.msk [vmem:[#allocation2 + $0x44] sm:$0xf] %vm1164, %v1103
      %1183 = vst.msk [vmem:[#allocation2 + $0x48] sm:$0xf] %vm1164, %v1105
      %1184 = vst.msk [vmem:[#allocation2 + $0x4c] sm:$0xf] %vm1164, %v1107
      %1185 = vst.msk [vmem:[#allocation2 + $0x50] sm:$0xf] %vm1164, %v1109
      %1186 = vst.msk [vmem:[#allocation2 + $0x54] sm:$0xf] %vm1164, %v1111
      %1187 = vst.msk [vmem:[#allocation2 + $0x58] sm:$0xf] %vm1164, %v1113
      %1188 = vst.msk [vmem:[#allocation2 + $0x5c] sm:$0xf] %vm1164, %v1115
      %1189 = vst.msk [vmem:[#allocation2 + $0x60] sm:$0xf] %vm1164, %v1117
      %1190 = vst.msk [vmem:[#allocation2 + $0x64] sm:$0xf] %vm1164, %v1119
      %1191 = vst.msk [vmem:[#allocation2 + $0x68] sm:$0xf] %vm1164, %v1121
      %1192 = vst.msk [vmem:[#allocation2 + $0x6c] sm:$0xf] %vm1164, %v1123
      %1193 = vst.msk [vmem:[#allocation2 + $0x70] sm:$0xf] %vm1164, %v1125
      %1194 = vst.msk [vmem:[#allocation2 + $0x74] sm:$0xf] %vm1164, %v1127
      %1195 = vst.msk [vmem:[#allocation2 + $0x78] sm:$0xf] %vm1164, %v1129
      %1196 = vst.msk [vmem:[#allocation2 + $0x7c] sm:$0xf] %vm1164, %v1131
      %s1197 = sadd.s32 %s222, 1
      %s1198 = smul.u32 %s1197, 3
      %s1199 = smul.addr %s1198, 4
      %s1200 = scalar_lea.vmem %s210, %s1199
      %v1201 = vld [vmem:[%s1200] sm:$0xf]
      %v1202 = vld [vmem:[%s1200 + $0x4] sm:$0xf]
      %v1203 = vld [vmem:[%s1200 + $0xc] sm:$0xf]
      %v1204 = vld [vmem:[%s1200 + $0x10] sm:$0xf]
      %v1205 = vld [vmem:[%s1200 + $0x18] sm:$0xf]
      %v1206 = vld [vmem:[%s1200 + $0x1c] sm:$0xf]
      %v1207 = vld [vmem:[%s1200 + $0x24] sm:$0xf]
      %v1208 = vld [vmem:[%s1200 + $0x28] sm:$0xf]
      %v1209 = vld [vmem:[%s1200 + $0x30] sm:$0xf]
      %v1210 = vld [vmem:[%s1200 + $0x34] sm:$0xf]
      %v1211 = vld [vmem:[%s1200 + $0x3c] sm:$0xf]
      %v1212 = vld [vmem:[%s1200 + $0x40] sm:$0xf]
      %v1213 = vld [vmem:[%s1200 + $0x48] sm:$0xf]
      %v1214 = vld [vmem:[%s1200 + $0x4c] sm:$0xf]
      %v1215 = vld [vmem:[%s1200 + $0x54] sm:$0xf]
      %v1216 = vld [vmem:[%s1200 + $0x58] sm:$0xf]
      %v1217 = vld [vmem:[%s1200 + $0x60] sm:$0xf]
      %v1218 = vld [vmem:[%s1200 + $0x64] sm:$0xf]
      %v1219 = vld [vmem:[%s1200 + $0x6c] sm:$0xf]
      %v1220 = vld [vmem:[%s1200 + $0x70] sm:$0xf]
      %v1221 = vld [vmem:[%s1200 + $0x78] sm:$0xf]
      %v1222 = vld [vmem:[%s1200 + $0x7c] sm:$0xf]
      %v1223 = vld [vmem:[%s1200 + $0x84] sm:$0xf]
      %v1224 = vld [vmem:[%s1200 + $0x88] sm:$0xf]
      %v1225 = vld [vmem:[%s1200 + $0x90] sm:$0xf]
      %v1226 = vld [vmem:[%s1200 + $0x94] sm:$0xf]
      %v1227 = vld [vmem:[%s1200 + $0x9c] sm:$0xf]
      %v1228 = vld [vmem:[%s1200 + $0xa0] sm:$0xf]
      %v1229 = vld [vmem:[%s1200 + $0xa8] sm:$0xf]
      %v1230 = vld [vmem:[%s1200 + $0xac] sm:$0xf]
      %v1231 = vld [vmem:[%s1200 + $0xb4] sm:$0xf]
      %v1232 = vld [vmem:[%s1200 + $0xb8] sm:$0xf]
      %1265 = vrot.lane.b32.xlu0 %v1201, 12
      %v1266 = vpop.permute.xlu0 %1265
      %1267 = vrot.lane.b32.xlu0 %v1202, 12
      %v1268 = vpop.permute.xlu0 %1267
      %1269 = vrot.lane.b32.xlu0 %v1203, 12
      %v1270 = vpop.permute.xlu0 %1269
      %1271 = vrot.lane.b32.xlu0 %v1204, 12
      %v1272 = vpop.permute.xlu0 %1271
      %1273 = vrot.lane.b32.xlu0 %v1205, 12
      %v1274 = vpop.permute.xlu0 %1273
      %1275 = vrot.lane.b32.xlu0 %v1206, 12
      %v1276 = vpop.permute.xlu0 %1275
      %1277 = vrot.lane.b32.xlu0 %v1207, 12
      %v1278 = vpop.permute.xlu0 %1277
      %1279 = vrot.lane.b32.xlu0 %v1208, 12
      %v1280 = vpop.permute.xlu0 %1279
      %1281 = vrot.lane.b32.xlu0 %v1209, 12
      %v1282 = vpop.permute.xlu0 %1281
      %1283 = vrot.lane.b32.xlu0 %v1210, 12
      %v1284 = vpop.permute.xlu0 %1283
      %1285 = vrot.lane.b32.xlu0 %v1211, 12
      %v1286 = vpop.permute.xlu0 %1285
      %1287 = vrot.lane.b32.xlu0 %v1212, 12
      %v1288 = vpop.permute.xlu0 %1287
      %1289 = vrot.lane.b32.xlu0 %v1213, 12
      %v1290 = vpop.permute.xlu0 %1289
      %1291 = vrot.lane.b32.xlu0 %v1214, 12
      %v1292 = vpop.permute.xlu0 %1291
      %1293 = vrot.lane.b32.xlu0 %v1215, 12
      %v1294 = vpop.permute.xlu0 %1293
      %1295 = vrot.lane.b32.xlu0 %v1216, 12
      %v1296 = vpop.permute.xlu0 %1295
      %1297 = vrot.lane.b32.xlu0 %v1217, 12
      %v1298 = vpop.permute.xlu0 %1297
      %1299 = vrot.lane.b32.xlu0 %v1218, 12
      %v1300 = vpop.permute.xlu0 %1299
      %1301 = vrot.lane.b32.xlu0 %v1219, 12
      %v1302 = vpop.permute.xlu0 %1301
      %1303 = vrot.lane.b32.xlu0 %v1220, 12
      %v1304 = vpop.permute.xlu0 %1303
      %1305 = vrot.lane.b32.xlu0 %v1221, 12
      %v1306 = vpop.permute.xlu0 %1305
      %1307 = vrot.lane.b32.xlu0 %v1222, 12
      %v1308 = vpop.permute.xlu0 %1307
      %1309 = vrot.lane.b32.xlu0 %v1223, 12
      %v1310 = vpop.permute.xlu0 %1309
      %1311 = vrot.lane.b32.xlu0 %v1224, 12
      %v1312 = vpop.permute.xlu0 %1311
      %1313 = vrot.lane.b32.xlu0 %v1225, 12
      %v1314 = vpop.permute.xlu0 %1313
      %1315 = vrot.lane.b32.xlu0 %v1226, 12
      %v1316 = vpop.permute.xlu0 %1315
      %1317 = vrot.lane.b32.xlu0 %v1227, 12
      %v1318 = vpop.permute.xlu0 %1317
      %1319 = vrot.lane.b32.xlu0 %v1228, 12
      %v1320 = vpop.permute.xlu0 %1319
      %1321 = vrot.lane.b32.xlu0 %v1229, 12
      %v1322 = vpop.permute.xlu0 %1321
      %1323 = vrot.lane.b32.xlu0 %v1230, 12
      %v1324 = vpop.permute.xlu0 %1323
      %1325 = vrot.lane.b32.xlu0 %v1231, 12
      %v1326 = vpop.permute.xlu0 %1325
      %1327 = vrot.lane.b32.xlu0 %v1232, 12
      %v1328 = vpop.permute.xlu0 %1327
      %vm1361 = vcmask 126048
      %1362 = vst.msk [vmem:[#allocation2] sm:$0xf] %vm1361, %v1266
      %1363 = vst.msk [vmem:[#allocation2 + $0x4] sm:$0xf] %vm1361, %v1268
      %1364 = vst.msk [vmem:[#allocation2 + $0x8] sm:$0xf] %vm1361, %v1270
      %1365 = vst.msk [vmem:[#allocation2 + $0xc] sm:$0xf] %vm1361, %v1272
      %1366 = vst.msk [vmem:[#allocation2 + $0x10] sm:$0xf] %vm1361, %v1274
      %1367 = vst.msk [vmem:[#allocation2 + $0x14] sm:$0xf] %vm1361, %v1276
      %1368 = vst.msk [vmem:[#allocation2 + $0x18] sm:$0xf] %vm1361, %v1278
      %1369 = vst.msk [vmem:[#allocation2 + $0x1c] sm:$0xf] %vm1361, %v1280
      %1370 = vst.msk [vmem:[#allocation2 + $0x20] sm:$0xf] %vm1361, %v1282
      %1371 = vst.msk [vmem:[#allocation2 + $0x24] sm:$0xf] %vm1361, %v1284
      %1372 = vst.msk [vmem:[#allocation2 + $0x28] sm:$0xf] %vm1361, %v1286
      %1373 = vst.msk [vmem:[#allocation2 + $0x2c] sm:$0xf] %vm1361, %v1288
      %1374 = vst.msk [vmem:[#allocation2 + $0x30] sm:$0xf] %vm1361, %v1290
      %1375 = vst.msk [vmem:[#allocation2 + $0x34] sm:$0xf] %vm1361, %v1292
      %1376 = vst.msk [vmem:[#allocation2 + $0x38] sm:$0xf] %vm1361, %v1294
      %1377 = vst.msk [vmem:[#allocation2 + $0x3c] sm:$0xf] %vm1361, %v1296
      %1378 = vst.msk [vmem:[#allocation2 + $0x40] sm:$0xf] %vm1361, %v1298
      %1379 = vst.msk [vmem:[#allocation2 + $0x44] sm:$0xf] %vm1361, %v1300
      %1380 = vst.msk [vmem:[#allocation2 + $0x48] sm:$0xf] %vm1361, %v1302
      %1381 = vst.msk [vmem:[#allocation2 + $0x4c] sm:$0xf] %vm1361, %v1304
      %1382 = vst.msk [vmem:[#allocation2 + $0x50] sm:$0xf] %vm1361, %v1306
      %1383 = vst.msk [vmem:[#allocation2 + $0x54] sm:$0xf] %vm1361, %v1308
      %1384 = vst.msk [vmem:[#allocation2 + $0x58] sm:$0xf] %vm1361, %v1310
      %1385 = vst.msk [vmem:[#allocation2 + $0x5c] sm:$0xf] %vm1361, %v1312
      %1386 = vst.msk [vmem:[#allocation2 + $0x60] sm:$0xf] %vm1361, %v1314
      %1387 = vst.msk [vmem:[#allocation2 + $0x64] sm:$0xf] %vm1361, %v1316
      %1388 = vst.msk [vmem:[#allocation2 + $0x68] sm:$0xf] %vm1361, %v1318
      %1389 = vst.msk [vmem:[#allocation2 + $0x6c] sm:$0xf] %vm1361, %v1320
      %1390 = vst.msk [vmem:[#allocation2 + $0x70] sm:$0xf] %vm1361, %v1322
      %1391 = vst.msk [vmem:[#allocation2 + $0x74] sm:$0xf] %vm1361, %v1324
      %1392 = vst.msk [vmem:[#allocation2 + $0x78] sm:$0xf] %vm1361, %v1326
      %1393 = vst.msk [vmem:[#allocation2 + $0x7c] sm:$0xf] %vm1361, %v1328
      %v1394 = vld [vmem:[%s1200] sm:$0xf]
      %v1395 = vld [vmem:[%s1200 + $0x4] sm:$0xf]
      %v1396 = vld [vmem:[%s1200 + $0x8] sm:$0x1]
      %v1397 = vld [vmem:[%s1200 + $0xc] sm:$0xf]
      %v1398 = vld [vmem:[%s1200 + $0x10] sm:$0xf]
      %v1399 = vld [vmem:[%s1200 + $0x14] sm:$0x1]
      %v1400 = vld [vmem:[%s1200 + $0x18] sm:$0xf]
      %v1401 = vld [vmem:[%s1200 + $0x1c] sm:$0xf]
      %v1402 = vld [vmem:[%s1200 + $0x20] sm:$0x1]
      %v1403 = vld [vmem:[%s1200 + $0x24] sm:$0xf]
      %v1404 = vld [vmem:[%s1200 + $0x28] sm:$0xf]
      %v1405 = vld [vmem:[%s1200 + $0x2c] sm:$0x1]
      %v1406 = vld [vmem:[%s1200 + $0x30] sm:$0xf]
      %v1407 = vld [vmem:[%s1200 + $0x34] sm:$0xf]
      %v1408 = vld [vmem:[%s1200 + $0x38] sm:$0x1]
      %v1409 = vld [vmem:[%s1200 + $0x3c] sm:$0xf]
      %v1410 = vld [vmem:[%s1200 + $0x40] sm:$0xf]
      %v1411 = vld [vmem:[%s1200 + $0x44] sm:$0x1]
      %v1412 = vld [vmem:[%s1200 + $0x48] sm:$0xf]
      %v1413 = vld [vmem:[%s1200 + $0x4c] sm:$0xf]
      %v1414 = vld [vmem:[%s1200 + $0x50] sm:$0x1]
      %v1415 = vld [vmem:[%s1200 + $0x54] sm:$0xf]
      %v1416 = vld [vmem:[%s1200 + $0x58] sm:$0xf]
      %v1417 = vld [vmem:[%s1200 + $0x5c] sm:$0x1]
      %v1418 = vld [vmem:[%s1200 + $0x60] sm:$0xf]
      %v1419 = vld [vmem:[%s1200 + $0x64] sm:$0xf]
      %v1420 = vld [vmem:[%s1200 + $0x68] sm:$0x1]
      %v1421 = vld [vmem:[%s1200 + $0x6c] sm:$0xf]
      %v1422 = vld [vmem:[%s1200 + $0x70] sm:$0xf]
      %v1423 = vld [vmem:[%s1200 + $0x74] sm:$0x1]
      %v1424 = vld [vmem:[%s1200 + $0x78] sm:$0xf]
      %v1425 = vld [vmem:[%s1200 + $0x7c] sm:$0xf]
      %v1426 = vld [vmem:[%s1200 + $0x80] sm:$0x1]
      %v1427 = vld [vmem:[%s1200 + $0x84] sm:$0xf]
      %v1428 = vld [vmem:[%s1200 + $0x88] sm:$0xf]
      %v1429 = vld [vmem:[%s1200 + $0x8c] sm:$0x1]
      %v1430 = vld [vmem:[%s1200 + $0x90] sm:$0xf]
      %v1431 = vld [vmem:[%s1200 + $0x94] sm:$0xf]
      %v1432 = vld [vmem:[%s1200 + $0x98] sm:$0x1]
      %v1433 = vld [vmem:[%s1200 + $0x9c] sm:$0xf]
      %v1434 = vld [vmem:[%s1200 + $0xa0] sm:$0xf]
      %v1435 = vld [vmem:[%s1200 + $0xa4] sm:$0x1]
      %v1436 = vld [vmem:[%s1200 + $0xa8] sm:$0xf]
      %v1437 = vld [vmem:[%s1200 + $0xac] sm:$0xf]
      %v1438 = vld [vmem:[%s1200 + $0xb0] sm:$0x1]
      %v1439 = vld [vmem:[%s1200 + $0xb4] sm:$0xf]
      %v1440 = vld [vmem:[%s1200 + $0xb8] sm:$0xf]
      %v1441 = vld [vmem:[%s1200 + $0xbc] sm:$0x1]
      %v1443 = vshrl.u32 %v1394, 16
      %v1445 = vrot.slane %v1443, 4
      %v1446 = vshll.u32 %v1394, 16
      %v1448 = vrot.slane %v1446, 5
      %v1449 = vor.u32 %v1445, %v1448
      %v1450 = vrot.slane %v1449, 4
      %v1452 = vshll.u32 %v1395, 16
      %v1454 = vrot.slane %v1452, 5
      %v1455 = vsel %vm343, %v1450, %v1454
      %v1456 = vshrl.u32 %v1395, 16
      %v1458 = vrot.slane %v1456, 4
      %v1459 = vor.u32 %v1458, %v1454
      %v1460 = vrot.slane %v1459, 4
      %v1462 = vshll.u32 %v1396, 16
      %v1464 = vrot.slane %v1462, 5
      %v1465 = vsel %vm343, %v1460, %v1464
      %v1467 = vshrl.u32 %v1397, 16
      %v1469 = vrot.slane %v1467, 4
      %v1470 = vshll.u32 %v1397, 16
      %v1472 = vrot.slane %v1470, 5
      %v1473 = vor.u32 %v1469, %v1472
      %v1474 = vrot.slane %v1473, 4
      %v1476 = vshll.u32 %v1398, 16
      %v1478 = vrot.slane %v1476, 5
      %v1479 = vsel %vm343, %v1474, %v1478
      %v1480 = vshrl.u32 %v1398, 16
      %v1482 = vrot.slane %v1480, 4
      %v1483 = vor.u32 %v1482, %v1478
      %v1484 = vrot.slane %v1483, 4
      %v1486 = vshll.u32 %v1399, 16
      %v1488 = vrot.slane %v1486, 5
      %v1489 = vsel %vm343, %v1484, %v1488
      %v1491 = vshrl.u32 %v1400, 16
      %v1493 = vrot.slane %v1491, 4
      %v1494 = vshll.u32 %v1400, 16
      %v1496 = vrot.slane %v1494, 5
      %v1497 = vor.u32 %v1493, %v1496
      %v1498 = vrot.slane %v1497, 4
      %v1500 = vshll.u32 %v1401, 16
      %v1502 = vrot.slane %v1500, 5
      %v1503 = vsel %vm343, %v1498, %v1502
      %v1504 = vshrl.u32 %v1401, 16
      %v1506 = vrot.slane %v1504, 4
      %v1507 = vor.u32 %v1506, %v1502
      %v1508 = vrot.slane %v1507, 4
      %v1510 = vshll.u32 %v1402, 16
      %v1512 = vrot.slane %v1510, 5
      %v1513 = vsel %vm343, %v1508, %v1512
      %v1515 = vshrl.u32 %v1403, 16
      %v1517 = vrot.slane %v1515, 4
      %v1518 = vshll.u32 %v1403, 16
      %v1520 = vrot.slane %v1518, 5
      %v1521 = vor.u32 %v1517, %v1520
      %v1522 = vrot.slane %v1521, 4
      %v1524 = vshll.u32 %v1404, 16
      %v1526 = vrot.slane %v1524, 5
      %v1527 = vsel %vm343, %v1522, %v1526
      %v1528 = vshrl.u32 %v1404, 16
      %v1530 = vrot.slane %v1528, 4
      %v1531 = vor.u32 %v1530, %v1526
      %v1532 = vrot.slane %v1531, 4
      %v1534 = vshll.u32 %v1405, 16
      %v1536 = vrot.slane %v1534, 5
      %v1537 = vsel %vm343, %v1532, %v1536
      %v1539 = vshrl.u32 %v1406, 16
      %v1541 = vrot.slane %v1539, 4
      %v1542 = vshll.u32 %v1406, 16
      %v1544 = vrot.slane %v1542, 5
      %v1545 = vor.u32 %v1541, %v1544
      %v1546 = vrot.slane %v1545, 4
      %v1548 = vshll.u32 %v1407, 16
      %v1550 = vrot.slane %v1548, 5
      %v1551 = vsel %vm343, %v1546, %v1550
      %v1552 = vshrl.u32 %v1407, 16
      %v1554 = vrot.slane %v1552, 4
      %v1555 = vor.u32 %v1554, %v1550
      %v1556 = vrot.slane %v1555, 4
      %v1558 = vshll.u32 %v1408, 16
      %v1560 = vrot.slane %v1558, 5
      %v1561 = vsel %vm343, %v1556, %v1560
      %v1563 = vshrl.u32 %v1409, 16
      %v1565 = vrot.slane %v1563, 4
      %v1566 = vshll.u32 %v1409, 16
      %v1568 = vrot.slane %v1566, 5
      %v1569 = vor.u32 %v1565, %v1568
      %v1570 = vrot.slane %v1569, 4
      %v1572 = vshll.u32 %v1410, 16
      %v1574 = vrot.slane %v1572, 5
      %v1575 = vsel %vm343, %v1570, %v1574
      %v1576 = vshrl.u32 %v1410, 16
      %v1578 = vrot.slane %v1576, 4
      %v1579 = vor.u32 %v1578, %v1574
      %v1580 = vrot.slane %v1579, 4
      %v1582 = vshll.u32 %v1411, 16
      %v1584 = vrot.slane %v1582, 5
      %v1585 = vsel %vm343, %v1580, %v1584
      %v1587 = vshrl.u32 %v1412, 16
      %v1589 = vrot.slane %v1587, 4
      %v1590 = vshll.u32 %v1412, 16
      %v1592 = vrot.slane %v1590, 5
      %v1593 = vor.u32 %v1589, %v1592
      %v1594 = vrot.slane %v1593, 4
      %v1596 = vshll.u32 %v1413, 16
      %v1598 = vrot.slane %v1596, 5
      %v1599 = vsel %vm343, %v1594, %v1598
      %v1600 = vshrl.u32 %v1413, 16
      %v1602 = vrot.slane %v1600, 4
      %v1603 = vor.u32 %v1602, %v1598
      %v1604 = vrot.slane %v1603, 4
      %v1606 = vshll.u32 %v1414, 16
      %v1608 = vrot.slane %v1606, 5
      %v1609 = vsel %vm343, %v1604, %v1608
      %v1611 = vshrl.u32 %v1415, 16
      %v1613 = vrot.slane %v1611, 4
      %v1614 = vshll.u32 %v1415, 16
      %v1616 = vrot.slane %v1614, 5
      %v1617 = vor.u32 %v1613, %v1616
      %v1618 = vrot.slane %v1617, 4
      %v1620 = vshll.u32 %v1416, 16
      %v1622 = vrot.slane %v1620, 5
      %v1623 = vsel %vm343, %v1618, %v1622
      %v1624 = vshrl.u32 %v1416, 16
      %v1626 = vrot.slane %v1624, 4
      %v1627 = vor.u32 %v1626, %v1622
      %v1628 = vrot.slane %v1627, 4
      %v1630 = vshll.u32 %v1417, 16
      %v1632 = vrot.slane %v1630, 5
      %v1633 = vsel %vm343, %v1628, %v1632
      %v1635 = vshrl.u32 %v1418, 16
      %v1637 = vrot.slane %v1635, 4
      %v1638 = vshll.u32 %v1418, 16
      %v1640 = vrot.slane %v1638, 5
      %v1641 = vor.u32 %v1637, %v1640
      %v1642 = vrot.slane %v1641, 4
      %v1644 = vshll.u32 %v1419, 16
      %v1646 = vrot.slane %v1644, 5
      %v1647 = vsel %vm343, %v1642, %v1646
      %v1648 = vshrl.u32 %v1419, 16
      %v1650 = vrot.slane %v1648, 4
      %v1651 = vor.u32 %v1650, %v1646
      %v1652 = vrot.slane %v1651, 4
      %v1654 = vshll.u32 %v1420, 16
      %v1656 = vrot.slane %v1654, 5
      %v1657 = vsel %vm343, %v1652, %v1656
      %v1659 = vshrl.u32 %v1421, 16
      %v1661 = vrot.slane %v1659, 4
      %v1662 = vshll.u32 %v1421, 16
      %v1664 = vrot.slane %v1662, 5
      %v1665 = vor.u32 %v1661, %v1664
      %v1666 = vrot.slane %v1665, 4
      %v1668 = vshll.u32 %v1422, 16
      %v1670 = vrot.slane %v1668, 5
      %v1671 = vsel %vm343, %v1666, %v1670
      %v1672 = vshrl.u32 %v1422, 16
      %v1674 = vrot.slane %v1672, 4
      %v1675 = vor.u32 %v1674, %v1670
      %v1676 = vrot.slane %v1675, 4
      %v1678 = vshll.u32 %v1423, 16
      %v1680 = vrot.slane %v1678, 5
      %v1681 = vsel %vm343, %v1676, %v1680
      %v1683 = vshrl.u32 %v1424, 16
      %v1685 = vrot.slane %v1683, 4
      %v1686 = vshll.u32 %v1424, 16
      %v1688 = vrot.slane %v1686, 5
      %v1689 = vor.u32 %v1685, %v1688
      %v1690 = vrot.slane %v1689, 4
      %v1692 = vshll.u32 %v1425, 16
      %v1694 = vrot.slane %v1692, 5
      %v1695 = vsel %vm343, %v1690, %v1694
      %v1696 = vshrl.u32 %v1425, 16
      %v1698 = vrot.slane %v1696, 4
      %v1699 = vor.u32 %v1698, %v1694
      %v1700 = vrot.slane %v1699, 4
      %v1702 = vshll.u32 %v1426, 16
      %v1704 = vrot.slane %v1702, 5
      %v1705 = vsel %vm343, %v1700, %v1704
      %v1707 = vshrl.u32 %v1427, 16
      %v1709 = vrot.slane %v1707, 4
      %v1710 = vshll.u32 %v1427, 16
      %v1712 = vrot.slane %v1710, 5
      %v1713 = vor.u32 %v1709, %v1712
      %v1714 = vrot.slane %v1713, 4
      %v1716 = vshll.u32 %v1428, 16
      %v1718 = vrot.slane %v1716, 5
      %v1719 = vsel %vm343, %v1714, %v1718
      %v1720 = vshrl.u32 %v1428, 16
      %v1722 = vrot.slane %v1720, 4
      %v1723 = vor.u32 %v1722, %v1718
      %v1724 = vrot.slane %v1723, 4
      %v1726 = vshll.u32 %v1429, 16
      %v1728 = vrot.slane %v1726, 5
      %v1729 = vsel %vm343, %v1724, %v1728
      %v1731 = vshrl.u32 %v1430, 16
      %v1733 = vrot.slane %v1731, 4
      %v1734 = vshll.u32 %v1430, 16
      %v1736 = vrot.slane %v1734, 5
      %v1737 = vor.u32 %v1733, %v1736
      %v1738 = vrot.slane %v1737, 4
      %v1740 = vshll.u32 %v1431, 16
      %v1742 = vrot.slane %v1740, 5
      %v1743 = vsel %vm343, %v1738, %v1742
      %v1744 = vshrl.u32 %v1431, 16
      %v1746 = vrot.slane %v1744, 4
      %v1747 = vor.u32 %v1746, %v1742
      %v1748 = vrot.slane %v1747, 4
      %v1750 = vshll.u32 %v1432, 16
      %v1752 = vrot.slane %v1750, 5
      %v1753 = vsel %vm343, %v1748, %v1752
      %v1755 = vshrl.u32 %v1433, 16
      %v1757 = vrot.slane %v1755, 4
      %v1758 = vshll.u32 %v1433, 16
      %v1760 = vrot.slane %v1758, 5
      %v1761 = vor.u32 %v1757, %v1760
      %v1762 = vrot.slane %v1761, 4
      %v1764 = vshll.u32 %v1434, 16
      %v1766 = vrot.slane %v1764, 5
      %v1767 = vsel %vm343, %v1762, %v1766
      %v1768 = vshrl.u32 %v1434, 16
      %v1770 = vrot.slane %v1768, 4
      %v1771 = vor.u32 %v1770, %v1766
      %v1772 = vrot.slane %v1771, 4
      %v1774 = vshll.u32 %v1435, 16
      %v1776 = vrot.slane %v1774, 5
      %v1777 = vsel %vm343, %v1772, %v1776
      %v1779 = vshrl.u32 %v1436, 16
      %v1781 = vrot.slane %v1779, 4
      %v1782 = vshll.u32 %v1436, 16
      %v1784 = vrot.slane %v1782, 5
      %v1785 = vor.u32 %v1781, %v1784
      %v1786 = vrot.slane %v1785, 4
      %v1788 = vshll.u32 %v1437, 16
      %v1790 = vrot.slane %v1788, 5
      %v1791 = vsel %vm343, %v1786, %v1790
      %v1792 = vshrl.u32 %v1437, 16
      %v1794 = vrot.slane %v1792, 4
      %v1795 = vor.u32 %v1794, %v1790
      %v1796 = vrot.slane %v1795, 4
      %v1798 = vshll.u32 %v1438, 16
      %v1800 = vrot.slane %v1798, 5
      %v1801 = vsel %vm343, %v1796, %v1800
      %v1803 = vshrl.u32 %v1439, 16
      %v1805 = vrot.slane %v1803, 4
      %v1806 = vshll.u32 %v1439, 16
      %v1808 = vrot.slane %v1806, 5
      %v1809 = vor.u32 %v1805, %v1808
      %v1810 = vrot.slane %v1809, 4
      %v1812 = vshll.u32 %v1440, 16
      %v1814 = vrot.slane %v1812, 5
      %v1815 = vsel %vm343, %v1810, %v1814
      %v1816 = vshrl.u32 %v1440, 16
      %v1818 = vrot.slane %v1816, 4
      %v1819 = vor.u32 %v1818, %v1814
      %v1820 = vrot.slane %v1819, 4
      %v1822 = vshll.u32 %v1441, 16
      %v1824 = vrot.slane %v1822, 5
      %v1825 = vsel %vm343, %v1820, %v1824
      %1826 = vrot.lane.b32.xlu0 %v1455, 16
      %v1827 = vpop.permute.xlu0 %1826
      %1828 = vrot.lane.b32.xlu0 %v1465, 16
      %v1829 = vpop.permute.xlu0 %1828
      %1830 = vrot.lane.b32.xlu0 %v1479, 16
      %v1831 = vpop.permute.xlu0 %1830
      %1832 = vrot.lane.b32.xlu0 %v1489, 16
      %v1833 = vpop.permute.xlu0 %1832
      %1834 = vrot.lane.b32.xlu0 %v1503, 16
      %v1835 = vpop.permute.xlu0 %1834
      %1836 = vrot.lane.b32.xlu0 %v1513, 16
      %v1837 = vpop.permute.xlu0 %1836
      %1838 = vrot.lane.b32.xlu0 %v1527, 16
      %v1839 = vpop.permute.xlu0 %1838
      %1840 = vrot.lane.b32.xlu0 %v1537, 16
      %v1841 = vpop.permute.xlu0 %1840
      %1842 = vrot.lane.b32.xlu0 %v1551, 16
      %v1843 = vpop.permute.xlu0 %1842
      %1844 = vrot.lane.b32.xlu0 %v1561, 16
      %v1845 = vpop.permute.xlu0 %1844
      %1846 = vrot.lane.b32.xlu0 %v1575, 16
      %v1847 = vpop.permute.xlu0 %1846
      %1848 = vrot.lane.b32.xlu0 %v1585, 16
      %v1849 = vpop.permute.xlu0 %1848
      %1850 = vrot.lane.b32.xlu0 %v1599, 16
      %v1851 = vpop.permute.xlu0 %1850
      %1852 = vrot.lane.b32.xlu0 %v1609, 16
      %v1853 = vpop.permute.xlu0 %1852
      %1854 = vrot.lane.b32.xlu0 %v1623, 16
      %v1855 = vpop.permute.xlu0 %1854
      %1856 = vrot.lane.b32.xlu0 %v1633, 16
      %v1857 = vpop.permute.xlu0 %1856
      %1858 = vrot.lane.b32.xlu0 %v1647, 16
      %v1859 = vpop.permute.xlu0 %1858
      %1860 = vrot.lane.b32.xlu0 %v1657, 16
      %v1861 = vpop.permute.xlu0 %1860
      %1862 = vrot.lane.b32.xlu0 %v1671, 16
      %v1863 = vpop.permute.xlu0 %1862
      %1864 = vrot.lane.b32.xlu0 %v1681, 16
      %v1865 = vpop.permute.xlu0 %1864
      %1866 = vrot.lane.b32.xlu0 %v1695, 16
      %v1867 = vpop.permute.xlu0 %1866
      %1868 = vrot.lane.b32.xlu0 %v1705, 16
      %v1869 = vpop.permute.xlu0 %1868
      %1870 = vrot.lane.b32.xlu0 %v1719, 16
      %v1871 = vpop.permute.xlu0 %1870
      %1872 = vrot.lane.b32.xlu0 %v1729, 16
      %v1873 = vpop.permute.xlu0 %1872
      %1874 = vrot.lane.b32.xlu0 %v1743, 16
      %v1875 = vpop.permute.xlu0 %1874
      %1876 = vrot.lane.b32.xlu0 %v1753, 16
      %v1877 = vpop.permute.xlu0 %1876
      %1878 = vrot.lane.b32.xlu0 %v1767, 16
      %v1879 = vpop.permute.xlu0 %1878
      %1880 = vrot.lane.b32.xlu0 %v1777, 16
      %v1881 = vpop.permute.xlu0 %1880
      %1882 = vrot.lane.b32.xlu0 %v1791, 16
      %v1883 = vpop.permute.xlu0 %1882
      %1884 = vrot.lane.b32.xlu0 %v1801, 16
      %v1885 = vpop.permute.xlu0 %1884
      %1886 = vrot.lane.b32.xlu0 %v1815, 16
      %v1887 = vpop.permute.xlu0 %1886
      %1888 = vrot.lane.b32.xlu0 %v1825, 16
      %v1889 = vpop.permute.xlu0 %1888
      %vm1922 = vcmask 158848
      %1923 = vst.msk [vmem:[#allocation2] sm:$0xf] %vm1922, %v1827
      %1924 = vst.msk [vmem:[#allocation2 + $0x4] sm:$0xf] %vm1922, %v1829
      %1925 = vst.msk [vmem:[#allocation2 + $0x8] sm:$0xf] %vm1922, %v1831
      %1926 = vst.msk [vmem:[#allocation2 + $0xc] sm:$0xf] %vm1922, %v1833
      %1927 = vst.msk [vmem:[#allocation2 + $0x10] sm:$0xf] %vm1922, %v1835
      %1928 = vst.msk [vmem:[#allocation2 + $0x14] sm:$0xf] %vm1922, %v1837
      %1929 = vst.msk [vmem:[#allocation2 + $0x18] sm:$0xf] %vm1922, %v1839
      %1930 = vst.msk [vmem:[#allocation2 + $0x1c] sm:$0xf] %vm1922, %v1841
      %1931 = vst.msk [vmem:[#allocation2 + $0x20] sm:$0xf] %vm1922, %v1843
      %1932 = vst.msk [vmem:[#allocation2 + $0x24] sm:$0xf] %vm1922, %v1845
      %1933 = vst.msk [vmem:[#allocation2 + $0x28] sm:$0xf] %vm1922, %v1847
      %1934 = vst.msk [vmem:[#allocation2 + $0x2c] sm:$0xf] %vm1922, %v1849
      %1935 = vst.msk [vmem:[#allocation2 + $0x30] sm:$0xf] %vm1922, %v1851
      %1936 = vst.msk [vmem:[#allocation2 + $0x34] sm:$0xf] %vm1922, %v1853
      %1937 = vst.msk [vmem:[#allocation2 + $0x38] sm:$0xf] %vm1922, %v1855
      %1938 = vst.msk [vmem:[#allocation2 + $0x3c] sm:$0xf] %vm1922, %v1857
      %1939 = vst.msk [vmem:[#allocation2 + $0x40] sm:$0xf] %vm1922, %v1859
      %1940 = vst.msk [vmem:[#allocation2 + $0x44] sm:$0xf] %vm1922, %v1861
      %1941 = vst.msk [vmem:[#allocation2 + $0x48] sm:$0xf] %vm1922, %v1863
      %1942 = vst.msk [vmem:[#allocation2 + $0x4c] sm:$0xf] %vm1922, %v1865
      %1943 = vst.msk [vmem:[#allocation2 + $0x50] sm:$0xf] %vm1922, %v1867
      %1944 = vst.msk [vmem:[#allocation2 + $0x54] sm:$0xf] %vm1922, %v1869
      %1945 = vst.msk [vmem:[#allocation2 + $0x58] sm:$0xf] %vm1922, %v1871
      %1946 = vst.msk [vmem:[#allocation2 + $0x5c] sm:$0xf] %vm1922, %v1873
      %1947 = vst.msk [vmem:[#allocation2 + $0x60] sm:$0xf] %vm1922, %v1875
      %1948 = vst.msk [vmem:[#allocation2 + $0x64] sm:$0xf] %vm1922, %v1877
      %1949 = vst.msk [vmem:[#allocation2 + $0x68] sm:$0xf] %vm1922, %v1879
      %1950 = vst.msk [vmem:[#allocation2 + $0x6c] sm:$0xf] %vm1922, %v1881
      %1951 = vst.msk [vmem:[#allocation2 + $0x70] sm:$0xf] %vm1922, %v1883
      %1952 = vst.msk [vmem:[#allocation2 + $0x74] sm:$0xf] %vm1922, %v1885
      %1953 = vst.msk [vmem:[#allocation2 + $0x78] sm:$0xf] %vm1922, %v1887
      %1954 = vst.msk [vmem:[#allocation2 + $0x7c] sm:$0xf] %vm1922, %v1889
      %v1955 = vld [vmem:[%s1200] sm:$0xe]
      %v1956 = vld [vmem:[%s1200 + $0x4] sm:$0xf]
      %v1957 = vld [vmem:[%s1200 + $0x8] sm:$0x1]
      %v1958 = vld [vmem:[%s1200 + $0xc] sm:$0xe]
      %v1959 = vld [vmem:[%s1200 + $0x10] sm:$0xf]
      %v1960 = vld [vmem:[%s1200 + $0x14] sm:$0x1]
      %v1961 = vld [vmem:[%s1200 + $0x18] sm:$0xe]
      %v1962 = vld [vmem:[%s1200 + $0x1c] sm:$0xf]
      %v1963 = vld [vmem:[%s1200 + $0x20] sm:$0x1]
      %v1964 = vld [vmem:[%s1200 + $0x24] sm:$0xe]
      %v1965 = vld [vmem:[%s1200 + $0x28] sm:$0xf]
      %v1966 = vld [vmem:[%s1200 + $0x2c] sm:$0x1]
      %v1967 = vld [vmem:[%s1200 + $0x30] sm:$0xe]
      %v1968 = vld [vmem:[%s1200 + $0x34] sm:$0xf]
      %v1969 = vld [vmem:[%s1200 + $0x38] sm:$0x1]
      %v1970 = vld [vmem:[%s1200 + $0x3c] sm:$0xe]
      %v1971 = vld [vmem:[%s1200 + $0x40] sm:$0xf]
      %v1972 = vld [vmem:[%s1200 + $0x44] sm:$0x1]
      %v1973 = vld [vmem:[%s1200 + $0x48] sm:$0xe]
      %v1974 = vld [vmem:[%s1200 + $0x4c] sm:$0xf]
      %v1975 = vld [vmem:[%s1200 + $0x50] sm:$0x1]
      %v1976 = vld [vmem:[%s1200 + $0x54] sm:$0xe]
      %v1977 = vld [vmem:[%s1200 + $0x58] sm:$0xf]
      %v1978 = vld [vmem:[%s1200 + $0x5c] sm:$0x1]
      %v1979 = vld [vmem:[%s1200 + $0x60] sm:$0xe]
      %v1980 = vld [vmem:[%s1200 + $0x64] sm:$0xf]
      %v1981 = vld [vmem:[%s1200 + $0x68] sm:$0x1]
      %v1982 = vld [vmem:[%s1200 + $0x6c] sm:$0xe]
      %v1983 = vld [vmem:[%s1200 + $0x70] sm:$0xf]
      %v1984 = vld [vmem:[%s1200 + $0x74] sm:$0x1]
      %v1985 = vld [vmem:[%s1200 + $0x78] sm:$0xe]
      %v1986 = vld [vmem:[%s1200 + $0x7c] sm:$0xf]
      %v1987 = vld [vmem:[%s1200 + $0x80] sm:$0x1]
      %v1988 = vld [vmem:[%s1200 + $0x84] sm:$0xe]
      %v1989 = vld [vmem:[%s1200 + $0x88] sm:$0xf]
      %v1990 = vld [vmem:[%s1200 + $0x8c] sm:$0x1]
      %v1991 = vld [vmem:[%s1200 + $0x90] sm:$0xe]
      %v1992 = vld [vmem:[%s1200 + $0x94] sm:$0xf]
      %v1993 = vld [vmem:[%s1200 + $0x98] sm:$0x1]
      %v1994 = vld [vmem:[%s1200 + $0x9c] sm:$0xe]
      %v1995 = vld [vmem:[%s1200 + $0xa0] sm:$0xf]
      %v1996 = vld [vmem:[%s1200 + $0xa4] sm:$0x1]
      %v1997 = vld [vmem:[%s1200 + $0xa8] sm:$0xe]
      %v1998 = vld [vmem:[%s1200 + $0xac] sm:$0xf]
      %v1999 = vld [vmem:[%s1200 + $0xb0] sm:$0x1]
      %v2000 = vld [vmem:[%s1200 + $0xb4] sm:$0xe]
      %v2001 = vld [vmem:[%s1200 + $0xb8] sm:$0xf]
      %v2002 = vld [vmem:[%s1200 + $0xbc] sm:$0x1]
      %v2051 = vrot.slane %v1955, 5
      %v2052 = vrot.slane %v2051, 4
      %v2053 = vrot.slane %v1956, 5
      %v2054 = vsel %vm955, %v2052, %v2053
      %v2055 = vrot.slane %v2053, 4
      %v2056 = vrot.slane %v1957, 5
      %v2057 = vsel %vm955, %v2055, %v2056
      %v2058 = vrot.slane %v1958, 5
      %v2059 = vrot.slane %v2058, 4
      %v2060 = vrot.slane %v1959, 5
      %v2061 = vsel %vm955, %v2059, %v2060
      %v2062 = vrot.slane %v2060, 4
      %v2063 = vrot.slane %v1960, 5
      %v2064 = vsel %vm955, %v2062, %v2063
      %v2065 = vrot.slane %v1961, 5
      %v2066 = vrot.slane %v2065, 4
      %v2067 = vrot.slane %v1962, 5
      %v2068 = vsel %vm955, %v2066, %v2067
      %v2069 = vrot.slane %v2067, 4
      %v2070 = vrot.slane %v1963, 5
      %v2071 = vsel %vm955, %v2069, %v2070
      %v2072 = vrot.slane %v1964, 5
      %v2073 = vrot.slane %v2072, 4
      %v2074 = vrot.slane %v1965, 5
      %v2075 = vsel %vm955, %v2073, %v2074
      %v2076 = vrot.slane %v2074, 4
      %v2077 = vrot.slane %v1966, 5
      %v2078 = vsel %vm955, %v2076, %v2077
      %v2079 = vrot.slane %v1967, 5
      %v2080 = vrot.slane %v2079, 4
      %v2081 = vrot.slane %v1968, 5
      %v2082 = vsel %vm955, %v2080, %v2081
      %v2083 = vrot.slane %v2081, 4
      %v2084 = vrot.slane %v1969, 5
      %v2085 = vsel %vm955, %v2083, %v2084
      %v2086 = vrot.slane %v1970, 5
      %v2087 = vrot.slane %v2086, 4
      %v2088 = vrot.slane %v1971, 5
      %v2089 = vsel %vm955, %v2087, %v2088
      %v2090 = vrot.slane %v2088, 4
      %v2091 = vrot.slane %v1972, 5
      %v2092 = vsel %vm955, %v2090, %v2091
      %v2093 = vrot.slane %v1973, 5
      %v2094 = vrot.slane %v2093, 4
      %v2095 = vrot.slane %v1974, 5
      %v2096 = vsel %vm955, %v2094, %v2095
      %v2097 = vrot.slane %v2095, 4
      %v2098 = vrot.slane %v1975, 5
      %v2099 = vsel %vm955, %v2097, %v2098
      %v2100 = vrot.slane %v1976, 5
      %v2101 = vrot.slane %v2100, 4
      %v2102 = vrot.slane %v1977, 5
      %v2103 = vsel %vm955, %v2101, %v2102
      %v2104 = vrot.slane %v2102, 4
      %v2105 = vrot.slane %v1978, 5
      %v2106 = vsel %vm955, %v2104, %v2105
      %v2107 = vrot.slane %v1979, 5
      %v2108 = vrot.slane %v2107, 4
      %v2109 = vrot.slane %v1980, 5
      %v2110 = vsel %vm955, %v2108, %v2109
      %v2111 = vrot.slane %v2109, 4
      %v2112 = vrot.slane %v1981, 5
      %v2113 = vsel %vm955, %v2111, %v2112
      %v2114 = vrot.slane %v1982, 5
      %v2115 = vrot.slane %v2114, 4
      %v2116 = vrot.slane %v1983, 5
      %v2117 = vsel %vm955, %v2115, %v2116
      %v2118 = vrot.slane %v2116, 4
      %v2119 = vrot.slane %v1984, 5
      %v2120 = vsel %vm955, %v2118, %v2119
      %v2121 = vrot.slane %v1985, 5
      %v2122 = vrot.slane %v2121, 4
      %v2123 = vrot.slane %v1986, 5
      %v2124 = vsel %vm955, %v2122, %v2123
      %v2125 = vrot.slane %v2123, 4
      %v2126 = vrot.slane %v1987, 5
      %v2127 = vsel %vm955, %v2125, %v2126
      %v2128 = vrot.slane %v1988, 5
      %v2129 = vrot.slane %v2128, 4
      %v2130 = vrot.slane %v1989, 5
      %v2131 = vsel %vm955, %v2129, %v2130
      %v2132 = vrot.slane %v2130, 4
      %v2133 = vrot.slane %v1990, 5
      %v2134 = vsel %vm955, %v2132, %v2133
      %v2135 = vrot.slane %v1991, 5
      %v2136 = vrot.slane %v2135, 4
      %v2137 = vrot.slane %v1992, 5
      %v2138 = vsel %vm955, %v2136, %v2137
      %v2139 = vrot.slane %v2137, 4
      %v2140 = vrot.slane %v1993, 5
      %v2141 = vsel %vm955, %v2139, %v2140
      %v2142 = vrot.slane %v1994, 5
      %v2143 = vrot.slane %v2142, 4
      %v2144 = vrot.slane %v1995, 5
      %v2145 = vsel %vm955, %v2143, %v2144
      %v2146 = vrot.slane %v2144, 4
      %v2147 = vrot.slane %v1996, 5
      %v2148 = vsel %vm955, %v2146, %v2147
      %v2149 = vrot.slane %v1997, 5
      %v2150 = vrot.slane %v2149, 4
      %v2151 = vrot.slane %v1998, 5
      %v2152 = vsel %vm955, %v2150, %v2151
      %v2153 = vrot.slane %v2151, 4
      %v2154 = vrot.slane %v1999, 5
      %v2155 = vsel %vm955, %v2153, %v2154
      %v2156 = vrot.slane %v2000, 5
      %v2157 = vrot.slane %v2156, 4
      %v2158 = vrot.slane %v2001, 5
      %v2159 = vsel %vm955, %v2157, %v2158
      %v2160 = vrot.slane %v2158, 4
      %v2161 = vrot.slane %v2002, 5
      %v2162 = vsel %vm955, %v2160, %v2161
      %2163 = vrot.lane.b32.xlu0 %v2054, 20
      %v2164 = vpop.permute.xlu0 %2163
      %2165 = vrot.lane.b32.xlu0 %v2057, 20
      %v2166 = vpop.permute.xlu0 %2165
      %2167 = vrot.lane.b32.xlu0 %v2061, 20
      %v2168 = vpop.permute.xlu0 %2167
      %2169 = vrot.lane.b32.xlu0 %v2064, 20
      %v2170 = vpop.permute.xlu0 %2169
      %2171 = vrot.lane.b32.xlu0 %v2068, 20
      %v2172 = vpop.permute.xlu0 %2171
      %2173 = vrot.lane.b32.xlu0 %v2071, 20
      %v2174 = vpop.permute.xlu0 %2173
      %2175 = vrot.lane.b32.xlu0 %v2075, 20
      %v2176 = vpop.permute.xlu0 %2175
      %2177 = vrot.lane.b32.xlu0 %v2078, 20
      %v2178 = vpop.permute.xlu0 %2177
      %2179 = vrot.lane.b32.xlu0 %v2082, 20
      %v2180 = vpop.permute.xlu0 %2179
      %2181 = vrot.lane.b32.xlu0 %v2085, 20
      %v2182 = vpop.permute.xlu0 %2181
      %2183 = vrot.lane.b32.xlu0 %v2089, 20
      %v2184 = vpop.permute.xlu0 %2183
      %2185 = vrot.lane.b32.xlu0 %v2092, 20
      %v2186 = vpop.permute.xlu0 %2185
      %2187 = vrot.lane.b32.xlu0 %v2096, 20
      %v2188 = vpop.permute.xlu0 %2187
      %2189 = vrot.lane.b32.xlu0 %v2099, 20
      %v2190 = vpop.permute.xlu0 %2189
      %2191 = vrot.lane.b32.xlu0 %v2103, 20
      %v2192 = vpop.permute.xlu0 %2191
      %2193 = vrot.lane.b32.xlu0 %v2106, 20
      %v2194 = vpop.permute.xlu0 %2193
      %2195 = vrot.lane.b32.xlu0 %v2110, 20
      %v2196 = vpop.permute.xlu0 %2195
      %2197 = vrot.lane.b32.xlu0 %v2113, 20
      %v2198 = vpop.permute.xlu0 %2197
      %2199 = vrot.lane.b32.xlu0 %v2117, 20
      %v2200 = vpop.permute.xlu0 %2199
      %2201 = vrot.lane.b32.xlu0 %v2120, 20
      %v2202 = vpop.permute.xlu0 %2201
      %2203 = vrot.lane.b32.xlu0 %v2124, 20
      %v2204 = vpop.permute.xlu0 %2203
      %2205 = vrot.lane.b32.xlu0 %v2127, 20
      %v2206 = vpop.permute.xlu0 %2205
      %2207 = vrot.lane.b32.xlu0 %v2131, 20
      %v2208 = vpop.permute.xlu0 %2207
      %2209 = vrot.lane.b32.xlu0 %v2134, 20
      %v2210 = vpop.permute.xlu0 %2209
      %2211 = vrot.lane.b32.xlu0 %v2138, 20
      %v2212 = vpop.permute.xlu0 %2211
      %2213 = vrot.lane.b32.xlu0 %v2141, 20
      %v2214 = vpop.permute.xlu0 %2213
      %2215 = vrot.lane.b32.xlu0 %v2145, 20
      %v2216 = vpop.permute.xlu0 %2215
      %2217 = vrot.lane.b32.xlu0 %v2148, 20
      %v2218 = vpop.permute.xlu0 %2217
      %2219 = vrot.lane.b32.xlu0 %v2152, 20
      %v2220 = vpop.permute.xlu0 %2219
      %2221 = vrot.lane.b32.xlu0 %v2155, 20
      %v2222 = vpop.permute.xlu0 %2221
      %2223 = vrot.lane.b32.xlu0 %v2159, 20
      %v2224 = vpop.permute.xlu0 %2223
      %2225 = vrot.lane.b32.xlu0 %v2162, 20
      %v2226 = vpop.permute.xlu0 %2225
      %vm2259 = vcmask 191648
      %2260 = vst.msk [vmem:[#allocation2] sm:$0xf] %vm2259, %v2164
      %2261 = vst.msk [vmem:[#allocation2 + $0x4] sm:$0xf] %vm2259, %v2166
      %2262 = vst.msk [vmem:[#allocation2 + $0x8] sm:$0xf] %vm2259, %v2168
      %2263 = vst.msk [vmem:[#allocation2 + $0xc] sm:$0xf] %vm2259, %v2170
      %2264 = vst.msk [vmem:[#allocation2 + $0x10] sm:$0xf] %vm2259, %v2172
      %2265 = vst.msk [vmem:[#allocation2 + $0x14] sm:$0xf] %vm2259, %v2174
      %2266 = vst.msk [vmem:[#allocation2 + $0x18] sm:$0xf] %vm2259, %v2176
      %2267 = vst.msk [vmem:[#allocation2 + $0x1c] sm:$0xf] %vm2259, %v2178
      %2268 = vst.msk [vmem:[#allocation2 + $0x20] sm:$0xf] %vm2259, %v2180
      %2269 = vst.msk [vmem:[#allocation2 + $0x24] sm:$0xf] %vm2259, %v2182
      %2270 = vst.msk [vmem:[#allocation2 + $0x28] sm:$0xf] %vm2259, %v2184
      %2271 = vst.msk [vmem:[#allocation2 + $0x2c] sm:$0xf] %vm2259, %v2186
      %2272 = vst.msk [vmem:[#allocation2 + $0x30] sm:$0xf] %vm2259, %v2188
      %2273 = vst.msk [vmem:[#allocation2 + $0x34] sm:$0xf] %vm2259, %v2190
      %2274 = vst.msk [vmem:[#allocation2 + $0x38] sm:$0xf] %vm2259, %v2192
      %2275 = vst.msk [vmem:[#allocation2 + $0x3c] sm:$0xf] %vm2259, %v2194
      %2276 = vst.msk [vmem:[#allocation2 + $0x40] sm:$0xf] %vm2259, %v2196
      %2277 = vst.msk [vmem:[#allocation2 + $0x44] sm:$0xf] %vm2259, %v2198
      %2278 = vst.msk [vmem:[#allocation2 + $0x48] sm:$0xf] %vm2259, %v2200
      %2279 = vst.msk [vmem:[#allocation2 + $0x4c] sm:$0xf] %vm2259, %v2202
      %2280 = vst.msk [vmem:[#allocation2 + $0x50] sm:$0xf] %vm2259, %v2204
      %2281 = vst.msk [vmem:[#allocation2 + $0x54] sm:$0xf] %vm2259, %v2206
      %2282 = vst.msk [vmem:[#allocation2 + $0x58] sm:$0xf] %vm2259, %v2208
      %2283 = vst.msk [vmem:[#allocation2 + $0x5c] sm:$0xf] %vm2259, %v2210
      %2284 = vst.msk [vmem:[#allocation2 + $0x60] sm:$0xf] %vm2259, %v2212
      %2285 = vst.msk [vmem:[#allocation2 + $0x64] sm:$0xf] %vm2259, %v2214
      %2286 = vst.msk [vmem:[#allocation2 + $0x68] sm:$0xf] %vm2259, %v2216
      %2287 = vst.msk [vmem:[#allocation2 + $0x6c] sm:$0xf] %vm2259, %v2218
      %2288 = vst.msk [vmem:[#allocation2 + $0x70] sm:$0xf] %vm2259, %v2220
      %2289 = vst.msk [vmem:[#allocation2 + $0x74] sm:$0xf] %vm2259, %v2222
      %2290 = vst.msk [vmem:[#allocation2 + $0x78] sm:$0xf] %vm2259, %v2224
      %2291 = vst.msk [vmem:[#allocation2 + $0x7c] sm:$0xf] %vm2259, %v2226
      %s2292 = sadd.s32 %s222, 2
      %s2293 = smul.u32 %s2292, 3
      %s2294 = smul.addr %s2293, 4
      %s2295 = scalar_lea.vmem %s210, %s2294
      %v2296 = vld [vmem:[%s2295] sm:$0xf]
      %v2297 = vld [vmem:[%s2295 + $0x4] sm:$0xf]
      %v2298 = vld [vmem:[%s2295 + $0xc] sm:$0xf]
      %v2299 = vld [vmem:[%s2295 + $0x10] sm:$0xf]
      %v2300 = vld [vmem:[%s2295 + $0x18] sm:$0xf]
      %v2301 = vld [vmem:[%s2295 + $0x1c] sm:$0xf]
      %v2302 = vld [vmem:[%s2295 + $0x24] sm:$0xf]
      %v2303 = vld [vmem:[%s2295 + $0x28] sm:$0xf]
      %v2304 = vld [vmem:[%s2295 + $0x30] sm:$0xf]
      %v2305 = vld [vmem:[%s2295 + $0x34] sm:$0xf]
      %v2306 = vld [vmem:[%s2295 + $0x3c] sm:$0xf]
      %v2307 = vld [vmem:[%s2295 + $0x40] sm:$0xf]
      %v2308 = vld [vmem:[%s2295 + $0x48] sm:$0xf]
      %v2309 = vld [vmem:[%s2295 + $0x4c] sm:$0xf]
      %v2310 = vld [vmem:[%s2295 + $0x54] sm:$0xf]
      %v2311 = vld [vmem:[%s2295 + $0x58] sm:$0xf]
      %v2312 = vld [vmem:[%s2295 + $0x60] sm:$0xf]
      %v2313 = vld [vmem:[%s2295 + $0x64] sm:$0xf]
      %v2314 = vld [vmem:[%s2295 + $0x6c] sm:$0xf]
      %v2315 = vld [vmem:[%s2295 + $0x70] sm:$0xf]
      %v2316 = vld [vmem:[%s2295 + $0x78] sm:$0xf]
      %v2317 = vld [vmem:[%s2295 + $0x7c] sm:$0xf]
      %v2318 = vld [vmem:[%s2295 + $0x84] sm:$0xf]
      %v2319 = vld [vmem:[%s2295 + $0x88] sm:$0xf]
      %v2320 = vld [vmem:[%s2295 + $0x90] sm:$0xf]
      %v2321 = vld [vmem:[%s2295 + $0x94] sm:$0xf]
      %v2322 = vld [vmem:[%s2295 + $0x9c] sm:$0xf]
      %v2323 = vld [vmem:[%s2295 + $0xa0] sm:$0xf]
      %v2324 = vld [vmem:[%s2295 + $0xa8] sm:$0xf]
      %v2325 = vld [vmem:[%s2295 + $0xac] sm:$0xf]
      %v2326 = vld [vmem:[%s2295 + $0xb4] sm:$0xf]
      %v2327 = vld [vmem:[%s2295 + $0xb8] sm:$0xf]
      %2360 = vrot.lane.b32.xlu0 %v2296, 24
      %v2361 = vpop.permute.xlu0 %2360
      %2362 = vrot.lane.b32.xlu0 %v2297, 24
      %v2363 = vpop.permute.xlu0 %2362
      %2364 = vrot.lane.b32.xlu0 %v2298, 24
      %v2365 = vpop.permute.xlu0 %2364
      %2366 = vrot.lane.b32.xlu0 %v2299, 24
      %v2367 = vpop.permute.xlu0 %2366
      %2368 = vrot.lane.b32.xlu0 %v2300, 24
      %v2369 = vpop.permute.xlu0 %2368
      %2370 = vrot.lane.b32.xlu0 %v2301, 24
      %v2371 = vpop.permute.xlu0 %2370
      %2372 = vrot.lane.b32.xlu0 %v2302, 24
      %v2373 = vpop.permute.xlu0 %2372
      %2374 = vrot.lane.b32.xlu0 %v2303, 24
      %v2375 = vpop.permute.xlu0 %2374
      %2376 = vrot.lane.b32.xlu0 %v2304, 24
      %v2377 = vpop.permute.xlu0 %2376
      %2378 = vrot.lane.b32.xlu0 %v2305, 24
      %v2379 = vpop.permute.xlu0 %2378
      %2380 = vrot.lane.b32.xlu0 %v2306, 24
      %v2381 = vpop.permute.xlu0 %2380
      %2382 = vrot.lane.b32.xlu0 %v2307, 24
      %v2383 = vpop.permute.xlu0 %2382
      %2384 = vrot.lane.b32.xlu0 %v2308, 24
      %v2385 = vpop.permute.xlu0 %2384
      %2386 = vrot.lane.b32.xlu0 %v2309, 24
      %v2387 = vpop.permute.xlu0 %2386
      %2388 = vrot.lane.b32.xlu0 %v2310, 24
      %v2389 = vpop.permute.xlu0 %2388
      %2390 = vrot.lane.b32.xlu0 %v2311, 24
      %v2391 = vpop.permute.xlu0 %2390
      %2392 = vrot.lane.b32.xlu0 %v2312, 24
      %v2393 = vpop.permute.xlu0 %2392
      %2394 = vrot.lane.b32.xlu0 %v2313, 24
      %v2395 = vpop.permute.xlu0 %2394
      %2396 = vrot.lane.b32.xlu0 %v2314, 24
      %v2397 = vpop.permute.xlu0 %2396
      %2398 = vrot.lane.b32.xlu0 %v2315, 24
      %v2399 = vpop.permute.xlu0 %2398
      %2400 = vrot.lane.b32.xlu0 %v2316, 24
      %v2401 = vpop.permute.xlu0 %2400
      %2402 = vrot.lane.b32.xlu0 %v2317, 24
      %v2403 = vpop.permute.xlu0 %2402
      %2404 = vrot.lane.b32.xlu0 %v2318, 24
      %v2405 = vpop.permute.xlu0 %2404
      %2406 = vrot.lane.b32.xlu0 %v2319, 24
      %v2407 = vpop.permute.xlu0 %2406
      %2408 = vrot.lane.b32.xlu0 %v2320, 24
      %v2409 = vpop.permute.xlu0 %2408
      %2410 = vrot.lane.b32.xlu0 %v2321, 24
      %v2411 = vpop.permute.xlu0 %2410
      %2412 = vrot.lane.b32.xlu0 %v2322, 24
      %v2413 = vpop.permute.xlu0 %2412
      %2414 = vrot.lane.b32.xlu0 %v2323, 24
      %v2415 = vpop.permute.xlu0 %2414
      %2416 = vrot.lane.b32.xlu0 %v2324, 24
      %v2417 = vpop.permute.xlu0 %2416
      %2418 = vrot.lane.b32.xlu0 %v2325, 24
      %v2419 = vpop.permute.xlu0 %2418
      %2420 = vrot.lane.b32.xlu0 %v2326, 24
      %v2421 = vpop.permute.xlu0 %2420
      %2422 = vrot.lane.b32.xlu0 %v2327, 24
      %v2423 = vpop.permute.xlu0 %2422
      %vm2456 = vcmask 224448
      %2457 = vst.msk [vmem:[#allocation2] sm:$0xf] %vm2456, %v2361
      %2458 = vst.msk [vmem:[#allocation2 + $0x4] sm:$0xf] %vm2456, %v2363
      %2459 = vst.msk [vmem:[#allocation2 + $0x8] sm:$0xf] %vm2456, %v2365
      %2460 = vst.msk [vmem:[#allocation2 + $0xc] sm:$0xf] %vm2456, %v2367
      %2461 = vst.msk [vmem:[#allocation2 + $0x10] sm:$0xf] %vm2456, %v2369
      %2462 = vst.msk [vmem:[#allocation2 + $0x14] sm:$0xf] %vm2456, %v2371
      %2463 = vst.msk [vmem:[#allocation2 + $0x18] sm:$0xf] %vm2456, %v2373
      %2464 = vst.msk [vmem:[#allocation2 + $0x1c] sm:$0xf] %vm2456, %v2375
      %2465 = vst.msk [vmem:[#allocation2 + $0x20] sm:$0xf] %vm2456, %v2377
      %2466 = vst.msk [vmem:[#allocation2 + $0x24] sm:$0xf] %vm2456, %v2379
      %2467 = vst.msk [vmem:[#allocation2 + $0x28] sm:$0xf] %vm2456, %v2381
      %2468 = vst.msk [vmem:[#allocation2 + $0x2c] sm:$0xf] %vm2456, %v2383
      %2469 = vst.msk [vmem:[#allocation2 + $0x30] sm:$0xf] %vm2456, %v2385
      %2470 = vst.msk [vmem:[#allocation2 + $0x34] sm:$0xf] %vm2456, %v2387
      %2471 = vst.msk [vmem:[#allocation2 + $0x38] sm:$0xf] %vm2456, %v2389
      %2472 = vst.msk [vmem:[#allocation2 + $0x3c] sm:$0xf] %vm2456, %v2391
      %2473 = vst.msk [vmem:[#allocation2 + $0x40] sm:$0xf] %vm2456, %v2393
      %2474 = vst.msk [vmem:[#allocation2 + $0x44] sm:$0xf] %vm2456, %v2395
      %2475 = vst.msk [vmem:[#allocation2 + $0x48] sm:$0xf] %vm2456, %v2397
      %2476 = vst.msk [vmem:[#allocation2 + $0x4c] sm:$0xf] %vm2456, %v2399
      %2477 = vst.msk [vmem:[#allocation2 + $0x50] sm:$0xf] %vm2456, %v2401
      %2478 = vst.msk [vmem:[#allocation2 + $0x54] sm:$0xf] %vm2456, %v2403
      %2479 = vst.msk [vmem:[#allocation2 + $0x58] sm:$0xf] %vm2456, %v2405
      %2480 = vst.msk [vmem:[#allocation2 + $0x5c] sm:$0xf] %vm2456, %v2407
      %2481 = vst.msk [vmem:[#allocation2 + $0x60] sm:$0xf] %vm2456, %v2409
      %2482 = vst.msk [vmem:[#allocation2 + $0x64] sm:$0xf] %vm2456, %v2411
      %2483 = vst.msk [vmem:[#allocation2 + $0x68] sm:$0xf] %vm2456, %v2413
      %2484 = vst.msk [vmem:[#allocation2 + $0x6c] sm:$0xf] %vm2456, %v2415
      %2485 = vst.msk [vmem:[#allocation2 + $0x70] sm:$0xf] %vm2456, %v2417
      %2486 = vst.msk [vmem:[#allocation2 + $0x74] sm:$0xf] %vm2456, %v2419
      %2487 = vst.msk [vmem:[#allocation2 + $0x78] sm:$0xf] %vm2456, %v2421
      %2488 = vst.msk [vmem:[#allocation2 + $0x7c] sm:$0xf] %vm2456, %v2423
      %v2489 = vld [vmem:[%s2295] sm:$0xf]
      %v2490 = vld [vmem:[%s2295 + $0x4] sm:$0xf]
      %v2491 = vld [vmem:[%s2295 + $0x8] sm:$0x1]
      %v2492 = vld [vmem:[%s2295 + $0xc] sm:$0xf]
      %v2493 = vld [vmem:[%s2295 + $0x10] sm:$0xf]
      %v2494 = vld [vmem:[%s2295 + $0x14] sm:$0x1]
      %v2495 = vld [vmem:[%s2295 + $0x18] sm:$0xf]
      %v2496 = vld [vmem:[%s2295 + $0x1c] sm:$0xf]
      %v2497 = vld [vmem:[%s2295 + $0x20] sm:$0x1]
      %v2498 = vld [vmem:[%s2295 + $0x24] sm:$0xf]
      %v2499 = vld [vmem:[%s2295 + $0x28] sm:$0xf]
      %v2500 = vld [vmem:[%s2295 + $0x2c] sm:$0x1]
      %v2501 = vld [vmem:[%s2295 + $0x30] sm:$0xf]
      %v2502 = vld [vmem:[%s2295 + $0x34] sm:$0xf]
      %v2503 = vld [vmem:[%s2295 + $0x38] sm:$0x1]
      %v2504 = vld [vmem:[%s2295 + $0x3c] sm:$0xf]
      %v2505 = vld [vmem:[%s2295 + $0x40] sm:$0xf]
      %v2506 = vld [vmem:[%s2295 + $0x44] sm:$0x1]
      %v2507 = vld [vmem:[%s2295 + $0x48] sm:$0xf]
      %v2508 = vld [vmem:[%s2295 + $0x4c] sm:$0xf]
      %v2509 = vld [vmem:[%s2295 + $0x50] sm:$0x1]
      %v2510 = vld [vmem:[%s2295 + $0x54] sm:$0xf]
      %v2511 = vld [vmem:[%s2295 + $0x58] sm:$0xf]
      %v2512 = vld [vmem:[%s2295 + $0x5c] sm:$0x1]
      %v2513 = vld [vmem:[%s2295 + $0x60] sm:$0xf]
      %v2514 = vld [vmem:[%s2295 + $0x64] sm:$0xf]
      %v2515 = vld [vmem:[%s2295 + $0x68] sm:$0x1]
      %v2516 = vld [vmem:[%s2295 + $0x6c] sm:$0xf]
      %v2517 = vld [vmem:[%s2295 + $0x70] sm:$0xf]
      %v2518 = vld [vmem:[%s2295 + $0x74] sm:$0x1]
      %v2519 = vld [vmem:[%s2295 + $0x78] sm:$0xf]
      %v2520 = vld [vmem:[%s2295 + $0x7c] sm:$0xf]
      %v2521 = vld [vmem:[%s2295 + $0x80] sm:$0x1]
      %v2522 = vld [vmem:[%s2295 + $0x84] sm:$0xf]
      %v2523 = vld [vmem:[%s2295 + $0x88] sm:$0xf]
      %v2524 = vld [vmem:[%s2295 + $0x8c] sm:$0x1]
      %v2525 = vld [vmem:[%s2295 + $0x90] sm:$0xf]
      %v2526 = vld [vmem:[%s2295 + $0x94] sm:$0xf]
      %v2527 = vld [vmem:[%s2295 + $0x98] sm:$0x1]
      %v2528 = vld [vmem:[%s2295 + $0x9c] sm:$0xf]
      %v2529 = vld [vmem:[%s2295 + $0xa0] sm:$0xf]
      %v2530 = vld [vmem:[%s2295 + $0xa4] sm:$0x1]
      %v2531 = vld [vmem:[%s2295 + $0xa8] sm:$0xf]
      %v2532 = vld [vmem:[%s2295 + $0xac] sm:$0xf]
      %v2533 = vld [vmem:[%s2295 + $0xb0] sm:$0x1]
      %v2534 = vld [vmem:[%s2295 + $0xb4] sm:$0xf]
      %v2535 = vld [vmem:[%s2295 + $0xb8] sm:$0xf]
      %v2536 = vld [vmem:[%s2295 + $0xbc] sm:$0x1]
      %v2538 = vshrl.u32 %v2489, 16
      %v2540 = vrot.slane %v2538, 4
      %v2541 = vshll.u32 %v2489, 16
      %v2543 = vrot.slane %v2541, 5
      %v2544 = vor.u32 %v2540, %v2543
      %v2545 = vrot.slane %v2544, 4
      %v2547 = vshll.u32 %v2490, 16
      %v2549 = vrot.slane %v2547, 5
      %v2550 = vsel %vm343, %v2545, %v2549
      %v2551 = vshrl.u32 %v2490, 16
      %v2553 = vrot.slane %v2551, 4
      %v2554 = vor.u32 %v2553, %v2549
      %v2555 = vrot.slane %v2554, 4
      %v2557 = vshll.u32 %v2491, 16
      %v2559 = vrot.slane %v2557, 5
      %v2560 = vsel %vm343, %v2555, %v2559
      %v2562 = vshrl.u32 %v2492, 16
      %v2564 = vrot.slane %v2562, 4
      %v2565 = vshll.u32 %v2492, 16
      %v2567 = vrot.slane %v2565, 5
      %v2568 = vor.u32 %v2564, %v2567
      %v2569 = vrot.slane %v2568, 4
      %v2571 = vshll.u32 %v2493, 16
      %v2573 = vrot.slane %v2571, 5
      %v2574 = vsel %vm343, %v2569, %v2573
      %v2575 = vshrl.u32 %v2493, 16
      %v2577 = vrot.slane %v2575, 4
      %v2578 = vor.u32 %v2577, %v2573
      %v2579 = vrot.slane %v2578, 4
      %v2581 = vshll.u32 %v2494, 16
      %v2583 = vrot.slane %v2581, 5
      %v2584 = vsel %vm343, %v2579, %v2583
      %v2586 = vshrl.u32 %v2495, 16
      %v2588 = vrot.slane %v2586, 4
      %v2589 = vshll.u32 %v2495, 16
      %v2591 = vrot.slane %v2589, 5
      %v2592 = vor.u32 %v2588, %v2591
      %v2593 = vrot.slane %v2592, 4
      %v2595 = vshll.u32 %v2496, 16
      %v2597 = vrot.slane %v2595, 5
      %v2598 = vsel %vm343, %v2593, %v2597
      %v2599 = vshrl.u32 %v2496, 16
      %v2601 = vrot.slane %v2599, 4
      %v2602 = vor.u32 %v2601, %v2597
      %v2603 = vrot.slane %v2602, 4
      %v2605 = vshll.u32 %v2497, 16
      %v2607 = vrot.slane %v2605, 5
      %v2608 = vsel %vm343, %v2603, %v2607
      %v2610 = vshrl.u32 %v2498, 16
      %v2612 = vrot.slane %v2610, 4
      %v2613 = vshll.u32 %v2498, 16
      %v2615 = vrot.slane %v2613, 5
      %v2616 = vor.u32 %v2612, %v2615
      %v2617 = vrot.slane %v2616, 4
      %v2619 = vshll.u32 %v2499, 16
      %v2621 = vrot.slane %v2619, 5
      %v2622 = vsel %vm343, %v2617, %v2621
      %v2623 = vshrl.u32 %v2499, 16
      %v2625 = vrot.slane %v2623, 4
      %v2626 = vor.u32 %v2625, %v2621
      %v2627 = vrot.slane %v2626, 4
      %v2629 = vshll.u32 %v2500, 16
      %v2631 = vrot.slane %v2629, 5
      %v2632 = vsel %vm343, %v2627, %v2631
      %v2634 = vshrl.u32 %v2501, 16
      %v2636 = vrot.slane %v2634, 4
      %v2637 = vshll.u32 %v2501, 16
      %v2639 = vrot.slane %v2637, 5
      %v2640 = vor.u32 %v2636, %v2639
      %v2641 = vrot.slane %v2640, 4
      %v2643 = vshll.u32 %v2502, 16
      %v2645 = vrot.slane %v2643, 5
      %v2646 = vsel %vm343, %v2641, %v2645
      %v2647 = vshrl.u32 %v2502, 16
      %v2649 = vrot.slane %v2647, 4
      %v2650 = vor.u32 %v2649, %v2645
      %v2651 = vrot.slane %v2650, 4
      %v2653 = vshll.u32 %v2503, 16
      %v2655 = vrot.slane %v2653, 5
      %v2656 = vsel %vm343, %v2651, %v2655
      %v2658 = vshrl.u32 %v2504, 16
      %v2660 = vrot.slane %v2658, 4
      %v2661 = vshll.u32 %v2504, 16
      %v2663 = vrot.slane %v2661, 5
      %v2664 = vor.u32 %v2660, %v2663
      %v2665 = vrot.slane %v2664, 4
      %v2667 = vshll.u32 %v2505, 16
      %v2669 = vrot.slane %v2667, 5
      %v2670 = vsel %vm343, %v2665, %v2669
      %v2671 = vshrl.u32 %v2505, 16
      %v2673 = vrot.slane %v2671, 4
      %v2674 = vor.u32 %v2673, %v2669
      %v2675 = vrot.slane %v2674, 4
      %v2677 = vshll.u32 %v2506, 16
      %v2679 = vrot.slane %v2677, 5
      %v2680 = vsel %vm343, %v2675, %v2679
      %v2682 = vshrl.u32 %v2507, 16
      %v2684 = vrot.slane %v2682, 4
      %v2685 = vshll.u32 %v2507, 16
      %v2687 = vrot.slane %v2685, 5
      %v2688 = vor.u32 %v2684, %v2687
      %v2689 = vrot.slane %v2688, 4
      %v2691 = vshll.u32 %v2508, 16
      %v2693 = vrot.slane %v2691, 5
      %v2694 = vsel %vm343, %v2689, %v2693
      %v2695 = vshrl.u32 %v2508, 16
      %v2697 = vrot.slane %v2695, 4
      %v2698 = vor.u32 %v2697, %v2693
      %v2699 = vrot.slane %v2698, 4
      %v2701 = vshll.u32 %v2509, 16
      %v2703 = vrot.slane %v2701, 5
      %v2704 = vsel %vm343, %v2699, %v2703
      %v2706 = vshrl.u32 %v2510, 16
      %v2708 = vrot.slane %v2706, 4
      %v2709 = vshll.u32 %v2510, 16
      %v2711 = vrot.slane %v2709, 5
      %v2712 = vor.u32 %v2708, %v2711
      %v2713 = vrot.slane %v2712, 4
      %v2715 = vshll.u32 %v2511, 16
      %v2717 = vrot.slane %v2715, 5
      %v2718 = vsel %vm343, %v2713, %v2717
      %v2719 = vshrl.u32 %v2511, 16
      %v2721 = vrot.slane %v2719, 4
      %v2722 = vor.u32 %v2721, %v2717
      %v2723 = vrot.slane %v2722, 4
      %v2725 = vshll.u32 %v2512, 16
      %v2727 = vrot.slane %v2725, 5
      %v2728 = vsel %vm343, %v2723, %v2727
      %v2730 = vshrl.u32 %v2513, 16
      %v2732 = vrot.slane %v2730, 4
      %v2733 = vshll.u32 %v2513, 16
      %v2735 = vrot.slane %v2733, 5
      %v2736 = vor.u32 %v2732, %v2735
      %v2737 = vrot.slane %v2736, 4
      %v2739 = vshll.u32 %v2514, 16
      %v2741 = vrot.slane %v2739, 5
      %v2742 = vsel %vm343, %v2737, %v2741
      %v2743 = vshrl.u32 %v2514, 16
      %v2745 = vrot.slane %v2743, 4
      %v2746 = vor.u32 %v2745, %v2741
      %v2747 = vrot.slane %v2746, 4
      %v2749 = vshll.u32 %v2515, 16
      %v2751 = vrot.slane %v2749, 5
      %v2752 = vsel %vm343, %v2747, %v2751
      %v2754 = vshrl.u32 %v2516, 16
      %v2756 = vrot.slane %v2754, 4
      %v2757 = vshll.u32 %v2516, 16
      %v2759 = vrot.slane %v2757, 5
      %v2760 = vor.u32 %v2756, %v2759
      %v2761 = vrot.slane %v2760, 4
      %v2763 = vshll.u32 %v2517, 16
      %v2765 = vrot.slane %v2763, 5
      %v2766 = vsel %vm343, %v2761, %v2765
      %v2767 = vshrl.u32 %v2517, 16
      %v2769 = vrot.slane %v2767, 4
      %v2770 = vor.u32 %v2769, %v2765
      %v2771 = vrot.slane %v2770, 4
      %v2773 = vshll.u32 %v2518, 16
      %v2775 = vrot.slane %v2773, 5
      %v2776 = vsel %vm343, %v2771, %v2775
      %v2778 = vshrl.u32 %v2519, 16
      %v2780 = vrot.slane %v2778, 4
      %v2781 = vshll.u32 %v2519, 16
      %v2783 = vrot.slane %v2781, 5
      %v2784 = vor.u32 %v2780, %v2783
      %v2785 = vrot.slane %v2784, 4
      %v2787 = vshll.u32 %v2520, 16
      %v2789 = vrot.slane %v2787, 5
      %v2790 = vsel %vm343, %v2785, %v2789
      %v2791 = vshrl.u32 %v2520, 16
      %v2793 = vrot.slane %v2791, 4
      %v2794 = vor.u32 %v2793, %v2789
      %v2795 = vrot.slane %v2794, 4
      %v2797 = vshll.u32 %v2521, 16
      %v2799 = vrot.slane %v2797, 5
      %v2800 = vsel %vm343, %v2795, %v2799
      %v2802 = vshrl.u32 %v2522, 16
      %v2804 = vrot.slane %v2802, 4
      %v2805 = vshll.u32 %v2522, 16
      %v2807 = vrot.slane %v2805, 5
      %v2808 = vor.u32 %v2804, %v2807
      %v2809 = vrot.slane %v2808, 4
      %v2811 = vshll.u32 %v2523, 16
      %v2813 = vrot.slane %v2811, 5
      %v2814 = vsel %vm343, %v2809, %v2813
      %v2815 = vshrl.u32 %v2523, 16
      %v2817 = vrot.slane %v2815, 4
      %v2818 = vor.u32 %v2817, %v2813
      %v2819 = vrot.slane %v2818, 4
      %v2821 = vshll.u32 %v2524, 16
      %v2823 = vrot.slane %v2821, 5
      %v2824 = vsel %vm343, %v2819, %v2823
      %v2826 = vshrl.u32 %v2525, 16
      %v2828 = vrot.slane %v2826, 4
      %v2829 = vshll.u32 %v2525, 16
      %v2831 = vrot.slane %v2829, 5
      %v2832 = vor.u32 %v2828, %v2831
      %v2833 = vrot.slane %v2832, 4
      %v2835 = vshll.u32 %v2526, 16
      %v2837 = vrot.slane %v2835, 5
      %v2838 = vsel %vm343, %v2833, %v2837
      %v2839 = vshrl.u32 %v2526, 16
      %v2841 = vrot.slane %v2839, 4
      %v2842 = vor.u32 %v2841, %v2837
      %v2843 = vrot.slane %v2842, 4
      %v2845 = vshll.u32 %v2527, 16
      %v2847 = vrot.slane %v2845, 5
      %v2848 = vsel %vm343, %v2843, %v2847
      %v2850 = vshrl.u32 %v2528, 16
      %v2852 = vrot.slane %v2850, 4
      %v2853 = vshll.u32 %v2528, 16
      %v2855 = vrot.slane %v2853, 5
      %v2856 = vor.u32 %v2852, %v2855
      %v2857 = vrot.slane %v2856, 4
      %v2859 = vshll.u32 %v2529, 16
      %v2861 = vrot.slane %v2859, 5
      %v2862 = vsel %vm343, %v2857, %v2861
      %v2863 = vshrl.u32 %v2529, 16
      %v2865 = vrot.slane %v2863, 4
      %v2866 = vor.u32 %v2865, %v2861
      %v2867 = vrot.slane %v2866, 4
      %v2869 = vshll.u32 %v2530, 16
      %v2871 = vrot.slane %v2869, 5
      %v2872 = vsel %vm343, %v2867, %v2871
      %v2874 = vshrl.u32 %v2531, 16
      %v2876 = vrot.slane %v2874, 4
      %v2877 = vshll.u32 %v2531, 16
      %v2879 = vrot.slane %v2877, 5
      %v2880 = vor.u32 %v2876, %v2879
      %v2881 = vrot.slane %v2880, 4
      %v2883 = vshll.u32 %v2532, 16
      %v2885 = vrot.slane %v2883, 5
      %v2886 = vsel %vm343, %v2881, %v2885
      %v2887 = vshrl.u32 %v2532, 16
      %v2889 = vrot.slane %v2887, 4
      %v2890 = vor.u32 %v2889, %v2885
      %v2891 = vrot.slane %v2890, 4
      %v2893 = vshll.u32 %v2533, 16
      %v2895 = vrot.slane %v2893, 5
      %v2896 = vsel %vm343, %v2891, %v2895
      %v2898 = vshrl.u32 %v2534, 16
      %v2900 = vrot.slane %v2898, 4
      %v2901 = vshll.u32 %v2534, 16
      %v2903 = vrot.slane %v2901, 5
      %v2904 = vor.u32 %v2900, %v2903
      %v2905 = vrot.slane %v2904, 4
      %v2907 = vshll.u32 %v2535, 16
      %v2909 = vrot.slane %v2907, 5
      %v2910 = vsel %vm343, %v2905, %v2909
      %v2911 = vshrl.u32 %v2535, 16
      %v2913 = vrot.slane %v2911, 4
      %v2914 = vor.u32 %v2913, %v2909
      %v2915 = vrot.slane %v2914, 4
      %v2917 = vshll.u32 %v2536, 16
      %v2919 = vrot.slane %v2917, 5
      %v2920 = vsel %vm343, %v2915, %v2919
      %2921 = vrot.lane.b32.xlu0 %v2550, 28
      %v2922 = vpop.permute.xlu0 %2921
      %2923 = vrot.lane.b32.xlu0 %v2560, 28
      %v2924 = vpop.permute.xlu0 %2923
      %2925 = vrot.lane.b32.xlu0 %v2574, 28
      %v2926 = vpop.permute.xlu0 %2925
      %2927 = vrot.lane.b32.xlu0 %v2584, 28
      %v2928 = vpop.permute.xlu0 %2927
      %2929 = vrot.lane.b32.xlu0 %v2598, 28
      %v2930 = vpop.permute.xlu0 %2929
      %2931 = vrot.lane.b32.xlu0 %v2608, 28
      %v2932 = vpop.permute.xlu0 %2931
      %2933 = vrot.lane.b32.xlu0 %v2622, 28
      %v2934 = vpop.permute.xlu0 %2933
      %2935 = vrot.lane.b32.xlu0 %v2632, 28
      %v2936 = vpop.permute.xlu0 %2935
      %2937 = vrot.lane.b32.xlu0 %v2646, 28
      %v2938 = vpop.permute.xlu0 %2937
      %2939 = vrot.lane.b32.xlu0 %v2656, 28
      %v2940 = vpop.permute.xlu0 %2939
      %2941 = vrot.lane.b32.xlu0 %v2670, 28
      %v2942 = vpop.permute.xlu0 %2941
      %2943 = vrot.lane.b32.xlu0 %v2680, 28
      %v2944 = vpop.permute.xlu0 %2943
      %2945 = vrot.lane.b32.xlu0 %v2694, 28
      %v2946 = vpop.permute.xlu0 %2945
      %2947 = vrot.lane.b32.xlu0 %v2704, 28
      %v2948 = vpop.permute.xlu0 %2947
      %2949 = vrot.lane.b32.xlu0 %v2718, 28
      %v2950 = vpop.permute.xlu0 %2949
      %2951 = vrot.lane.b32.xlu0 %v2728, 28
      %v2952 = vpop.permute.xlu0 %2951
      %2953 = vrot.lane.b32.xlu0 %v2742, 28
      %v2954 = vpop.permute.xlu0 %2953
      %2955 = vrot.lane.b32.xlu0 %v2752, 28
      %v2956 = vpop.permute.xlu0 %2955
      %2957 = vrot.lane.b32.xlu0 %v2766, 28
      %v2958 = vpop.permute.xlu0 %2957
      %2959 = vrot.lane.b32.xlu0 %v2776, 28
      %v2960 = vpop.permute.xlu0 %2959
      %2961 = vrot.lane.b32.xlu0 %v2790, 28
      %v2962 = vpop.permute.xlu0 %2961
      %2963 = vrot.lane.b32.xlu0 %v2800, 28
      %v2964 = vpop.permute.xlu0 %2963
      %2965 = vrot.lane.b32.xlu0 %v2814, 28
      %v2966 = vpop.permute.xlu0 %2965
      %2967 = vrot.lane.b32.xlu0 %v2824, 28
      %v2968 = vpop.permute.xlu0 %2967
      %2969 = vrot.lane.b32.xlu0 %v2838, 28
      %v2970 = vpop.permute.xlu0 %2969
      %2971 = vrot.lane.b32.xlu0 %v2848, 28
      %v2972 = vpop.permute.xlu0 %2971
      %2973 = vrot.lane.b32.xlu0 %v2862, 28
      %v2974 = vpop.permute.xlu0 %2973
      %2975 = vrot.lane.b32.xlu0 %v2872, 28
      %v2976 = vpop.permute.xlu0 %2975
      %2977 = vrot.lane.b32.xlu0 %v2886, 28
      %v2978 = vpop.permute.xlu0 %2977
      %2979 = vrot.lane.b32.xlu0 %v2896, 28
      %v2980 = vpop.permute.xlu0 %2979
      %2981 = vrot.lane.b32.xlu0 %v2910, 28
      %v2982 = vpop.permute.xlu0 %2981
      %2983 = vrot.lane.b32.xlu0 %v2920, 28
      %v2984 = vpop.permute.xlu0 %2983
      %vm3017 = vcmask 257248
      %3018 = vst.msk [vmem:[#allocation2] sm:$0xf] %vm3017, %v2922
      %3019 = vst.msk [vmem:[#allocation2 + $0x4] sm:$0xf] %vm3017, %v2924
      %3020 = vst.msk [vmem:[#allocation2 + $0x8] sm:$0xf] %vm3017, %v2926
      %3021 = vst.msk [vmem:[#allocation2 + $0xc] sm:$0xf] %vm3017, %v2928
      %3022 = vst.msk [vmem:[#allocation2 + $0x10] sm:$0xf] %vm3017, %v2930
      %3023 = vst.msk [vmem:[#allocation2 + $0x14] sm:$0xf] %vm3017, %v2932
      %3024 = vst.msk [vmem:[#allocation2 + $0x18] sm:$0xf] %vm3017, %v2934
      %3025 = vst.msk [vmem:[#allocation2 + $0x1c] sm:$0xf] %vm3017, %v2936
      %3026 = vst.msk [vmem:[#allocation2 + $0x20] sm:$0xf] %vm3017, %v2938
      %3027 = vst.msk [vmem:[#allocation2 + $0x24] sm:$0xf] %vm3017, %v2940
      %3028 = vst.msk [vmem:[#allocation2 + $0x28] sm:$0xf] %vm3017, %v2942
      %3029 = vst.msk [vmem:[#allocation2 + $0x2c] sm:$0xf] %vm3017, %v2944
      %3030 = vst.msk [vmem:[#allocation2 + $0x30] sm:$0xf] %vm3017, %v2946
      %3031 = vst.msk [vmem:[#allocation2 + $0x34] sm:$0xf] %vm3017, %v2948
      %3032 = vst.msk [vmem:[#allocation2 + $0x38] sm:$0xf] %vm3017, %v2950
      %3033 = vst.msk [vmem:[#allocation2 + $0x3c] sm:$0xf] %vm3017, %v2952
      %3034 = vst.msk [vmem:[#allocation2 + $0x40] sm:$0xf] %vm3017, %v2954
      %3035 = vst.msk [vmem:[#allocation2 + $0x44] sm:$0xf] %vm3017, %v2956
      %3036 = vst.msk [vmem:[#allocation2 + $0x48] sm:$0xf] %vm3017, %v2958
      %3037 = vst.msk [vmem:[#allocation2 + $0x4c] sm:$0xf] %vm3017, %v2960
      %3038 = vst.msk [vmem:[#allocation2 + $0x50] sm:$0xf] %vm3017, %v2962
      %3039 = vst.msk [vmem:[#allocation2 + $0x54] sm:$0xf] %vm3017, %v2964
      %3040 = vst.msk [vmem:[#allocation2 + $0x58] sm:$0xf] %vm3017, %v2966
      %3041 = vst.msk [vmem:[#allocation2 + $0x5c] sm:$0xf] %vm3017, %v2968
      %3042 = vst.msk [vmem:[#allocation2 + $0x60] sm:$0xf] %vm3017, %v2970
      %3043 = vst.msk [vmem:[#allocation2 + $0x64] sm:$0xf] %vm3017, %v2972
      %3044 = vst.msk [vmem:[#allocation2 + $0x68] sm:$0xf] %vm3017, %v2974
      %3045 = vst.msk [vmem:[#allocation2 + $0x6c] sm:$0xf] %vm3017, %v2976
      %3046 = vst.msk [vmem:[#allocation2 + $0x70] sm:$0xf] %vm3017, %v2978
      %3047 = vst.msk [vmem:[#allocation2 + $0x74] sm:$0xf] %vm3017, %v2980
      %3048 = vst.msk [vmem:[#allocation2 + $0x78] sm:$0xf] %vm3017, %v2982
      %3049 = vst.msk [vmem:[#allocation2 + $0x7c] sm:$0xf] %vm3017, %v2984
      %v3050 = vld [vmem:[%s2295] sm:$0xe]
      %v3051 = vld [vmem:[%s2295 + $0x4] sm:$0xf]
      %v3052 = vld [vmem:[%s2295 + $0x8] sm:$0x1]
      %v3053 = vld [vmem:[%s2295 + $0xc] sm:$0xe]
      %v3054 = vld [vmem:[%s2295 + $0x10] sm:$0xf]
      %v3055 = vld [vmem:[%s2295 + $0x14] sm:$0x1]
      %v3056 = vld [vmem:[%s2295 + $0x18] sm:$0xe]
      %v3057 = vld [vmem:[%s2295 + $0x1c] sm:$0xf]
      %v3058 = vld [vmem:[%s2295 + $0x20] sm:$0x1]
      %v3059 = vld [vmem:[%s2295 + $0x24] sm:$0xe]
      %v3060 = vld [vmem:[%s2295 + $0x28] sm:$0xf]
      %v3061 = vld [vmem:[%s2295 + $0x2c] sm:$0x1]
      %v3062 = vld [vmem:[%s2295 + $0x30] sm:$0xe]
      %v3063 = vld [vmem:[%s2295 + $0x34] sm:$0xf]
      %v3064 = vld [vmem:[%s2295 + $0x38] sm:$0x1]
      %v3065 = vld [vmem:[%s2295 + $0x3c] sm:$0xe]
      %v3066 = vld [vmem:[%s2295 + $0x40] sm:$0xf]
      %v3067 = vld [vmem:[%s2295 + $0x44] sm:$0x1]
      %v3068 = vld [vmem:[%s2295 + $0x48] sm:$0xe]
      %v3069 = vld [vmem:[%s2295 + $0x4c] sm:$0xf]
      %v3070 = vld [vmem:[%s2295 + $0x50] sm:$0x1]
      %v3071 = vld [vmem:[%s2295 + $0x54] sm:$0xe]
      %v3072 = vld [vmem:[%s2295 + $0x58] sm:$0xf]
      %v3073 = vld [vmem:[%s2295 + $0x5c] sm:$0x1]
      %v3074 = vld [vmem:[%s2295 + $0x60] sm:$0xe]
      %v3075 = vld [vmem:[%s2295 + $0x64] sm:$0xf]
      %v3076 = vld [vmem:[%s2295 + $0x68] sm:$0x1]
      %v3077 = vld [vmem:[%s2295 + $0x6c] sm:$0xe]
      %v3078 = vld [vmem:[%s2295 + $0x70] sm:$0xf]
      %v3079 = vld [vmem:[%s2295 + $0x74] sm:$0x1]
      %v3080 = vld [vmem:[%s2295 + $0x78] sm:$0xe]
      %v3081 = vld [vmem:[%s2295 + $0x7c] sm:$0xf]
      %v3082 = vld [vmem:[%s2295 + $0x80] sm:$0x1]
      %v3083 = vld [vmem:[%s2295 + $0x84] sm:$0xe]
      %v3084 = vld [vmem:[%s2295 + $0x88] sm:$0xf]
      %v3085 = vld [vmem:[%s2295 + $0x8c] sm:$0x1]
      %v3086 = vld [vmem:[%s2295 + $0x90] sm:$0xe]
      %v3087 = vld [vmem:[%s2295 + $0x94] sm:$0xf]
      %v3088 = vld [vmem:[%s2295 + $0x98] sm:$0x1]
      %v3089 = vld [vmem:[%s2295 + $0x9c] sm:$0xe]
      %v3090 = vld [vmem:[%s2295 + $0xa0] sm:$0xf]
      %v3091 = vld [vmem:[%s2295 + $0xa4] sm:$0x1]
      %v3092 = vld [vmem:[%s2295 + $0xa8] sm:$0xe]
      %v3093 = vld [vmem:[%s2295 + $0xac] sm:$0xf]
      %v3094 = vld [vmem:[%s2295 + $0xb0] sm:$0x1]
      %v3095 = vld [vmem:[%s2295 + $0xb4] sm:$0xe]
      %v3096 = vld [vmem:[%s2295 + $0xb8] sm:$0xf]
      %v3097 = vld [vmem:[%s2295 + $0xbc] sm:$0x1]
      %v3146 = vrot.slane %v3050, 5
      %v3147 = vrot.slane %v3146, 4
      %v3148 = vrot.slane %v3051, 5
      %v3149 = vsel %vm955, %v3147, %v3148
      %v3150 = vrot.slane %v3148, 4
      %v3151 = vrot.slane %v3052, 5
      %v3152 = vsel %vm955, %v3150, %v3151
      %v3153 = vrot.slane %v3053, 5
      %v3154 = vrot.slane %v3153, 4
      %v3155 = vrot.slane %v3054, 5
      %v3156 = vsel %vm955, %v3154, %v3155
      %v3157 = vrot.slane %v3155, 4
      %v3158 = vrot.slane %v3055, 5
      %v3159 = vsel %vm955, %v3157, %v3158
      %v3160 = vrot.slane %v3056, 5
      %v3161 = vrot.slane %v3160, 4
      %v3162 = vrot.slane %v3057, 5
      %v3163 = vsel %vm955, %v3161, %v3162
      %v3164 = vrot.slane %v3162, 4
      %v3165 = vrot.slane %v3058, 5
      %v3166 = vsel %vm955, %v3164, %v3165
      %v3167 = vrot.slane %v3059, 5
      %v3168 = vrot.slane %v3167, 4
      %v3169 = vrot.slane %v3060, 5
      %v3170 = vsel %vm955, %v3168, %v3169
      %v3171 = vrot.slane %v3169, 4
      %v3172 = vrot.slane %v3061, 5
      %v3173 = vsel %vm955, %v3171, %v3172
      %v3174 = vrot.slane %v3062, 5
      %v3175 = vrot.slane %v3174, 4
      %v3176 = vrot.slane %v3063, 5
      %v3177 = vsel %vm955, %v3175, %v3176
      %v3178 = vrot.slane %v3176, 4
      %v3179 = vrot.slane %v3064, 5
      %v3180 = vsel %vm955, %v3178, %v3179
      %v3181 = vrot.slane %v3065, 5
      %v3182 = vrot.slane %v3181, 4
      %v3183 = vrot.slane %v3066, 5
      %v3184 = vsel %vm955, %v3182, %v3183
      %v3185 = vrot.slane %v3183, 4
      %v3186 = vrot.slane %v3067, 5
      %v3187 = vsel %vm955, %v3185, %v3186
      %v3188 = vrot.slane %v3068, 5
      %v3189 = vrot.slane %v3188, 4
      %v3190 = vrot.slane %v3069, 5
      %v3191 = vsel %vm955, %v3189, %v3190
      %v3192 = vrot.slane %v3190, 4
      %v3193 = vrot.slane %v3070, 5
      %v3194 = vsel %vm955, %v3192, %v3193
      %v3195 = vrot.slane %v3071, 5
      %v3196 = vrot.slane %v3195, 4
      %v3197 = vrot.slane %v3072, 5
      %v3198 = vsel %vm955, %v3196, %v3197
      %v3199 = vrot.slane %v3197, 4
      %v3200 = vrot.slane %v3073, 5
      %v3201 = vsel %vm955, %v3199, %v3200
      %v3202 = vrot.slane %v3074, 5
      %v3203 = vrot.slane %v3202, 4
      %v3204 = vrot.slane %v3075, 5
      %v3205 = vsel %vm955, %v3203, %v3204
      %v3206 = vrot.slane %v3204, 4
      %v3207 = vrot.slane %v3076, 5
      %v3208 = vsel %vm955, %v3206, %v3207
      %v3209 = vrot.slane %v3077, 5
      %v3210 = vrot.slane %v3209, 4
      %v3211 = vrot.slane %v3078, 5
      %v3212 = vsel %vm955, %v3210, %v3211
      %v3213 = vrot.slane %v3211, 4
      %v3214 = vrot.slane %v3079, 5
      %v3215 = vsel %vm955, %v3213, %v3214
      %v3216 = vrot.slane %v3080, 5
      %v3217 = vrot.slane %v3216, 4
      %v3218 = vrot.slane %v3081, 5
      %v3219 = vsel %vm955, %v3217, %v3218
      %v3220 = vrot.slane %v3218, 4
      %v3221 = vrot.slane %v3082, 5
      %v3222 = vsel %vm955, %v3220, %v3221
      %v3223 = vrot.slane %v3083, 5
      %v3224 = vrot.slane %v3223, 4
      %v3225 = vrot.slane %v3084, 5
      %v3226 = vsel %vm955, %v3224, %v3225
      %v3227 = vrot.slane %v3225, 4
      %v3228 = vrot.slane %v3085, 5
      %v3229 = vsel %vm955, %v3227, %v3228
      %v3230 = vrot.slane %v3086, 5
      %v3231 = vrot.slane %v3230, 4
      %v3232 = vrot.slane %v3087, 5
      %v3233 = vsel %vm955, %v3231, %v3232
      %v3234 = vrot.slane %v3232, 4
      %v3235 = vrot.slane %v3088, 5
      %v3236 = vsel %vm955, %v3234, %v3235
      %v3237 = vrot.slane %v3089, 5
      %v3238 = vrot.slane %v3237, 4
      %v3239 = vrot.slane %v3090, 5
      %v3240 = vsel %vm955, %v3238, %v3239
      %v3241 = vrot.slane %v3239, 4
      %v3242 = vrot.slane %v3091, 5
      %v3243 = vsel %vm955, %v3241, %v3242
      %v3244 = vrot.slane %v3092, 5
      %v3245 = vrot.slane %v3244, 4
      %v3246 = vrot.slane %v3093, 5
      %v3247 = vsel %vm955, %v3245, %v3246
      %v3248 = vrot.slane %v3246, 4
      %v3249 = vrot.slane %v3094, 5
      %v3250 = vsel %vm955, %v3248, %v3249
      %v3251 = vrot.slane %v3095, 5
      %v3252 = vrot.slane %v3251, 4
      %v3253 = vrot.slane %v3096, 5
      %v3254 = vsel %vm955, %v3252, %v3253
      %v3255 = vrot.slane %v3253, 4
      %v3256 = vrot.slane %v3097, 5
      %v3257 = vsel %vm955, %v3255, %v3256
      %3258 = vrot.lane.b32.xlu0 %v3149, 32
      %v3259 = vpop.permute.xlu0 %3258
      %3260 = vrot.lane.b32.xlu0 %v3152, 32
      %v3261 = vpop.permute.xlu0 %3260
      %3262 = vrot.lane.b32.xlu0 %v3156, 32
      %v3263 = vpop.permute.xlu0 %3262
      %3264 = vrot.lane.b32.xlu0 %v3159, 32
      %v3265 = vpop.permute.xlu0 %3264
      %3266 = vrot.lane.b32.xlu0 %v3163, 32
      %v3267 = vpop.permute.xlu0 %3266
      %3268 = vrot.lane.b32.xlu0 %v3166, 32
      %v3269 = vpop.permute.xlu0 %3268
      %3270 = vrot.lane.b32.xlu0 %v3170, 32
      %v3271 = vpop.permute.xlu0 %3270
      %3272 = vrot.lane.b32.xlu0 %v3173, 32
      %v3273 = vpop.permute.xlu0 %3272
      %3274 = vrot.lane.b32.xlu0 %v3177, 32
      %v3275 = vpop.permute.xlu0 %3274
      %3276 = vrot.lane.b32.xlu0 %v3180, 32
      %v3277 = vpop.permute.xlu0 %3276
      %3278 = vrot.lane.b32.xlu0 %v3184, 32
      %v3279 = vpop.permute.xlu0 %3278
      %3280 = vrot.lane.b32.xlu0 %v3187, 32
      %v3281 = vpop.permute.xlu0 %3280
      %3282 = vrot.lane.b32.xlu0 %v3191, 32
      %v3283 = vpop.permute.xlu0 %3282
      %3284 = vrot.lane.b32.xlu0 %v3194, 32
      %v3285 = vpop.permute.xlu0 %3284
      %3286 = vrot.lane.b32.xlu0 %v3198, 32
      %v3287 = vpop.permute.xlu0 %3286
      %3288 = vrot.lane.b32.xlu0 %v3201, 32
      %v3289 = vpop.permute.xlu0 %3288
      %3290 = vrot.lane.b32.xlu0 %v3205, 32
      %v3291 = vpop.permute.xlu0 %3290
      %3292 = vrot.lane.b32.xlu0 %v3208, 32
      %v3293 = vpop.permute.xlu0 %3292
      %3294 = vrot.lane.b32.xlu0 %v3212, 32
      %v3295 = vpop.permute.xlu0 %3294
      %3296 = vrot.lane.b32.xlu0 %v3215, 32
      %v3297 = vpop.permute.xlu0 %3296
      %3298 = vrot.lane.b32.xlu0 %v3219, 32
      %v3299 = vpop.permute.xlu0 %3298
      %3300 = vrot.lane.b32.xlu0 %v3222, 32
      %v3301 = vpop.permute.xlu0 %3300
      %3302 = vrot.lane.b32.xlu0 %v3226, 32
      %v3303 = vpop.permute.xlu0 %3302
      %3304 = vrot.lane.b32.xlu0 %v3229, 32
      %v3305 = vpop.permute.xlu0 %3304
      %3306 = vrot.lane.b32.xlu0 %v3233, 32
      %v3307 = vpop.permute.xlu0 %3306
      %3308 = vrot.lane.b32.xlu0 %v3236, 32
      %v3309 = vpop.permute.xlu0 %3308
      %3310 = vrot.lane.b32.xlu0 %v3240, 32
      %v3311 = vpop.permute.xlu0 %3310
      %3312 = vrot.lane.b32.xlu0 %v3243, 32
      %v3313 = vpop.permute.xlu0 %3312
      %3314 = vrot.lane.b32.xlu0 %v3247, 32
      %v3315 = vpop.permute.xlu0 %3314
      %3316 = vrot.lane.b32.xlu0 %v3250, 32
      %v3317 = vpop.permute.xlu0 %3316
      %3318 = vrot.lane.b32.xlu0 %v3254, 32
      %v3319 = vpop.permute.xlu0 %3318
      %3320 = vrot.lane.b32.xlu0 %v3257, 32
      %v3321 = vpop.permute.xlu0 %3320
      %vm3354 = vcmask 290048
      %3355 = vst.msk [vmem:[#allocation2] sm:$0xf] %vm3354, %v3259
      %3356 = vst.msk [vmem:[#allocation2 + $0x4] sm:$0xf] %vm3354, %v3261
      %3357 = vst.msk [vmem:[#allocation2 + $0x8] sm:$0xf] %vm3354, %v3263
      %3358 = vst.msk [vmem:[#allocation2 + $0xc] sm:$0xf] %vm3354, %v3265
      %3359 = vst.msk [vmem:[#allocation2 + $0x10] sm:$0xf] %vm3354, %v3267
      %3360 = vst.msk [vmem:[#allocation2 + $0x14] sm:$0xf] %vm3354, %v3269
      %3361 = vst.msk [vmem:[#allocation2 + $0x18] sm:$0xf] %vm3354, %v3271
      %3362 = vst.msk [vmem:[#allocation2 + $0x1c] sm:$0xf] %vm3354, %v3273
      %3363 = vst.msk [vmem:[#allocation2 + $0x20] sm:$0xf] %vm3354, %v3275
      %3364 = vst.msk [vmem:[#allocation2 + $0x24] sm:$0xf] %vm3354, %v3277
      %3365 = vst.msk [vmem:[#allocation2 + $0x28] sm:$0xf] %vm3354, %v3279
      %3366 = vst.msk [vmem:[#allocation2 + $0x2c] sm:$0xf] %vm3354, %v3281
      %3367 = vst.msk [vmem:[#allocation2 + $0x30] sm:$0xf] %vm3354, %v3283
      %3368 = vst.msk [vmem:[#allocation2 + $0x34] sm:$0xf] %vm3354, %v3285
      %3369 = vst.msk [vmem:[#allocation2 + $0x38] sm:$0xf] %vm3354, %v3287
      %3370 = vst.msk [vmem:[#allocation2 + $0x3c] sm:$0xf] %vm3354, %v3289
      %3371 = vst.msk [vmem:[#allocation2 + $0x40] sm:$0xf] %vm3354, %v3291
      %3372 = vst.msk [vmem:[#allocation2 + $0x44] sm:$0xf] %vm3354, %v3293
      %3373 = vst.msk [vmem:[#allocation2 + $0x48] sm:$0xf] %vm3354, %v3295
      %3374 = vst.msk [vmem:[#allocation2 + $0x4c] sm:$0xf] %vm3354, %v3297
      %3375 = vst.msk [vmem:[#allocation2 + $0x50] sm:$0xf] %vm3354, %v3299
      %3376 = vst.msk [vmem:[#allocation2 + $0x54] sm:$0xf] %vm3354, %v3301
      %3377 = vst.msk [vmem:[#allocation2 + $0x58] sm:$0xf] %vm3354, %v3303
      %3378 = vst.msk [vmem:[#allocation2 + $0x5c] sm:$0xf] %vm3354, %v3305
      %3379 = vst.msk [vmem:[#allocation2 + $0x60] sm:$0xf] %vm3354, %v3307
      %3380 = vst.msk [vmem:[#allocation2 + $0x64] sm:$0xf] %vm3354, %v3309
      %3381 = vst.msk [vmem:[#allocation2 + $0x68] sm:$0xf] %vm3354, %v3311
      %3382 = vst.msk [vmem:[#allocation2 + $0x6c] sm:$0xf] %vm3354, %v3313
      %3383 = vst.msk [vmem:[#allocation2 + $0x70] sm:$0xf] %vm3354, %v3315
      %3384 = vst.msk [vmem:[#allocation2 + $0x74] sm:$0xf] %vm3354, %v3317
      %3385 = vst.msk [vmem:[#allocation2 + $0x78] sm:$0xf] %vm3354, %v3319
      %3386 = vst.msk [vmem:[#allocation2 + $0x7c] sm:$0xf] %vm3354, %v3321
      %v3387 = vld [vmem:[#allocation2] sm:$0xf]
      %v3388 = vld [vmem:[#allocation2 + $0x4] sm:$0xf]
      %v3389 = vld [vmem:[#allocation2 + $0x8] sm:$0xf]
      %v3390 = vld [vmem:[#allocation2 + $0xc] sm:$0xf]
      %v3391 = vld [vmem:[#allocation2 + $0x10] sm:$0xf]
      %v3392 = vld [vmem:[#allocation2 + $0x14] sm:$0xf]
      %v3393 = vld [vmem:[#allocation2 + $0x18] sm:$0xf]
      %v3394 = vld [vmem:[#allocation2 + $0x1c] sm:$0xf]
      %v3395 = vld [vmem:[#allocation2 + $0x20] sm:$0xf]
      %v3396 = vld [vmem:[#allocation2 + $0x24] sm:$0xf]
      %v3397 = vld [vmem:[#allocation2 + $0x28] sm:$0xf]
      %v3398 = vld [vmem:[#allocation2 + $0x2c] sm:$0xf]
      %v3399 = vld [vmem:[#allocation2 + $0x30] sm:$0xf]
      %v3400 = vld [vmem:[#allocation2 + $0x34] sm:$0xf]
      %v3401 = vld [vmem:[#allocation2 + $0x38] sm:$0xf]
      %v3402 = vld [vmem:[#allocation2 + $0x3c] sm:$0xf]
      %v3403 = vld [vmem:[#allocation2 + $0x40] sm:$0xf]
      %v3404 = vld [vmem:[#allocation2 + $0x44] sm:$0xf]
      %v3405 = vld [vmem:[#allocation2 + $0x48] sm:$0xf]
      %v3406 = vld [vmem:[#allocation2 + $0x4c] sm:$0xf]
      %v3407 = vld [vmem:[#allocation2 + $0x50] sm:$0xf]
      %v3408 = vld [vmem:[#allocation2 + $0x54] sm:$0xf]
      %v3409 = vld [vmem:[#allocation2 + $0x58] sm:$0xf]
      %v3410 = vld [vmem:[#allocation2 + $0x5c] sm:$0xf]
      %v3411 = vld [vmem:[#allocation2 + $0x60] sm:$0xf]
      %v3412 = vld [vmem:[#allocation2 + $0x64] sm:$0xf]
      %v3413 = vld [vmem:[#allocation2 + $0x68] sm:$0xf]
      %v3414 = vld [vmem:[#allocation2 + $0x6c] sm:$0xf]
      %v3415 = vld [vmem:[#allocation2 + $0x70] sm:$0xf]
      %v3416 = vld [vmem:[#allocation2 + $0x74] sm:$0xf]
      %v3417 = vld [vmem:[#allocation2 + $0x78] sm:$0xf]
      %v3418 = vld [vmem:[#allocation2 + $0x7c] sm:$0xf]
      %v3419 = vld [vmem:[%s1] sm:$0xf]
      %v3420 = vld [vmem:[%s1 + $0x4] sm:$0xf]
      %v3421 = vld [vmem:[%s1 + $0x8] sm:$0xf]
      %v3422 = vld [vmem:[%s1 + $0xc] sm:$0xf]
      %v3423 = vld [vmem:[%s1 + $0x10] sm:$0x3]
      %v3456 = vunpack.c.l.b16 %v3387
      %v3457 = vunpack.c.l.b16 %v3388
      %v3458 = vunpack.c.l.b16 %v3389
      %v3459 = vunpack.c.l.b16 %v3390
      %v3460 = vunpack.c.l.b16 %v3391
      %v3461 = vunpack.c.l.b16 %v3392
      %v3462 = vunpack.c.l.b16 %v3393
      %v3463 = vunpack.c.l.b16 %v3394
      %v3464 = vunpack.c.l.b16 %v3395
      %v3465 = vunpack.c.l.b16 %v3396
      %v3466 = vunpack.c.l.b16 %v3397
      %v3467 = vunpack.c.l.b16 %v3398
      %v3468 = vunpack.c.l.b16 %v3399
      %v3469 = vunpack.c.l.b16 %v3400
      %v3470 = vunpack.c.l.b16 %v3401
      %v3471 = vunpack.c.l.b16 %v3402
      %v3472 = vunpack.c.l.b16 %v3403
      %v3473 = vunpack.c.l.b16 %v3404
      %v3474 = vunpack.c.l.b16 %v3405
      %v3475 = vunpack.c.l.b16 %v3406
      %v3476 = vunpack.c.l.b16 %v3407
      %v3477 = vunpack.c.l.b16 %v3408
      %v3478 = vunpack.c.l.b16 %v3409
      %v3479 = vunpack.c.l.b16 %v3410
      %v3480 = vunpack.c.l.b16 %v3411
      %v3481 = vunpack.c.l.b16 %v3412
      %v3482 = vunpack.c.l.b16 %v3413
      %v3483 = vunpack.c.l.b16 %v3414
      %v3484 = vunpack.c.l.b16 %v3415
      %v3485 = vunpack.c.l.b16 %v3416
      %v3486 = vunpack.c.l.b16 %v3417
      %v3487 = vunpack.c.l.b16 %v3418
      %v3488 = vpack.c.b16 %v3457, %v3456
      %v3489 = vpack.c.b16 %v3459, %v3458
      %v3490 = vpack.c.b16 %v3461, %v3460
      %v3491 = vpack.c.b16 %v3463, %v3462
      %v3492 = vpack.c.b16 %v3465, %v3464
      %v3493 = vpack.c.b16 %v3467, %v3466
      %v3494 = vpack.c.b16 %v3469, %v3468
      %v3495 = vpack.c.b16 %v3471, %v3470
      %v3496 = vpack.c.b16 %v3473, %v3472
      %v3497 = vpack.c.b16 %v3475, %v3474
      %v3498 = vpack.c.b16 %v3477, %v3476
      %v3499 = vpack.c.b16 %v3479, %v3478
      %v3500 = vpack.c.b16 %v3481, %v3480
      %v3501 = vpack.c.b16 %v3483, %v3482
      %v3502 = vpack.c.b16 %v3485, %v3484
      %v3503 = vpack.c.b16 %v3487, %v3486
      %v3509 = vunpack.c.l.b16 %v3419
      %v3510 = vunpack.c.l.b16 %v3420
      %v3511 = vunpack.c.l.b16 %v3421
      %v3512 = vunpack.c.l.b16 %v3422
      %v3513 = vunpack.c.l.b16 %v3423
      %v3514 = vpack.c.b16 %v3510, %v3509
      %v3515 = vpack.c.b16 %v3512, %v3511
      %v3516 = vpack.c.b16 %v3513, %v3513
      %vm3519 = vcmask 293888
      %v3521 = vsel %vm3519, %v3488, 0
      %v3524 = vsel %vm3519, %v3489, 0
      %v3527 = vsel %vm3519, %v3490, 0
      %v3530 = vsel %vm3519, %v3491, 0
      %v3533 = vsel %vm3519, %v3492, 0
      %v3536 = vsel %vm3519, %v3493, 0
      %v3539 = vsel %vm3519, %v3494, 0
      %v3542 = vsel %vm3519, %v3495, 0
      %v3545 = vsel %vm3519, %v3496, 0
      %v3548 = vsel %vm3519, %v3497, 0
      %v3551 = vsel %vm3519, %v3498, 0
      %v3554 = vsel %vm3519, %v3499, 0
      %v3557 = vsel %vm3519, %v3500, 0
      %v3560 = vsel %vm3519, %v3501, 0
      %v3563 = vsel %vm3519, %v3502, 0
      %v3566 = vsel %vm3519, %v3503, 0
      %vm3568 = vcmask 1041408
      %v3570 = vsel %vm3568, %v3516, 0
      %3572 = vmatpush.bf16.msra.mxu0 0
      %3573 = vmatpush.bf16.msra.mxu0 0
      %3574 = vmatpush.bf16.msra.mxu0 0
      %3575 = vmatpush.bf16.msra.mxu0 0
      %3576 = vmatpush.bf16.msra.mxu0 0
      %3577 = vmatpush.bf16.msra.mxu0 %v3570
      %3578 = vmatpush.bf16.msra.mxu0 %v3515
      %3579 = vmatpush.bf16.msra.mxu0 %v3514
      %3580 = vmatmul.bf16.gmra.mxu0 %v3521
      %v3581 = vpop.f32.mrf.mxu0
      %v3582 = vadd.f32 0.0, %v3581
      %v3583 = vpop.f32.mrf.mxu0
      %v3584 = vadd.f32 0.0, %v3583
      %3585 = vmatmul.bf16.gmra.mxu0 %v3524
      %v3586 = vpop.f32.mrf.mxu0
      %v3587 = vadd.f32 0.0, %v3586
      %v3588 = vpop.f32.mrf.mxu0
      %v3589 = vadd.f32 0.0, %v3588
      %3590 = vmatmul.bf16.gmra.mxu0 %v3527
      %v3591 = vpop.f32.mrf.mxu0
      %v3592 = vadd.f32 0.0, %v3591
      %v3593 = vpop.f32.mrf.mxu0
      %v3594 = vadd.f32 0.0, %v3593
      %3595 = vmatmul.bf16.gmra.mxu0 %v3530
      %v3596 = vpop.f32.mrf.mxu0
      %v3597 = vadd.f32 0.0, %v3596
      %v3598 = vpop.f32.mrf.mxu0
      %v3599 = vadd.f32 0.0, %v3598
      %3600 = vmatmul.bf16.gmra.mxu0 %v3533
      %v3601 = vpop.f32.mrf.mxu0
      %v3602 = vadd.f32 0.0, %v3601
      %v3603 = vpop.f32.mrf.mxu0
      %v3604 = vadd.f32 0.0, %v3603
      %3605 = vmatmul.bf16.gmra.mxu0 %v3536
      %v3606 = vpop.f32.mrf.mxu0
      %v3607 = vadd.f32 0.0, %v3606
      %v3608 = vpop.f32.mrf.mxu0
      %v3609 = vadd.f32 0.0, %v3608
      %3610 = vmatmul.bf16.gmra.mxu0 %v3539
      %v3611 = vpop.f32.mrf.mxu0
      %v3612 = vadd.f32 0.0, %v3611
      %v3613 = vpop.f32.mrf.mxu0
      %v3614 = vadd.f32 0.0, %v3613
      %3615 = vmatmul.bf16.gmra.mxu0 %v3542
      %v3616 = vpop.f32.mrf.mxu0
      %v3617 = vadd.f32 0.0, %v3616
      %v3618 = vpop.f32.mrf.mxu0
      %v3619 = vadd.f32 0.0, %v3618
      %3620 = vmatmul.bf16.gmra.mxu0 %v3545
      %v3621 = vpop.f32.mrf.mxu0
      %v3622 = vadd.f32 0.0, %v3621
      %v3623 = vpop.f32.mrf.mxu0
      %v3624 = vadd.f32 0.0, %v3623
      %3625 = vmatmul.bf16.gmra.mxu0 %v3548
      %v3626 = vpop.f32.mrf.mxu0
      %v3627 = vadd.f32 0.0, %v3626
      %v3628 = vpop.f32.mrf.mxu0
      %v3629 = vadd.f32 0.0, %v3628
      %3630 = vmatmul.bf16.gmra.mxu0 %v3551
      %v3631 = vpop.f32.mrf.mxu0
      %v3632 = vadd.f32 0.0, %v3631
      %v3633 = vpop.f32.mrf.mxu0
      %v3634 = vadd.f32 0.0, %v3633
      %3635 = vmatmul.bf16.gmra.mxu0 %v3554
      %v3636 = vpop.f32.mrf.mxu0
      %v3637 = vadd.f32 0.0, %v3636
      %v3638 = vpop.f32.mrf.mxu0
      %v3639 = vadd.f32 0.0, %v3638
      %3640 = vmatmul.bf16.gmra.mxu0 %v3557
      %v3641 = vpop.f32.mrf.mxu0
      %v3642 = vadd.f32 0.0, %v3641
      %v3643 = vpop.f32.mrf.mxu0
      %v3644 = vadd.f32 0.0, %v3643
      %3645 = vmatmul.bf16.gmra.mxu0 %v3560
      %v3646 = vpop.f32.mrf.mxu0
      %v3647 = vadd.f32 0.0, %v3646
      %v3648 = vpop.f32.mrf.mxu0
      %v3649 = vadd.f32 0.0, %v3648
      %3650 = vmatmul.bf16.gmra.mxu0 %v3563
      %v3651 = vpop.f32.mrf.mxu0
      %v3652 = vadd.f32 0.0, %v3651
      %v3653 = vpop.f32.mrf.mxu0
      %v3654 = vadd.f32 0.0, %v3653
      %3655 = vmatmul.bf16.gmra.mxu0 %v3566
      %v3656 = vpop.f32.mrf.mxu0
      %v3657 = vadd.f32 0.0, %v3656
      %v3658 = vpop.f32.mrf.mxu0
      %v3659 = vadd.f32 0.0, %v3658
      %3660 = vdwg.mxu0
      %v3662 = vperm.slane %v223, 0
      %v3664 = vmul.f32 %v3582, %v3662
      %v3665 = vmul.f32 %v3584, %v3662
      %v3666 = vmul.f32 %v3587, %v3662
      %v3667 = vmul.f32 %v3589, %v3662
      %v3668 = vmul.f32 %v3592, %v3662
      %v3669 = vmul.f32 %v3594, %v3662
      %v3670 = vmul.f32 %v3597, %v3662
      %v3671 = vmul.f32 %v3599, %v3662
      %v3672 = vmul.f32 %v3602, %v3662
      %v3673 = vmul.f32 %v3604, %v3662
      %v3674 = vmul.f32 %v3607, %v3662
      %v3675 = vmul.f32 %v3609, %v3662
      %v3676 = vmul.f32 %v3612, %v3662
      %v3677 = vmul.f32 %v3614, %v3662
      %v3678 = vmul.f32 %v3617, %v3662
      %v3679 = vmul.f32 %v3619, %v3662
      %v3680 = vmul.f32 %v3622, %v3662
      %v3681 = vmul.f32 %v3624, %v3662
      %v3682 = vmul.f32 %v3627, %v3662
      %v3683 = vmul.f32 %v3629, %v3662
      %v3684 = vmul.f32 %v3632, %v3662
      %v3685 = vmul.f32 %v3634, %v3662
      %v3686 = vmul.f32 %v3637, %v3662
      %v3687 = vmul.f32 %v3639, %v3662
      %v3688 = vmul.f32 %v3642, %v3662
      %v3689 = vmul.f32 %v3644, %v3662
      %v3690 = vmul.f32 %v3647, %v3662
      %v3691 = vmul.f32 %v3649, %v3662
      %v3692 = vmul.f32 %v3652, %v3662
      %v3693 = vmul.f32 %v3654, %v3662
      %v3694 = vmul.f32 %v3657, %v3662
      %v3695 = vmul.f32 %v3659, %v3662
      %v3697 = vperm.slane %v224, 0
      %v3699 = vadd.f32 %v3664, %v3697
      %v3700 = vadd.f32 %v3665, %v3697
      %v3701 = vadd.f32 %v3666, %v3697
      %v3702 = vadd.f32 %v3667, %v3697
      %v3703 = vadd.f32 %v3668, %v3697
      %v3704 = vadd.f32 %v3669, %v3697
      %v3705 = vadd.f32 %v3670, %v3697
      %v3706 = vadd.f32 %v3671, %v3697
      %v3707 = vadd.f32 %v3672, %v3697
      %v3708 = vadd.f32 %v3673, %v3697
      %v3709 = vadd.f32 %v3674, %v3697
      %v3710 = vadd.f32 %v3675, %v3697
      %v3711 = vadd.f32 %v3676, %v3697
      %v3712 = vadd.f32 %v3677, %v3697
      %v3713 = vadd.f32 %v3678, %v3697
      %v3714 = vadd.f32 %v3679, %v3697
      %v3715 = vadd.f32 %v3680, %v3697
      %v3716 = vadd.f32 %v3681, %v3697
      %v3717 = vadd.f32 %v3682, %v3697
      %v3718 = vadd.f32 %v3683, %v3697
      %v3719 = vadd.f32 %v3684, %v3697
      %v3720 = vadd.f32 %v3685, %v3697
      %v3721 = vadd.f32 %v3686, %v3697
      %v3722 = vadd.f32 %v3687, %v3697
      %v3723 = vadd.f32 %v3688, %v3697
      %v3724 = vadd.f32 %v3689, %v3697
      %v3725 = vadd.f32 %v3690, %v3697
      %v3726 = vadd.f32 %v3691, %v3697
      %v3727 = vadd.f32 %v3692, %v3697
      %v3728 = vadd.f32 %v3693, %v3697
      %v3729 = vadd.f32 %v3694, %v3697
      %v3730 = vadd.f32 %v3695, %v3697
      %v3731 = vmax.f32 %v3699, 0.0
      %v3732 = vmax.f32 %v3700, 0.0
      %v3733 = vmax.f32 %v3701, 0.0
      %v3734 = vmax.f32 %v3702, 0.0
      %v3735 = vmax.f32 %v3703, 0.0
      %v3736 = vmax.f32 %v3704, 0.0
      %v3737 = vmax.f32 %v3705, 0.0
      %v3738 = vmax.f32 %v3706, 0.0
      %v3739 = vmax.f32 %v3707, 0.0
      %v3740 = vmax.f32 %v3708, 0.0
      %v3741 = vmax.f32 %v3709, 0.0
      %v3742 = vmax.f32 %v3710, 0.0
      %v3743 = vmax.f32 %v3711, 0.0
      %v3744 = vmax.f32 %v3712, 0.0
      %v3745 = vmax.f32 %v3713, 0.0
      %v3746 = vmax.f32 %v3714, 0.0
      %v3747 = vmax.f32 %v3715, 0.0
      %v3748 = vmax.f32 %v3716, 0.0
      %v3749 = vmax.f32 %v3717, 0.0
      %v3750 = vmax.f32 %v3718, 0.0
      %v3751 = vmax.f32 %v3719, 0.0
      %v3752 = vmax.f32 %v3720, 0.0
      %v3753 = vmax.f32 %v3721, 0.0
      %v3754 = vmax.f32 %v3722, 0.0
      %v3755 = vmax.f32 %v3723, 0.0
      %v3756 = vmax.f32 %v3724, 0.0
      %v3757 = vmax.f32 %v3725, 0.0
      %v3758 = vmax.f32 %v3726, 0.0
      %v3759 = vmax.f32 %v3727, 0.0
      %v3760 = vmax.f32 %v3728, 0.0
      %v3761 = vmax.f32 %v3729, 0.0
      %v3762 = vmax.f32 %v3730, 0.0
      %vm3763 = vcmask 64512
      %3764 = vst.msk [vmem:[%s219] sm:$0xff] %vm3763, %v3731
      %3765 = vst.msk [vmem:[%s219 + $0x8] sm:$0xff] %vm3763, %v3732
      %3766 = vst.msk [vmem:[%s219 + $0x10] sm:$0xff] %vm3763, %v3733
      %3767 = vst.msk [vmem:[%s219 + $0x18] sm:$0xff] %vm3763, %v3734
      %3768 = vst.msk [vmem:[%s219 + $0x20] sm:$0xff] %vm3763, %v3735
      %3769 = vst.msk [vmem:[%s219 + $0x28] sm:$0xff] %vm3763, %v3736
      %3770 = vst.msk [vmem:[%s219 + $0x30] sm:$0xff] %vm3763, %v3737
      %3771 = vst.msk [vmem:[%s219 + $0x38] sm:$0xff] %vm3763, %v3738
      %3772 = vst.msk [vmem:[%s219 + $0x40] sm:$0xff] %vm3763, %v3739
      %3773 = vst.msk [vmem:[%s219 + $0x48] sm:$0xff] %vm3763, %v3740
      %3774 = vst.msk [vmem:[%s219 + $0x50] sm:$0xff] %vm3763, %v3741
      %3775 = vst.msk [vmem:[%s219 + $0x58] sm:$0xff] %vm3763, %v3742
      %3776 = vst.msk [vmem:[%s219 + $0x60] sm:$0xff] %vm3763, %v3743
      %3777 = vst.msk [vmem:[%s219 + $0x68] sm:$0xff] %vm3763, %v3744
      %3778 = vst.msk [vmem:[%s219 + $0x70] sm:$0xff] %vm3763, %v3745
      %3779 = vst.msk [vmem:[%s219 + $0x78] sm:$0xff] %vm3763, %v3746
      %3780 = vst.msk [vmem:[%s219 + $0x80] sm:$0xff] %vm3763, %v3747
      %3781 = vst.msk [vmem:[%s219 + $0x88] sm:$0xff] %vm3763, %v3748
      %3782 = vst.msk [vmem:[%s219 + $0x90] sm:$0xff] %vm3763, %v3749
      %3783 = vst.msk [vmem:[%s219 + $0x98] sm:$0xff] %vm3763, %v3750
      %3784 = vst.msk [vmem:[%s219 + $0xa0] sm:$0xff] %vm3763, %v3751
      %3785 = vst.msk [vmem:[%s219 + $0xa8] sm:$0xff] %vm3763, %v3752
      %3786 = vst.msk [vmem:[%s219 + $0xb0] sm:$0xff] %vm3763, %v3753
      %3787 = vst.msk [vmem:[%s219 + $0xb8] sm:$0xff] %vm3763, %v3754
      %3788 = vst.msk [vmem:[%s219 + $0xc0] sm:$0xff] %vm3763, %v3755
      %3789 = vst.msk [vmem:[%s219 + $0xc8] sm:$0xff] %vm3763, %v3756
      %3790 = vst.msk [vmem:[%s219 + $0xd0] sm:$0xff] %vm3763, %v3757
      %3791 = vst.msk [vmem:[%s219 + $0xd8] sm:$0xff] %vm3763, %v3758
      %3792 = vst.msk [vmem:[%s219 + $0xe0] sm:$0xff] %vm3763, %v3759
      %3793 = vst.msk [vmem:[%s219 + $0xe8] sm:$0xff] %vm3763, %v3760
      %3794 = vst.msk [vmem:[%s219 + $0xf0] sm:$0xff] %vm3763, %v3761
      %3795 = vst.msk [vmem:[%s219 + $0xf8] sm:$0xff] %vm3763, %v3762
      %s3796 = smul.u32 32, %s20
      %p3797 = scmp.lt.s32.totalorder %s19, 1
      %s3798 = scalar_select %p3797, %s19, 1
      %p3799 = scmp.lt.s32.totalorder %s3796, 31
      %s3800 = scalar_select %p3799, %s3796, 31
      %s3801 = smul.addr %s3798, 32
      %s3802 = sadd.s32 %s3800, %s3801
      %s3803 = smul.addr %s3802, 8
      %s3804 = scalar_lea.vmem %s4, %s3803
      // Predicated region
      $region37: #{tpu_custom_call.1} parent=35 // pred_check
        %p3805 = pneg %p136
      $region38: #{tpu_custom_call.1} parent=35 // pred_check_branch
        %3807 = sbr.rel (%p3805) target = $region40
      $region39: #{tpu_custom_call.1} parent=35 // pred_region
        %s3808 = smul.u32 32, %s20
      $region40: #{tpu_custom_call.1} parent=35 // pred_fallthru
        _
    $region36: #{tpu_custom_call.1} parent=5 // pred_fallthru
      _
    %p3809 = scmp.le.s32.totalorder 2, %s10
    // Predicated region
    $region41: #{tpu_custom_call.1} parent=5 // pred_check
      %p3810 = pneg %p3809
    $region42: #{tpu_custom_call.1} parent=5 // pred_check_branch
      %3812 = sbr.rel (%p3810) target = $region44
    $region43: #{tpu_custom_call.1} parent=5 // pred_region
      %s3813 = ssub.s32 %s10, 2
      // Predicated region
      $region45: #{tpu_custom_call.1} parent=43 // pred_check
        %p3814 = pneg %p142
      $region46: #{tpu_custom_call.1} parent=43 // pred_check_branch
        %3816 = sbr.rel (%p3814) target = $region48
      $region47: #{tpu_custom_call.1} parent=43 // pred_region
        %s3817 = smul.u32 32, %s22
        %p3818 = scmp.lt.s32.totalorder %s21, 1
        %s3819 = scalar_select %p3818, %s21, 1
        %p3820 = scmp.lt.s32.totalorder %s3817, 31
        %s3821 = scalar_select %p3820, %s3817, 31
        %s3822 = smul.addr %s3819, 32
        %s3823 = sadd.s32 %s3821, %s3822
        %s3824 = smul.addr %s3823, 8
        %s3825 = scalar_lea.vmem %s4, %s3824
      $region48: #{tpu_custom_call.1} parent=43 // pred_fallthru
        _
    $region44: #{tpu_custom_call.1} parent=5 // pred_fallthru
      _
  $region6: #{tpu_custom_call.1} parent=0 // loop_footer
    %s14 = sadd.s32 1, %s10
  $region7: #{tpu_custom_call.1} parent=0 // loop_footer_branch
    %9 = sbr.rel target = $region3
  $region8: #{tpu_custom_call.1} parent=0 // loop_exit
    _

</llo_original>
